<compile_context>
chip_gen: v5e
topology: v5e:2x2
jax: 0.10.0
libtpu: 0.0.40
codegen_flags: <defaults>
</compile_context>

<pallas_src>
import jax
import jax.numpy as jnp
from jax import lax
from jax.experimental import pallas as pl
from jax.experimental.pallas import tpu as pltpu


def _dirgcn_kernel(a_ref, at_ref, xs_ref, xd_ref, oinv_ref, iinv_ref,
                   wa_ref, wb_ref, b_ref, o_ref, accs_ref, accd_ref):
    k = pl.program_id(1)

    @pl.when(k == 0)
    def _init():
        accs_ref[...] = jnp.zeros_like(accs_ref)
        accd_ref[...] = jnp.zeros_like(accd_ref)

    # bf16 adjacency blocks -> f32 for a full-precision MXU accumulate.
    a = a_ref[...].astype(jnp.float32)      # (TM, TK)  A  [row tile, k tile]
    at = at_ref[...].astype(jnp.float32)    # (TM, TK)  A^T[row tile, k tile]

    # SpMM-as-dense:  A @ (D_in^-1/2 x)   and   A^T @ (D_out^-1/2 x).
    accs_ref[...] += jnp.dot(a, xs_ref[...], preferred_element_type=jnp.float32)
    accd_ref[...] += jnp.dot(at, xd_ref[...], preferred_element_type=jnp.float32)

    @pl.when(k == pl.num_programs(1) - 1)
    def _finalize():
        h_s = oinv_ref[...] * accs_ref[...]   # rows scaled by D_out^-1/2
        h_d = iinv_ref[...] * accd_ref[...]   # rows scaled by D_in^-1/2
        # alpha / (1 - alpha) are already folded into wa / wb / b.
        y = jnp.dot(h_s, wa_ref[...], preferred_element_type=jnp.float32)
        y += jnp.dot(h_d, wb_ref[...], preferred_element_type=jnp.float32)
        o_ref[...] = (y + b_ref[...]).astype(o_ref.dtype)


def _pick_tile(n, cap):
    """Largest multiple of 128 <= cap that divides n; full extent otherwise."""
    if n % 128 != 0:
        return n                    # small / ragged N: one full-extent block
    t = (min(cap, n) // 128) * 128
    while t > 128 and n % t != 0:
        t -= 128
    return max(t, 128)


def _vmem_limit_bytes():
    # Generation-aware VMEM budget with ~25% headroom for Mosaic scratch.
    try:
        cap = pltpu.get_tpu_info().vmem_capacity_bytes
    except Exception:
        cap = 64 << 20              # conservative (v7x-sized) fallback
    return int(cap * 3 // 4)


def dir_gcn_conv(x, edge_index, w_src_to_dst, b_src_to_dst,
                 w_dst_to_src, b_dst_to_src, alpha):
    """Pallas implementation of DirGCNConv.forward (dense-adjacency path).

    x:          (N, Din)   node features
    edge_index: (2, E)     directed edges src -> dst
    w_*:        (Dout, Din)  PyTorch Linear weight layout
    b_*:        (Dout,)
    """
    n, din = x.shape
    dout = w_src_to_dst.shape[0]
    alpha = float(alpha)

    row = edge_index[0].astype(jnp.int32)
    col = edge_index[1].astype(jnp.int32)

    # --- wrapper-side glue (O(E) / O(N*Din)), not the hot path ---------------
    ones = jnp.ones(row.shape, jnp.float32)
    out_deg = jnp.zeros((n,), jnp.float32).at[row].add(ones)   # A row sums
    in_deg = jnp.zeros((n,), jnp.float32).at[col].add(ones)    # A col sums
    out_inv = jnp.where(out_deg > 0, lax.rsqrt(out_deg), 0.0).reshape(n, 1)
    in_inv = jnp.where(in_deg > 0, lax.rsqrt(in_deg), 0.0).reshape(n, 1)

    # Dense adjacency and its transpose, densified straight from the edge list
    # (duplicate edges sum, matching sparse-matmul semantics).  bf16 is exact
    # for these small integer counts and halves the dominant HBM stream.
    # TODO(synk): for huge sparse graphs a CSR-gather kernel (scalar-prefetched
    # row offsets) should replace this O(N^2) densification entirely.
    adj = jnp.zeros((n, n), jnp.float32).at[row, col].add(1.0).astype(jnp.bfloat16)
    adj_t = jnp.zeros((n, n), jnp.float32).at[col, row].add(1.0).astype(jnp.bfloat16)

    # Fold the degree diagonals into the thin feature matrix:
    #   D_out^-1/2 A D_in^-1/2 x = D_out^-1/2 (A (D_in^-1/2 x)),  and likewise
    #   for the transposed direction.
    x32 = x.astype(jnp.float32)
    x_s = in_inv * x32      # feeds A    (src -> dst direction)
    x_d = out_inv * x32     # feeds A^T  (dst -> src direction)

    # Fold alpha into the Linear layers; pad Dout to a lane-dense multiple of
    # 128 so the epilogue stores are unmasked.
    dout_p = max(128, ((dout + 127) // 128) * 128)
    wa = jnp.zeros((din, dout_p), jnp.float32).at[:, :dout].set(
        alpha * w_src_to_dst.astype(jnp.float32).T)
    wb = jnp.zeros((din, dout_p), jnp.float32).at[:, :dout].set(
        (1.0 - alpha) * w_dst_to_src.astype(jnp.float32).T)
    bias = jnp.zeros((1, dout_p), jnp.float32).at[0, :dout].set(
        alpha * b_src_to_dst.astype(jnp.float32)
        + (1.0 - alpha) * b_dst_to_src.astype(jnp.float32))

    # --- tiled Pallas kernel --------------------------------------------------
    tm = _pick_tile(n, 256)   # output-row tile (fits v7x's 64 MiB comfortably)
    tk = _pick_tile(n, 512)   # contraction tile over A's columns
    grid = (n // tm, n // tk)

    out_padded = pl.pallas_call(
        _dirgcn_kernel,
        out_shape=jax.ShapeDtypeStruct((n, dout_p), jnp.float32),
        grid_spec=pltpu.PrefetchScalarGridSpec(
            num_scalar_prefetch=0,
            grid=grid,
            in_specs=[
                pl.BlockSpec((tm, tk), lambda i, k: (i, k)),       # A block
                pl.BlockSpec((tm, tk), lambda i, k: (i, k)),       # A^T block
                pl.BlockSpec((tk, din), lambda i, k: (k, 0)),      # D_in^-1/2 x
                pl.BlockSpec((tk, din), lambda i, k: (k, 0)),      # D_out^-1/2 x
                pl.BlockSpec((tm, 1), lambda i, k: (i, 0)),        # out_inv rows
                pl.BlockSpec((tm, 1), lambda i, k: (i, 0)),        # in_inv rows
                pl.BlockSpec((din, dout_p), lambda i, k: (0, 0)),  # alpha*Ws^T
                pl.BlockSpec((din, dout_p), lambda i, k: (0, 0)),  # (1-a)*Wd^T
                pl.BlockSpec((1, dout_p), lambda i, k: (0, 0)),    # fused bias
            ],
            out_specs=pl.BlockSpec((tm, dout_p), lambda i, k: (i, 0)),
            scratch_shapes=[
                pltpu.VMEM((tm, din), jnp.float32),   # acc:  A   @ x_s
                pltpu.VMEM((tm, din), jnp.float32),   # acc:  A^T @ x_d
            ],
        ),
        compiler_params=pltpu.CompilerParams(
            dimension_semantics=("parallel", "arbitrary"),
            vmem_limit_bytes=_vmem_limit_bytes(),
        ),
    )(adj, adj_t, x_s, x_d, out_inv, in_inv, wa, wb, bias)

    return out_padded[:, :dout]


def _reference(x, edge_index, w_s, b_s, w_d, b_d, alpha):
    n = x.shape[0]
    row, col = edge_index[0], edge_index[1]
    adj = jnp.zeros((n, n), jnp.float32).at[row, col].add(1.0)

    def dir_norm(a):
        out_deg = a.sum(1, keepdims=True)
        in_deg = a.sum(0, keepdims=True)
        oi = jnp.where(out_deg > 0, out_deg ** -0.5, 0.0)
        ii = jnp.where(in_deg > 0, in_deg ** -0.5, 0.0)
        return oi * a * ii

    with jax.default_matmul_precision("float32"):
        a_norm = dir_norm(adj)
        a_t_norm = dir_norm(adj.T)
        y_s = (a_norm @ x) @ w_s.T + b_s
        y_d = (a_t_norm @ x) @ w_d.T + b_d
        return alpha * y_s + (1.0 - alpha) * y_d


if __name__ == "__main__":
    # Small graph, but large enough (multiple of 128) to exercise the
    # (row-tile, contraction-tile) grid: tm=256, tk=512 -> grid (4, 2).
    N, DIN, DOUT, E = 1024, 16, 32, 4096
    ALPHA = 0.7

    key = jax.random.PRNGKey(0)
    k_x, k_row, k_col, k_ws, k_bs, k_wd, k_bd = jax.random.split(key, 7)

    x = jax.random.normal(k_x, (N, DIN), jnp.float32)
    edge_index = jnp.stack([
        jax.random.randint(k_row, (E,), 0, N, jnp.int32),
        jax.random.randint(k_col, (E,), 0, N, jnp.int32),
    ])

    # PyTorch-Linear-style init: U(-1/sqrt(in), 1/sqrt(in)).
    bound = 1.0 / (DIN ** 0.5)
    w_s = jax.random.uniform(k_ws, (DOUT, DIN), jnp.float32, -bound, bound)
    b_s = jax.random.uniform(k_bs, (DOUT,), jnp.float32, -bound, bound)
    w_d = jax.random.uniform(k_wd, (DOUT, DIN), jnp.float32, -bound, bound)
    b_d = jax.random.uniform(k_bd, (DOUT,), jnp.float32, -bound, bound)

    out = dir_gcn_conv(x, edge_index, w_s, b_s, w_d, b_d, ALPHA)
    out = jax.block_until_ready(out)

    ref = _reference(x, edge_index, w_s, b_s, w_d, b_d, ALPHA)
    assert out.shape == (N, DOUT)
    err = float(jnp.max(jnp.abs(out - ref)))
    assert jnp.allclose(out, ref, atol=5e-4, rtol=5e-4), f"mismatch, max abs err={err}"

    print("KERNEL_OK")
</pallas_src>

<mosaic_0001>
module attributes {stable_mosaic.version = 11 : i64} {
  func.func @_dirgcn_kernel(%arg0: i32, %arg1: i32, %arg2: memref<256x512xbf16, #tpu.memory_space<vmem>>, %arg3: memref<256x512xbf16, #tpu.memory_space<vmem>>, %arg4: memref<512x16xf32, #tpu.memory_space<vmem>>, %arg5: memref<512x16xf32, #tpu.memory_space<vmem>>, %arg6: memref<256x1xf32, #tpu.memory_space<vmem>>, %arg7: memref<256x1xf32, #tpu.memory_space<vmem>>, %arg8: memref<16x128xf32, #tpu.memory_space<vmem>>, %arg9: memref<16x128xf32, #tpu.memory_space<vmem>>, %arg10: memref<1x128xf32, #tpu.memory_space<vmem>>, %arg11: memref<256x128xf32, #tpu.memory_space<vmem>>, %arg12: memref<256x16xf32, #tpu.memory_space<vmem>>, %arg13: memref<256x16xf32, #tpu.memory_space<vmem>>) attributes {dimension_semantics = [#tpu.dimension_semantics<parallel>, #tpu.dimension_semantics<arbitrary>], iteration_bounds = array<i64: 4, 2>, scalar_prefetch = 0 : i64, scratch_operands = 2 : i64, tpu.core_type = #tpu.core_type<tc>, window_params = [{transform_indices = @transform_0, window_bounds = array<i64: 256, 512>}, {transform_indices = @transform_1, window_bounds = array<i64: 256, 512>}, {transform_indices = @transform_2, window_bounds = array<i64: 512, 16>}, {transform_indices = @transform_3, window_bounds = array<i64: 512, 16>}, {transform_indices = @transform_4, window_bounds = array<i64: 256, 1>}, {transform_indices = @transform_5, window_bounds = array<i64: 256, 1>}, {pipeline_mode = #tpu.pipeline_mode<synchronous>, transform_indices = @transform_6, window_bounds = array<i64: 16, 128>}, {pipeline_mode = #tpu.pipeline_mode<synchronous>, transform_indices = @transform_7, window_bounds = array<i64: 16, 128>}, {pipeline_mode = #tpu.pipeline_mode<synchronous>, transform_indices = @transform_8, window_bounds = array<i64: 1, 128>}, {transform_indices = @transform_9, window_bounds = array<i64: 256, 128>}]} {
    %c0_i32 = arith.constant 0 : i32
    %0 = arith.cmpi eq, %arg1, %c0_i32 : i32
    %1 = arith.extui %0 : i1 to i32
    %c0_i32_0 = arith.constant 0 : i32
    %2 = arith.cmpi ne, %1, %c0_i32_0 : i32
    scf.if %2 {
      %cst_18 = arith.constant 0.000000e+00 : f32
      %20 = vector.broadcast %cst_18 : f32 to vector<256x16xf32>
      %c0_19 = arith.constant 0 : index
      %c0_20 = arith.constant 0 : index
      %21 = vector.load %arg12[%c0_19, %c0_20] : memref<256x16xf32, #tpu.memory_space<vmem>>, vector<256x16xf32>
      tpu.vector_store %arg12[%c0_19, %c0_20], %20 {strides = array<i32>} : memref<256x16xf32, #tpu.memory_space<vmem>>, vector<256x16xf32>,
      %cst_21 = arith.constant 0.000000e+00 : f32
      %22 = vector.broadcast %cst_21 : f32 to vector<256x16xf32>
      %c0_22 = arith.constant 0 : index
      %c0_23 = arith.constant 0 : index
      %23 = vector.load %arg13[%c0_22, %c0_23] : memref<256x16xf32, #tpu.memory_space<vmem>>, vector<256x16xf32>
      tpu.vector_store %arg13[%c0_22, %c0_23], %22 {strides = array<i32>} : memref<256x16xf32, #tpu.memory_space<vmem>>, vector<256x16xf32>,
    } else {
    }
    %c0 = arith.constant 0 : index
    %c0_1 = arith.constant 0 : index
    %3 = vector.load %arg2[%c0, %c0_1] : memref<256x512xbf16, #tpu.memory_space<vmem>>, vector<256x512xbf16>
    %4 = arith.extf %3 : vector<256x512xbf16> to vector<256x512xf32>
    %c0_2 = arith.constant 0 : index
    %c0_3 = arith.constant 0 : index
    %5 = vector.load %arg3[%c0_2, %c0_3] : memref<256x512xbf16, #tpu.memory_space<vmem>>, vector<256x512xbf16>
    %6 = arith.extf %5 : vector<256x512xbf16> to vector<256x512xf32>
    %c0_4 = arith.constant 0 : index
    %c0_5 = arith.constant 0 : index
    %7 = vector.load %arg12[%c0_4, %c0_5] : memref<256x16xf32, #tpu.memory_space<vmem>>, vector<256x16xf32>
    %c0_6 = arith.constant 0 : index
    %c0_7 = arith.constant 0 : index
    %8 = vector.load %arg4[%c0_6, %c0_7] : memref<512x16xf32, #tpu.memory_space<vmem>>, vector<512x16xf32>
    %cst = arith.constant dense<0.000000e+00> : vector<256x16xf32>
    %9 = tpu.matmul %4, %8, %cst {dimension_numbers = #tpu.dot_dimension_numbers<[1], [0], [0], [1], [0, 0, 1, 1], [], []>} : vector<256x512xf32>, vector<512x16xf32>, vector<256x16xf32> -> vector<256x16xf32>
    %10 = arith.addf %7, %9 : vector<256x16xf32>
    %c0_8 = arith.constant 0 : index
    %c0_9 = arith.constant 0 : index
    %11 = vector.load %arg12[%c0_8, %c0_9] : memref<256x16xf32, #tpu.memory_space<vmem>>, vector<256x16xf32>
    tpu.vector_store %arg12[%c0_8, %c0_9], %10 {strides = array<i32>} : memref<256x16xf32, #tpu.memory_space<vmem>>, vector<256x16xf32>,
    %c0_10 = arith.constant 0 : index
    %c0_11 = arith.constant 0 : index
    %12 = vector.load %arg13[%c0_10, %c0_11] : memref<256x16xf32, #tpu.memory_space<vmem>>, vector<256x16xf32>
    %c0_12 = arith.constant 0 : index
    %c0_13 = arith.constant 0 : index
    %13 = vector.load %arg5[%c0_12, %c0_13] : memref<512x16xf32, #tpu.memory_space<vmem>>, vector<512x16xf32>
    %cst_14 = arith.constant dense<0.000000e+00> : vector<256x16xf32>
    %14 = tpu.matmul %6, %13, %cst_14 {dimension_numbers = #tpu.dot_dimension_numbers<[1], [0], [0], [1], [0, 0, 1, 1], [], []>} : vector<256x512xf32>, vector<512x16xf32>, vector<256x16xf32> -> vector<256x16xf32>
    %15 = arith.addf %12, %14 : vector<256x16xf32>
    %c0_15 = arith.constant 0 : index
    %c0_16 = arith.constant 0 : index
    %16 = vector.load %arg13[%c0_15, %c0_16] : memref<256x16xf32, #tpu.memory_space<vmem>>, vector<256x16xf32>
    tpu.vector_store %arg13[%c0_15, %c0_16], %15 {strides = array<i32>} : memref<256x16xf32, #tpu.memory_space<vmem>>, vector<256x16xf32>,
    %c1_i32 = arith.constant 1 : i32
    %17 = arith.cmpi eq, %arg1, %c1_i32 : i32
    %18 = arith.extui %17 : i1 to i32
    %c0_i32_17 = arith.constant 0 : i32
    %19 = arith.cmpi ne, %18, %c0_i32_17 : i32
    scf.if %19 {
      %c0_18 = arith.constant 0 : index
      %c0_19 = arith.constant 0 : index
      %20 = vector.load %arg6[%c0_18, %c0_19] : memref<256x1xf32, #tpu.memory_space<vmem>>, vector<256x1xf32>
      %c0_20 = arith.constant 0 : index
      %c0_21 = arith.constant 0 : index
      %21 = vector.load %arg12[%c0_20, %c0_21] : memref<256x16xf32, #tpu.memory_space<vmem>>, vector<256x16xf32>
      %22 = vector.broadcast %20 : vector<256x1xf32> to vector<256x16xf32>
      %23 = arith.mulf %22, %21 : vector<256x16xf32>
      %c0_22 = arith.constant 0 : index
      %c0_23 = arith.constant 0 : index
      %24 = vector.load %arg7[%c0_22, %c0_23] : memref<256x1xf32, #tpu.memory_space<vmem>>, vector<256x1xf32>
      %c0_24 = arith.constant 0 : index
      %c0_25 = arith.constant 0 : index
      %25 = vector.load %arg13[%c0_24, %c0_25] : memref<256x16xf32, #tpu.memory_space<vmem>>, vector<256x16xf32>
      %26 = vector.broadcast %24 : vector<256x1xf32> to vector<256x16xf32>
      %27 = arith.mulf %26, %25 : vector<256x16xf32>
      %c0_26 = arith.constant 0 : index
      %c0_27 = arith.constant 0 : index
      %28 = vector.load %arg8[%c0_26, %c0_27] : memref<16x128xf32, #tpu.memory_space<vmem>>, vector<16x128xf32>
      %cst_28 = arith.constant dense<0.000000e+00> : vector<256x128xf32>
      %29 = tpu.matmul %23, %28, %cst_28 {dimension_numbers = #tpu.dot_dimension_numbers<[1], [0], [0], [1], [0, 0, 1, 1], [], []>} : vector<256x16xf32>, vector<16x128xf32>, vector<256x128xf32> -> vector<256x128xf32>
      %c0_29 = arith.constant 0 : index
      %c0_30 = arith.constant 0 : index
      %30 = vector.load %arg9[%c0_29, %c0_30] : memref<16x128xf32, #tpu.memory_space<vmem>>, vector<16x128xf32>
      %cst_31 = arith.constant dense<0.000000e+00> : vector<256x128xf32>
      %31 = tpu.matmul %27, %30, %cst_31 {dimension_numbers = #tpu.dot_dimension_numbers<[1], [0], [0], [1], [0, 0, 1, 1], [], []>} : vector<256x16xf32>, vector<16x128xf32>, vector<256x128xf32> -> vector<256x128xf32>
      %32 = arith.addf %29, %31 : vector<256x128xf32>
      %c0_32 = arith.constant 0 : index
      %c0_33 = arith.constant 0 : index
      %33 = vector.load %arg10[%c0_32, %c0_33] : memref<1x128xf32, #tpu.memory_space<vmem>>, vector<1x128xf32>
      %34 = vector.broadcast %33 : vector<1x128xf32> to vector<256x128xf32>
      %35 = arith.addf %32, %34 : vector<256x128xf32>
      %c0_34 = arith.constant 0 : index
      %c0_35 = arith.constant 0 : index
      %36 = vector.load %arg11[%c0_34, %c0_35] : memref<256x128xf32, #tpu.memory_space<vmem>>, vector<256x128xf32>
      tpu.vector_store %arg11[%c0_34, %c0_35], %35 {strides = array<i32>} : memref<256x128xf32, #tpu.memory_space<vmem>>, vector<256x128xf32>,
    } else {
    }
    return
  }
  func.func @transform_0(%arg0: i32, %arg1: i32) -> (i32, i32) {
    %c0_i32 = arith.constant 0 : i32
    return %arg0, %arg1 : i32, i32
  }
  func.func @transform_1(%arg0: i32, %arg1: i32) -> (i32, i32) {
    %c0_i32 = arith.constant 0 : i32
    return %arg0, %arg1 : i32, i32
  }
  func.func @transform_2(%arg0: i32, %arg1: i32) -> (i32, i32) {
    %c0_i32 = arith.constant 0 : i32
    %c0_i32_0 = arith.constant 0 : i32
    return %arg1, %c0_i32 : i32, i32
  }
  func.func @transform_3(%arg0: i32, %arg1: i32) -> (i32, i32) {
    %c0_i32 = arith.constant 0 : i32
    %c0_i32_0 = arith.constant 0 : i32
    return %arg1, %c0_i32 : i32, i32
  }
  func.func @transform_4(%arg0: i32, %arg1: i32) -> (i32, i32) {
    %c0_i32 = arith.constant 0 : i32
    %c0_i32_0 = arith.constant 0 : i32
    return %arg0, %c0_i32 : i32, i32
  }
  func.func @transform_5(%arg0: i32, %arg1: i32) -> (i32, i32) {
    %c0_i32 = arith.constant 0 : i32
    %c0_i32_0 = arith.constant 0 : i32
    return %arg0, %c0_i32 : i32, i32
  }
  func.func @transform_6(%arg0: i32, %arg1: i32) -> (i32, i32) {
    %c0_i32 = arith.constant 0 : i32
    %c0_i32_0 = arith.constant 0 : i32
    %c0_i32_1 = arith.constant 0 : i32
    return %c0_i32, %c0_i32_0 : i32, i32
  }
  func.func @transform_7(%arg0: i32, %arg1: i32) -> (i32, i32) {
    %c0_i32 = arith.constant 0 : i32
    %c0_i32_0 = arith.constant 0 : i32
    %c0_i32_1 = arith.constant 0 : i32
    return %c0_i32, %c0_i32_0 : i32, i32
  }
  func.func @transform_8(%arg0: i32, %arg1: i32) -> (i32, i32) {
    %c0_i32 = arith.constant 0 : i32
    %c0_i32_0 = arith.constant 0 : i32
    %c0_i32_1 = arith.constant 0 : i32
    return %c0_i32, %c0_i32_0 : i32, i32
  }
  func.func @transform_9(%arg0: i32, %arg1: i32) -> (i32, i32) {
    %c0_i32 = arith.constant 0 : i32
    %c0_i32_0 = arith.constant 0 : i32
    return %arg0, %c0_i32 : i32, i32
  }
}

</mosaic_0001>

<llo_original>
// kernel: tpu_custom_call.1
$region0: #{tpu_custom_call.1}
  #allocation0 [shape = 'u32[]', space=smem, size = 0x4, offset = 0x4, fixed_abs, tag = 'smem constant byte address 0x4 - core index']
  #allocation1 [shape = 'u32[72,128]{1,0:T(1,128)}', space=vmem, size = 0x9000, scoped, tag = 'internal scratch']
  #allocation2 [shape = 'f32[256,16]{1,0:T(8,128)}', space=vmem, size = 0x20000, scoped, tag = 'scratch operand']
  #allocation3 [shape = 'f32[256,16]{1,0:T(8,128)}', space=vmem, size = 0x20000, scoped, tag = 'scratch operand']
  %s0 = inlined_call_operand.vmem [shape: bf16[1024,1024], index: 0, kind: input, shape index: {}]
  %s1 = inlined_call_operand.hbm [shape: bf16[1024,1024], index: 1, kind: input, shape index: {}]
  %s2 = inlined_call_operand.vmem [shape: f32[1024,16], index: 2, kind: input, shape index: {}]
  %s3 = inlined_call_operand.vmem [shape: f32[1024,16], index: 3, kind: input, shape index: {}]
  %s4 = inlined_call_operand.vmem [shape: f32[1024,1], index: 4, kind: input, shape index: {}]
  %s5 = inlined_call_operand.vmem [shape: f32[1024,1], index: 5, kind: input, shape index: {}]
  %s6 = inlined_call_operand.vmem [shape: f32[16,128], index: 6, kind: input, shape index: {}]
  %s7 = inlined_call_operand.vmem [shape: f32[16,128], index: 7, kind: input, shape index: {}]
  %s8 = inlined_call_operand.vmem [shape: f32[1,128], index: 8, kind: input, shape index: {}]
  %s9 = inlined_call_operand.hbm [shape: f32[1024,128], index: 9, kind: output, shape index: {}]
  %s10 = sld [smem:[#allocation0]]
  $region104: #{tpu_custom_call.1} parent=0
    _
  %s12 = ssub.s32 1, %s10
  %s13 = scalar_select 0, %s12, %s10
  $region1: #{tpu_custom_call.1} parent=0
    #allocation4 [shape = 'u8[524288]{0}', space=vmem, size = 0x80000, scoped, tag = 'input window, operand 0']
    #allocation5 [shape = 'u8[524288]{0}', space=vmem, size = 0x80000, scoped, tag = 'input window, operand 1']
    #allocation6 [shape = 's32[2]{0}', space=sflag, size = 0x8, scoped, tag = 'scoped memory for tpu_custom_call.1']
    #allocation7 [shape = 's32[2]{0}', space=sflag, size = 0x8, scoped, tag = 'scoped memory for tpu_custom_call.1']
    #allocation8 [shape = 'u8[262144]{0}', space=vmem, size = 0x40000, scoped, tag = 'output window, operand 0']
    %14 = vsyncpa [#allocation6], 0
    %s15 = scalar_lea.sflag [#allocation6], 1
    %16 = vsyncpa %s15, 0
    %17 = vsyncpa [#allocation7], 0
    %s18 = scalar_lea.sflag [#allocation7], 1
    %19 = vsyncpa %s18, 0
    loop: start=0, step=1, limit=10
    $region2: #{tpu_custom_call.1} parent=1 // loop_pre_header
      _
    $region3: #{tpu_custom_call.1} parent=1 // loop_header
      %s21 = sphi 0, %s25
      %p22 = scmp.ge.s32.totalorder %s21, 10
      %s28 = sphi 0, %s40
      %s29 = sphi 0, %s36
      %s30 = sphi 0, %s28
      %s31 = sphi 0, %s29
      %s32 = sphi 0, %s30
      %s33 = sphi 0, %s31
      %s45 = sphi 0, %s47
      %s48 = sphi 0, %s45
      %s49 = sphi 0, %s48
      %s65 = sphi 0, %s49
      %s73 = sphi 0, %s75
      %s76 = sphi 0, %s73
      %s77 = sphi 0, %s76
      %s93 = sphi 0, %s77
      %s99 = sphi 0, %s101
      %s102 = sphi 0, %s99
      %s103 = sphi 0, %s102
      %s119 = sphi 0, %s103
      %s125 = sphi 0, %s127
      %s128 = sphi 0, %s125
      %s129 = sphi 0, %s128
      %s145 = sphi 0, %s129
      %s151 = sphi 0, %s153
      %s154 = sphi 0, %s151
      %s155 = sphi 0, %s154
      %s171 = sphi 0, %s155
      %s177 = sphi 0, %s179
      %s180 = sphi 0, %s177
      %s181 = sphi 0, %s180
      %s197 = sphi 0, %s181
      %s201 = sphi 0, %s201
      %s203 = sphi 0, %s201
      %s204 = sphi 0, %s203
      %s218 = sphi 0, %s204
      %s222 = sphi 0, %s222
      %s224 = sphi 0, %s222
      %s225 = sphi 0, %s224
      %s239 = sphi 0, %s225
      %s243 = sphi 0, %s243
      %s245 = sphi 0, %s243
      %s246 = sphi 0, %s245
      %s260 = sphi 0, %s246
      %s266 = sphi 0, %s268
      %s269 = sphi 0, %s266
      %s270 = sphi 0, %s269
      %s286 = sphi 0, %s270
    $region4: #{tpu_custom_call.1} parent=1 // loop_header_branch
      %24 = sbr.rel (%p22) target = $region8
    $region5: #{tpu_custom_call.1} parent=1 // loop_body
      %s26 = ssub.s32 %s21, 1
      %s27 = ssub.s32 %s21, 2
      %s34 = sadd.s32 1, %s29
      %p35 = scmp.ge.s32.totalorder %s34, 2
      %s36 = scalar_select %p35, 0, %s34
      %s37 = sadd.s32 1, %s28
      %s38 = scalar_select %p35, %s37, %s28
      %p39 = scmp.ge.s32.totalorder %s38, 4
      %s40 = scalar_select %p39, 0, %s38
      %s41 = ssub.s32 %s28, %s40
      %s42 = ssub.s32 %s29, %s36
      %s43 = sor.u32 %s41, %s42
      %p44 = scmp.eq.s32.totalorder %s43, 0
      %s46 = sadd.s32 %s45, 1
      %s47 = scalar_select %p44, %s45, %s46
      %p50 = pneg %p44
      %p51 = scmp.eq.s32.totalorder %s21, 7
      %p52 = por %p50, %p51
      %p53 = scmp.ne.s32.totalorder %s45, %s48
      %p54 = scmp.eq.s32.totalorder %s21, 0
      %p55 = por %p53, %p54
      %p56 = scmp.ne.s32.totalorder %s45, %s48
      %p57 = scmp.eq.s32.totalorder %s26, 7
      %p58 = por %p56, %p57
      %p59 = scmp.ne.s32.totalorder %s48, %s49
      %p60 = scmp.eq.s32.totalorder %s26, 0
      %p61 = por %p59, %p60
      %p62 = scmp.ne.s32.totalorder %s48, %s49
      %p63 = scmp.eq.s32.totalorder %s27, 7
      %p64 = por %p62, %p63
      %p66 = scmp.ne.s32.totalorder %s49, %s65
      %p67 = scmp.eq.s32.totalorder %s27, 0
      %p68 = por %p66, %p67
      %s69 = ssub.s32 %s28, %s40
      %s70 = ssub.s32 %s29, %s36
      %s71 = sor.u32 %s69, %s70
      %p72 = scmp.eq.s32.totalorder %s71, 0
      %s74 = sadd.s32 %s73, 1
      %s75 = scalar_select %p72, %s73, %s74
      %p78 = pneg %p72
      %p79 = scmp.eq.s32.totalorder %s21, 7
      %p80 = por %p78, %p79
      %p81 = scmp.ne.s32.totalorder %s73, %s76
      %p82 = scmp.eq.s32.totalorder %s21, 0
      %p83 = por %p81, %p82
      %p84 = scmp.ne.s32.totalorder %s73, %s76
      %p85 = scmp.eq.s32.totalorder %s26, 7
      %p86 = por %p84, %p85
      %p87 = scmp.ne.s32.totalorder %s76, %s77
      %p88 = scmp.eq.s32.totalorder %s26, 0
      %p89 = por %p87, %p88
      %p90 = scmp.ne.s32.totalorder %s76, %s77
      %p91 = scmp.eq.s32.totalorder %s27, 7
      %p92 = por %p90, %p91
      %p94 = scmp.ne.s32.totalorder %s77, %s93
      %p95 = scmp.eq.s32.totalorder %s27, 0
      %p96 = por %p94, %p95
      %s97 = ssub.s32 %s29, %s36
      %p98 = scmp.eq.s32.totalorder %s97, 0
      %s100 = sadd.s32 %s99, 1
      %s101 = scalar_select %p98, %s99, %s100
      %p104 = pneg %p98
      %p105 = scmp.eq.s32.totalorder %s21, 7
      %p106 = por %p104, %p105
      %p107 = scmp.ne.s32.totalorder %s99, %s102
      %p108 = scmp.eq.s32.totalorder %s21, 0
      %p109 = por %p107, %p108
      %p110 = scmp.ne.s32.totalorder %s99, %s102
      %p111 = scmp.eq.s32.totalorder %s26, 7
      %p112 = por %p110, %p111
      %p113 = scmp.ne.s32.totalorder %s102, %s103
      %p114 = scmp.eq.s32.totalorder %s26, 0
      %p115 = por %p113, %p114
      %p116 = scmp.ne.s32.totalorder %s102, %s103
      %p117 = scmp.eq.s32.totalorder %s27, 7
      %p118 = por %p116, %p117
      %p120 = scmp.ne.s32.totalorder %s103, %s119
      %p121 = scmp.eq.s32.totalorder %s27, 0
      %p122 = por %p120, %p121
      %s123 = ssub.s32 %s29, %s36
      %p124 = scmp.eq.s32.totalorder %s123, 0
      %s126 = sadd.s32 %s125, 1
      %s127 = scalar_select %p124, %s125, %s126
      %p130 = pneg %p124
      %p131 = scmp.eq.s32.totalorder %s21, 7
      %p132 = por %p130, %p131
      %p133 = scmp.ne.s32.totalorder %s125, %s128
      %p134 = scmp.eq.s32.totalorder %s21, 0
      %p135 = por %p133, %p134
      %p136 = scmp.ne.s32.totalorder %s125, %s128
      %p137 = scmp.eq.s32.totalorder %s26, 7
      %p138 = por %p136, %p137
      %p139 = scmp.ne.s32.totalorder %s128, %s129
      %p140 = scmp.eq.s32.totalorder %s26, 0
      %p141 = por %p139, %p140
      %p142 = scmp.ne.s32.totalorder %s128, %s129
      %p143 = scmp.eq.s32.totalorder %s27, 7
      %p144 = por %p142, %p143
      %p146 = scmp.ne.s32.totalorder %s129, %s145
      %p147 = scmp.eq.s32.totalorder %s27, 0
      %p148 = por %p146, %p147
      %s149 = ssub.s32 %s28, %s40
      %p150 = scmp.eq.s32.totalorder %s149, 0
      %s152 = sadd.s32 %s151, 1
      %s153 = scalar_select %p150, %s151, %s152
      %p156 = pneg %p150
      %p157 = scmp.eq.s32.totalorder %s21, 7
      %p158 = por %p156, %p157
      %p159 = scmp.ne.s32.totalorder %s151, %s154
      %p160 = scmp.eq.s32.totalorder %s21, 0
      %p161 = por %p159, %p160
      %p162 = scmp.ne.s32.totalorder %s151, %s154
      %p163 = scmp.eq.s32.totalorder %s26, 7
      %p164 = por %p162, %p163
      %p165 = scmp.ne.s32.totalorder %s154, %s155
      %p166 = scmp.eq.s32.totalorder %s26, 0
      %p167 = por %p165, %p166
      %p168 = scmp.ne.s32.totalorder %s154, %s155
      %p169 = scmp.eq.s32.totalorder %s27, 7
      %p170 = por %p168, %p169
      %p172 = scmp.ne.s32.totalorder %s155, %s171
      %p173 = scmp.eq.s32.totalorder %s27, 0
      %p174 = por %p172, %p173
      %s175 = ssub.s32 %s28, %s40
      %p176 = scmp.eq.s32.totalorder %s175, 0
      %s178 = sadd.s32 %s177, 1
      %s179 = scalar_select %p176, %s177, %s178
      %p182 = pneg %p176
      %p183 = scmp.eq.s32.totalorder %s21, 7
      %p184 = por %p182, %p183
      %p185 = scmp.ne.s32.totalorder %s177, %s180
      %p186 = scmp.eq.s32.totalorder %s21, 0
      %p187 = por %p185, %p186
      %p188 = scmp.ne.s32.totalorder %s177, %s180
      %p189 = scmp.eq.s32.totalorder %s26, 7
      %p190 = por %p188, %p189
      %p191 = scmp.ne.s32.totalorder %s180, %s181
      %p192 = scmp.eq.s32.totalorder %s26, 0
      %p193 = por %p191, %p192
      %p194 = scmp.ne.s32.totalorder %s180, %s181
      %p195 = scmp.eq.s32.totalorder %s27, 7
      %p196 = por %p194, %p195
      %p198 = scmp.ne.s32.totalorder %s181, %s197
      %p199 = scmp.eq.s32.totalorder %s27, 0
      %p200 = por %p198, %p199
      %s202 = sadd.s32 %s201, 1
      %p205 = scmp.eq.s32.totalorder %s21, 7
      %p206 = scmp.ne.s32.totalorder %s201, %s203
      %p207 = scmp.eq.s32.totalorder %s21, 0
      %p208 = por %p206, %p207
      %p209 = scmp.ne.s32.totalorder %s201, %s203
      %p210 = scmp.eq.s32.totalorder %s26, 7
      %p211 = por %p209, %p210
      %p212 = scmp.ne.s32.totalorder %s203, %s204
      %p213 = scmp.eq.s32.totalorder %s26, 0
      %p214 = por %p212, %p213
      %p215 = scmp.ne.s32.totalorder %s203, %s204
      %p216 = scmp.eq.s32.totalorder %s27, 7
      %p217 = por %p215, %p216
      %p219 = scmp.ne.s32.totalorder %s204, %s218
      %p220 = scmp.eq.s32.totalorder %s27, 0
      %p221 = por %p219, %p220
      %s223 = sadd.s32 %s222, 1
      %p226 = scmp.eq.s32.totalorder %s21, 7
      %p227 = scmp.ne.s32.totalorder %s222, %s224
      %p228 = scmp.eq.s32.totalorder %s21, 0
      %p229 = por %p227, %p228
      %p230 = scmp.ne.s32.totalorder %s222, %s224
      %p231 = scmp.eq.s32.totalorder %s26, 7
      %p232 = por %p230, %p231
      %p233 = scmp.ne.s32.totalorder %s224, %s225
      %p234 = scmp.eq.s32.totalorder %s26, 0
      %p235 = por %p233, %p234
      %p236 = scmp.ne.s32.totalorder %s224, %s225
      %p237 = scmp.eq.s32.totalorder %s27, 7
      %p238 = por %p236, %p237
      %p240 = scmp.ne.s32.totalorder %s225, %s239
      %p241 = scmp.eq.s32.totalorder %s27, 0
      %p242 = por %p240, %p241
      %s244 = sadd.s32 %s243, 1
      %p247 = scmp.eq.s32.totalorder %s21, 7
      %p248 = scmp.ne.s32.totalorder %s243, %s245
      %p249 = scmp.eq.s32.totalorder %s21, 0
      %p250 = por %p248, %p249
      %p251 = scmp.ne.s32.totalorder %s243, %s245
      %p252 = scmp.eq.s32.totalorder %s26, 7
      %p253 = por %p251, %p252
      %p254 = scmp.ne.s32.totalorder %s245, %s246
      %p255 = scmp.eq.s32.totalorder %s26, 0
      %p256 = por %p254, %p255
      %p257 = scmp.ne.s32.totalorder %s245, %s246
      %p258 = scmp.eq.s32.totalorder %s27, 7
      %p259 = por %p257, %p258
      %p261 = scmp.ne.s32.totalorder %s246, %s260
      %p262 = scmp.eq.s32.totalorder %s27, 0
      %p263 = por %p261, %p262
      %s264 = ssub.s32 %s28, %s40
      %p265 = scmp.eq.s32.totalorder %s264, 0
      %s267 = sadd.s32 %s266, 1
      %s268 = scalar_select %p265, %s266, %s267
      %p271 = pneg %p265
      %p272 = scmp.eq.s32.totalorder %s21, 7
      %p273 = por %p271, %p272
      %p274 = scmp.ne.s32.totalorder %s266, %s269
      %p275 = scmp.eq.s32.totalorder %s21, 0
      %p276 = por %p274, %p275
      %p277 = scmp.ne.s32.totalorder %s266, %s269
      %p278 = scmp.eq.s32.totalorder %s26, 7
      %p279 = por %p277, %p278
      %p280 = scmp.ne.s32.totalorder %s269, %s270
      %p281 = scmp.eq.s32.totalorder %s26, 0
      %p282 = por %p280, %p281
      %p283 = scmp.ne.s32.totalorder %s269, %s270
      %p284 = scmp.eq.s32.totalorder %s27, 7
      %p285 = por %p283, %p284
      %p287 = scmp.ne.s32.totalorder %s270, %s286
      %p288 = scmp.eq.s32.totalorder %s27, 0
      %p289 = por %p287, %p288
      %p290 = scmp.le.s32.totalorder 1, %s21
      %p291 = scmp.lt.s32.totalorder %s21, 9
      %p292 = pnand %p290, %p291
      %p293 = pneg %p292
      // Predicated region
      $region9: #{tpu_custom_call.1} parent=5 // pred_check
        _
      $region10: #{tpu_custom_call.1} parent=5 // pred_check_branch
        %295 = sbr.rel (%p292) target = $region12
      $region11: #{tpu_custom_call.1} parent=5 // pred_region
        %s296 = ssub.s32 %s21, 1
        // Predicated region
        $region13: #{tpu_custom_call.1} parent=11 // pred_check
          %p297 = pneg %p214
        $region14: #{tpu_custom_call.1} parent=11 // pred_check_branch
          %299 = sbr.rel (%p297) target = $region16
        $region15: #{tpu_custom_call.1} parent=11 // pred_region
          _
        $region16: #{tpu_custom_call.1} parent=11 // pred_fallthru
          _
        // Predicated region
        $region17: #{tpu_custom_call.1} parent=11 // pred_check
          %p300 = pneg %p235
        $region18: #{tpu_custom_call.1} parent=11 // pred_check_branch
          %302 = sbr.rel (%p300) target = $region20
        $region19: #{tpu_custom_call.1} parent=11 // pred_region
          _
        $region20: #{tpu_custom_call.1} parent=11 // pred_fallthru
          _
        // Predicated region
        $region21: #{tpu_custom_call.1} parent=11 // pred_check
          %p303 = pneg %p256
        $region22: #{tpu_custom_call.1} parent=11 // pred_check_branch
          %305 = sbr.rel (%p303) target = $region24
        $region23: #{tpu_custom_call.1} parent=11 // pred_region
          _
        $region24: #{tpu_custom_call.1} parent=11 // pred_fallthru
          _
      $region12: #{tpu_custom_call.1} parent=5 // pred_fallthru
        _
      %p306 = scmp.lt.s32.totalorder %s21, 8
      // Predicated region
      $region25: #{tpu_custom_call.1} parent=5 // pred_check
        %p307 = pneg %p306
      $region26: #{tpu_custom_call.1} parent=5 // pred_check_branch
        %309 = sbr.rel (%p307) target = $region28
      $region27: #{tpu_custom_call.1} parent=5 // pred_region
        // Predicated region
        $region29: #{tpu_custom_call.1} parent=27 // pred_check
          %p310 = pneg %p55
        $region30: #{tpu_custom_call.1} parent=27 // pred_check_branch
          %312 = sbr.rel (%p310) target = $region32
        $region31: #{tpu_custom_call.1} parent=27 // pred_region
          %s313 = sand.u32 %s45, 1
          %s314 = sand.u32 %s45, 1
          %s315 = smul.addr %s314, 512
          %s316 = scalar_lea.vmem [#allocation4], %s315
          %s317 = smul.u32 32, %s28
          %s318 = smul.u32 4, %s29
          %s319 = smul.addr %s317, 8
          %s320 = sadd.s32 %s318, %s319
          %s321 = smul.addr %s320, 4
          %s322 = scalar_lea.vmem %s0, %s321
          // Predicated region
          $region33: #{tpu_custom_call.1} parent=31 // pred_check
            _
          $region34: #{tpu_custom_call.1} parent=31 // pred_check_branch
            %324 = sbr.rel (0) target = $region36
          $region35: #{tpu_custom_call.1} parent=31 // pred_region
            // Predicated region
            $region37: #{tpu_custom_call.1} parent=35 // pred_check
              _
            $region38: #{tpu_custom_call.1} parent=35 // pred_check_branch
              %326 = sbr.rel (0) target = $region40
            $region39: #{tpu_custom_call.1} parent=35 // pred_region
              loop: start=0, step=1, limit=1
              $region41: #{tpu_custom_call.1} parent=39 // loop_pre_header
                _
              $region42: #{tpu_custom_call.1} parent=39 // loop_header
                %s328 = sphi 0, %s332
                %p329 = scmp.ge.s32.totalorder %s328, 1
                %s333 = sphi %s322, %s322
                %s334 = sphi %s316, %s316
              $region43: #{tpu_custom_call.1} parent=39 // loop_header_branch
                %331 = sbr.rel (%p329) target = $region47
              $region44: #{tpu_custom_call.1} parent=39 // loop_body
                %v335 = vld [vmem:[%s333] sm:$0xff]
                %336 = vst [vmem:[%s334] sm:$0xff] %v335
                %v337 = vld [vmem:[%s333 + $0x8] sm:$0xff]
                %338 = vst [vmem:[%s334 + $0x8] sm:$0xff] %v337
                %v339 = vld [vmem:[%s333 + $0x20] sm:$0xff]
                %340 = vst [vmem:[%s334 + $0x10] sm:$0xff] %v339
                %v341 = vld [vmem:[%s333 + $0x28] sm:$0xff]
                %342 = vst [vmem:[%s334 + $0x18] sm:$0xff] %v341
                %v343 = vld [vmem:[%s333 + $0x40] sm:$0xff]
                %344 = vst [vmem:[%s334 + $0x20] sm:$0xff] %v343
                %v345 = vld [vmem:[%s333 + $0x48] sm:$0xff]
                %346 = vst [vmem:[%s334 + $0x28] sm:$0xff] %v345
                %v347 = vld [vmem:[%s333 + $0x60] sm:$0xff]
                %348 = vst [vmem:[%s334 + $0x30] sm:$0xff] %v347
                %v349 = vld [vmem:[%s333 + $0x68] sm:$0xff]
                %350 = vst [vmem:[%s334 + $0x38] sm:$0xff] %v349
                %v351 = vld [vmem:[%s333 + $0x80] sm:$0xff]
                %352 = vst [vmem:[%s334 + $0x40] sm:$0xff] %v351
                %v353 = vld [vmem:[%s333 + $0x88] sm:$0xff]
                %354 = vst [vmem:[%s334 + $0x48] sm:$0xff] %v353
                %v355 = vld [vmem:[%s333 + $0xa0] sm:$0xff]
                %356 = vst [vmem:[%s334 + $0x50] sm:$0xff] %v355
                %v357 = vld [vmem:[%s333 + $0xa8] sm:$0xff]
                %358 = vst [vmem:[%s334 + $0x58] sm:$0xff] %v357
                %v359 = vld [vmem:[%s333 + $0xc0] sm:$0xff]
                %360 = vst [vmem:[%s334 + $0x60] sm:$0xff] %v359
                %v361 = vld [vmem:[%s333 + $0xc8] sm:$0xff]
                %362 = vst [vmem:[%s334 + $0x68] sm:$0xff] %v361
                %v363 = vld [vmem:[%s333 + $0xe0] sm:$0xff]
                %364 = vst [vmem:[%s334 + $0x70] sm:$0xff] %v363
                %v365 = vld [vmem:[%s333 + $0xe8] sm:$0xff]
                %366 = vst [vmem:[%s334 + $0x78] sm:$0xff] %v365
                %v367 = vld [vmem:[%s333 + $0x100] sm:$0xff]
                %368 = vst [vmem:[%s334 + $0x80] sm:$0xff] %v367
                %v369 = vld [vmem:[%s333 + $0x108] sm:$0xff]
                %370 = vst [vmem:[%s334 + $0x88] sm:$0xff] %v369
                %v371 = vld [vmem:[%s333 + $0x120] sm:$0xff]
                %372 = vst [vmem:[%s334 + $0x90] sm:$0xff] %v371
                %v373 = vld [vmem:[%s333 + $0x128] sm:$0xff]
                %374 = vst [vmem:[%s334 + $0x98] sm:$0xff] %v373
                %v375 = vld [vmem:[%s333 + $0x140] sm:$0xff]
                %376 = vst [vmem:[%s334 + $0xa0] sm:$0xff] %v375
                %v377 = vld [vmem:[%s333 + $0x148] sm:$0xff]
                %378 = vst [vmem:[%s334 + $0xa8] sm:$0xff] %v377
                %v379 = vld [vmem:[%s333 + $0x160] sm:$0xff]
                %380 = vst [vmem:[%s334 + $0xb0] sm:$0xff] %v379
                %v381 = vld [vmem:[%s333 + $0x168] sm:$0xff]
                %382 = vst [vmem:[%s334 + $0xb8] sm:$0xff] %v381
                %v383 = vld [vmem:[%s333 + $0x180] sm:$0xff]
                %384 = vst [vmem:[%s334 + $0xc0] sm:$0xff] %v383
                %v385 = vld [vmem:[%s333 + $0x188] sm:$0xff]
                %386 = vst [vmem:[%s334 + $0xc8] sm:$0xff] %v385
                %v387 = vld [vmem:[%s333 + $0x1a0] sm:$0xff]
                %388 = vst [vmem:[%s334 + $0xd0] sm:$0xff] %v387
                %v389 = vld [vmem:[%s333 + $0x1a8] sm:$0xff]
                %390 = vst [vmem:[%s334 + $0xd8] sm:$0xff] %v389
                %v391 = vld [vmem:[%s333 + $0x1c0] sm:$0xff]
                %392 = vst [vmem:[%s334 + $0xe0] sm:$0xff] %v391
                %v393 = vld [vmem:[%s333 + $0x1c8] sm:$0xff]
                %394 = vst [vmem:[%s334 + $0xe8] sm:$0xff] %v393
                %v395 = vld [vmem:[%s333 + $0x1e0] sm:$0xff]
                %396 = vst [vmem:[%s334 + $0xf0] sm:$0xff] %v395
                %v397 = vld [vmem:[%s333 + $0x1e8] sm:$0xff]
                %398 = vst [vmem:[%s334 + $0xf8] sm:$0xff] %v397
                %v399 = vld [vmem:[%s333 + $0x200] sm:$0xff]
                %400 = vst [vmem:[%s334 + $0x100] sm:$0xff] %v399
                %v401 = vld [vmem:[%s333 + $0x208] sm:$0xff]
                %402 = vst [vmem:[%s334 + $0x108] sm:$0xff] %v401
                %v403 = vld [vmem:[%s333 + $0x220] sm:$0xff]
                %404 = vst [vmem:[%s334 + $0x110] sm:$0xff] %v403
                %v405 = vld [vmem:[%s333 + $0x228] sm:$0xff]
                %406 = vst [vmem:[%s334 + $0x118] sm:$0xff] %v405
                %v407 = vld [vmem:[%s333 + $0x240] sm:$0xff]
                %408 = vst [vmem:[%s334 + $0x120] sm:$0xff] %v407
                %v409 = vld [vmem:[%s333 + $0x248] sm:$0xff]
                %410 = vst [vmem:[%s334 + $0x128] sm:$0xff] %v409
                %v411 = vld [vmem:[%s333 + $0x260] sm:$0xff]
                %412 = vst [vmem:[%s334 + $0x130] sm:$0xff] %v411
                %v413 = vld [vmem:[%s333 + $0x268] sm:$0xff]
                %414 = vst [vmem:[%s334 + $0x138] sm:$0xff] %v413
                %v415 = vld [vmem:[%s333 + $0x280] sm:$0xff]
                %416 = vst [vmem:[%s334 + $0x140] sm:$0xff] %v415
                %v417 = vld [vmem:[%s333 + $0x288] sm:$0xff]
                %418 = vst [vmem:[%s334 + $0x148] sm:$0xff] %v417
                %v419 = vld [vmem:[%s333 + $0x2a0] sm:$0xff]
                %420 = vst [vmem:[%s334 + $0x150] sm:$0xff] %v419
                %v421 = vld [vmem:[%s333 + $0x2a8] sm:$0xff]
                %422 = vst [vmem:[%s334 + $0x158] sm:$0xff] %v421
                %v423 = vld [vmem:[%s333 + $0x2c0] sm:$0xff]
                %424 = vst [vmem:[%s334 + $0x160] sm:$0xff] %v423
                %v425 = vld [vmem:[%s333 + $0x2c8] sm:$0xff]
                %426 = vst [vmem:[%s334 + $0x168] sm:$0xff] %v425
                %v427 = vld [vmem:[%s333 + $0x2e0] sm:$0xff]
                %428 = vst [vmem:[%s334 + $0x170] sm:$0xff] %v427
                %v429 = vld [vmem:[%s333 + $0x2e8] sm:$0xff]
                %430 = vst [vmem:[%s334 + $0x178] sm:$0xff] %v429
                %v431 = vld [vmem:[%s333 + $0x300] sm:$0xff]
                %432 = vst [vmem:[%s334 + $0x180] sm:$0xff] %v431
                %v433 = vld [vmem:[%s333 + $0x308] sm:$0xff]
                %434 = vst [vmem:[%s334 + $0x188] sm:$0xff] %v433
                %v435 = vld [vmem:[%s333 + $0x320] sm:$0xff]
                %436 = vst [vmem:[%s334 + $0x190] sm:$0xff] %v435
                %v437 = vld [vmem:[%s333 + $0x328] sm:$0xff]
                %438 = vst [vmem:[%s334 + $0x198] sm:$0xff] %v437
                %v439 = vld [vmem:[%s333 + $0x340] sm:$0xff]
                %440 = vst [vmem:[%s334 + $0x1a0] sm:$0xff] %v439
                %v441 = vld [vmem:[%s333 + $0x348] sm:$0xff]
                %442 = vst [vmem:[%s334 + $0x1a8] sm:$0xff] %v441
                %v443 = vld [vmem:[%s333 + $0x360] sm:$0xff]
                %444 = vst [vmem:[%s334 + $0x1b0] sm:$0xff] %v443
                %v445 = vld [vmem:[%s333 + $0x368] sm:$0xff]
                %446 = vst [vmem:[%s334 + $0x1b8] sm:$0xff] %v445
                %v447 = vld [vmem:[%s333 + $0x380] sm:$0xff]
                %448 = vst [vmem:[%s334 + $0x1c0] sm:$0xff] %v447
                %v449 = vld [vmem:[%s333 + $0x388] sm:$0xff]
                %450 = vst [vmem:[%s334 + $0x1c8] sm:$0xff] %v449
                %v451 = vld [vmem:[%s333 + $0x3a0] sm:$0xff]
                %452 = vst [vmem:[%s334 + $0x1d0] sm:$0xff] %v451
                %v453 = vld [vmem:[%s333 + $0x3a8] sm:$0xff]
                %454 = vst [vmem:[%s334 + $0x1d8] sm:$0xff] %v453
                %v455 = vld [vmem:[%s333 + $0x3c0] sm:$0xff]
                %456 = vst [vmem:[%s334 + $0x1e0] sm:$0xff] %v455
                %v457 = vld [vmem:[%s333 + $0x3c8] sm:$0xff]
                %458 = vst [vmem:[%s334 + $0x1e8] sm:$0xff] %v457
                %v459 = vld [vmem:[%s333 + $0x3e0] sm:$0xff]
                %460 = vst [vmem:[%s334 + $0x1f0] sm:$0xff] %v459
                %v461 = vld [vmem:[%s333 + $0x3e8] sm:$0xff]
                %462 = vst [vmem:[%s334 + $0x1f8] sm:$0xff] %v461
              $region45: #{tpu_custom_call.1} parent=39 // loop_footer
                %s332 = sadd.s32 1, %s328
              $region46: #{tpu_custom_call.1} parent=39 // loop_footer_branch
                %327 = sbr.rel target = $region42
              $region47: #{tpu_custom_call.1} parent=39 // loop_exit
                _
            $region40: #{tpu_custom_call.1} parent=35 // pred_fallthru
              _
            // Predicated region
            $region48: #{tpu_custom_call.1} parent=35 // pred_check
              _
            $region49: #{tpu_custom_call.1} parent=35 // pred_check_branch
              %464 = sbr.rel target = $region51
            $region50: #{tpu_custom_call.1} parent=35 // pred_region
              _
            $region51: #{tpu_custom_call.1} parent=35 // pred_fallthru
              _
          $region36: #{tpu_custom_call.1} parent=31 // pred_fallthru
            _
          %465 = vnop
        $region32: #{tpu_custom_call.1} parent=27 // pred_fallthru
          _
        // Predicated region
        $region52: #{tpu_custom_call.1} parent=27 // pred_check
          %p466 = pneg %p83
        $region53: #{tpu_custom_call.1} parent=27 // pred_check_branch
          %468 = sbr.rel (%p466) target = $region55
        $region54: #{tpu_custom_call.1} parent=27 // pred_region
          %s469 = sand.u32 %s73, 1
          %s470 = scalar_lea.sflag [#allocation6], %s469
          %s471 = sand.u32 %s73, 1
          %s472 = smul.addr %s471, 512
          %s473 = scalar_lea.vmem [#allocation5], %s472
          %s474 = smul.u32 32, %s28
          %s475 = smul.u32 4, %s29
          %477 = vsyncadd %s470, 0
          %s478 = smul.addr %s474, 8
          %s479 = sadd.s32 %s475, %s478
          %s480 = smul.addr %s479, 4
          %s481 = scalar_lea.hbm %s1, %s480
          %s482 = sshll.u32 %s481, 4
          %s483 = int_to_ptr.hbm [resolvable:$true] %s482
          %s484 = sshll.u32 %s473, 4
          %s485 = int_to_ptr.vmem [resolvable:$true] %s484
          %490 = dma.hbm_to_vmem [thread:$0]  %s483, 8192, %s485, %s470, 512, 256, 16
        $region55: #{tpu_custom_call.1} parent=27 // pred_fallthru
          _
        // Predicated region
        $region56: #{tpu_custom_call.1} parent=27 // pred_check
          %p491 = pneg %p109
        $region57: #{tpu_custom_call.1} parent=27 // pred_check_branch
          %493 = sbr.rel (%p491) target = $region59
        $region58: #{tpu_custom_call.1} parent=27 // pred_region
          %s494 = smul.u32 64, %s29
          %p495 = scmp.lt.s32.totalorder %s494, 127
          %s496 = scalar_select %p495, %s494, 127
          %s497 = smul.addr %s496, 8
          %s498 = scalar_lea.vmem %s2, %s497
          %s499 = smul.u32 64, %s29
        $region59: #{tpu_custom_call.1} parent=27 // pred_fallthru
          _
        // Predicated region
        $region60: #{tpu_custom_call.1} parent=27 // pred_check
          %p500 = pneg %p135
        $region61: #{tpu_custom_call.1} parent=27 // pred_check_branch
          %502 = sbr.rel (%p500) target = $region63
        $region62: #{tpu_custom_call.1} parent=27 // pred_region
          %s503 = smul.u32 64, %s29
          %p504 = scmp.lt.s32.totalorder %s503, 127
          %s505 = scalar_select %p504, %s503, 127
          %s506 = smul.addr %s505, 8
          %s507 = scalar_lea.vmem %s3, %s506
          %s508 = smul.u32 64, %s29
        $region63: #{tpu_custom_call.1} parent=27 // pred_fallthru
          _
        // Predicated region
        $region64: #{tpu_custom_call.1} parent=27 // pred_check
          %p509 = pneg %p161
        $region65: #{tpu_custom_call.1} parent=27 // pred_check_branch
          %511 = sbr.rel (%p509) target = $region67
        $region66: #{tpu_custom_call.1} parent=27 // pred_region
          %s512 = smul.u32 32, %s28
          %p513 = scmp.lt.s32.totalorder %s512, 127
          %s514 = scalar_select %p513, %s512, 127
          %s515 = smul.addr %s514, 8
          %s516 = scalar_lea.vmem %s4, %s515
          %s517 = smul.u32 32, %s28
        $region67: #{tpu_custom_call.1} parent=27 // pred_fallthru
          _
        // Predicated region
        $region68: #{tpu_custom_call.1} parent=27 // pred_check
          %p518 = pneg %p187
        $region69: #{tpu_custom_call.1} parent=27 // pred_check_branch
          %520 = sbr.rel (%p518) target = $region71
        $region70: #{tpu_custom_call.1} parent=27 // pred_region
          %s521 = smul.u32 32, %s28
          %p522 = scmp.lt.s32.totalorder %s521, 127
          %s523 = scalar_select %p522, %s521, 127
          %s524 = smul.addr %s523, 8
          %s525 = scalar_lea.vmem %s5, %s524
          %s526 = smul.u32 32, %s28
        $region71: #{tpu_custom_call.1} parent=27 // pred_fallthru
          _
      $region28: #{tpu_custom_call.1} parent=5 // pred_fallthru
        _
      %p527 = scmp.le.s32.totalorder 1, %s21
      %p528 = scmp.lt.s32.totalorder %s21, 9
      %p529 = pnand %p527, %p528
      %p530 = pneg %p529
      // Predicated region
      $region72: #{tpu_custom_call.1} parent=5 // pred_check
        _
      $region73: #{tpu_custom_call.1} parent=5 // pred_check_branch
        %532 = sbr.rel (%p529) target = $region75
      $region74: #{tpu_custom_call.1} parent=5 // pred_region
        %s533 = ssub.s32 %s21, 1
        %s534 = sand.u32 %s48, 1
        %s535 = sand.u32 %s48, 1
        %s536 = smul.addr %s535, 512
        %s537 = scalar_lea.vmem [#allocation4], %s536
        // Predicated region
        $region76: #{tpu_custom_call.1} parent=74 // pred_check
          %p538 = pneg %p61
        $region77: #{tpu_custom_call.1} parent=74 // pred_check_branch
          %540 = sbr.rel (%p538) target = $region79
        $region78: #{tpu_custom_call.1} parent=74 // pred_region
          _
        $region79: #{tpu_custom_call.1} parent=74 // pred_fallthru
          _
        %s541 = sand.u32 %s76, 1
        %s542 = scalar_lea.sflag [#allocation6], %s541
        %s543 = sand.u32 %s76, 1
        %s544 = smul.addr %s543, 512
        %s545 = scalar_lea.vmem [#allocation5], %s544
        // Predicated region
        $region80: #{tpu_custom_call.1} parent=74 // pred_check
          %p546 = pneg %p89
        $region81: #{tpu_custom_call.1} parent=74 // pred_check_branch
          %548 = sbr.rel (%p546) target = $region83
        $region82: #{tpu_custom_call.1} parent=74 // pred_region
          %550 = dma.done %s542, 8192
        $region83: #{tpu_custom_call.1} parent=74 // pred_fallthru
          _
        %s551 = sand.u32 %s48, 1
        %s552 = sand.u32 %s48, 1
        %s553 = smul.addr %s552, 512
        %s554 = scalar_lea.vmem [#allocation4], %s553
        %p555 = pneg %p61
        %p556 = pneg %p58
        %s557 = sand.u32 %s76, 1
        %s558 = scalar_lea.sflag [#allocation6], %s557
        %s559 = sand.u32 %s76, 1
        %s560 = smul.addr %s559, 512
        %s561 = scalar_lea.vmem [#allocation5], %s560
        %p562 = pneg %p89
        %p563 = pneg %p86
        %s564 = smul.u32 64, %s31
        %p565 = scmp.lt.s32.totalorder %s564, 127
        %s566 = scalar_select %p565, %s564, 127
        %s567 = smul.addr %s566, 8
        %s568 = scalar_lea.vmem %s2, %s567
        %p569 = pneg %p115
        %p570 = pneg %p112
        %s571 = smul.u32 64, %s31
        %p572 = scmp.lt.s32.totalorder %s571, 127
        %s573 = scalar_select %p572, %s571, 127
        %s574 = smul.addr %s573, 8
        %s575 = scalar_lea.vmem %s3, %s574
        %p576 = pneg %p141
        %p577 = pneg %p138
        %s578 = smul.u32 32, %s30
        %p579 = scmp.lt.s32.totalorder %s578, 127
        %s580 = scalar_select %p579, %s578, 127
        %s581 = smul.addr %s580, 8
        %s582 = scalar_lea.vmem %s4, %s581
        %p583 = pneg %p167
        %p584 = pneg %p164
        %s585 = smul.u32 32, %s30
        %p586 = scmp.lt.s32.totalorder %s585, 127
        %s587 = scalar_select %p586, %s585, 127
        %s588 = smul.addr %s587, 8
        %s589 = scalar_lea.vmem %s5, %s588
        %p590 = pneg %p193
        %p591 = pneg %p190
        %p592 = pneg %p214
        %p593 = pneg %p211
        %p594 = pneg %p235
        %p595 = pneg %p232
        %p596 = pneg %p256
        %p597 = pneg %p253
        %p598 = pneg %p282
        %p599 = pneg %p279
        %s600 = sand.u32 %s269, 1
        %s601 = scalar_lea.sflag [#allocation7], %s600
        %s602 = sand.u32 %s269, 1
        %s603 = smul.addr %s602, 256
        %s604 = scalar_lea.vmem [#allocation8], %s603
        %s605 = smul.u32 32, %s30
        %s606 = smul.u32 4, %s31
        %s607 = smul.u32 32, %s30
        %s608 = smul.u32 4, %s31
        %s609 = smul.u32 64, %s31
        %p610 = scmp.lt.s32.totalorder %s609, 127
        %s611 = scalar_select %p610, %s609, 127
        %s612 = smul.addr %s611, 8
        %s613 = scalar_lea.vmem %s2, %s612
        %s614 = smul.u32 64, %s31
        %s615 = smul.u32 64, %s31
        %p616 = scmp.lt.s32.totalorder %s615, 127
        %s617 = scalar_select %p616, %s615, 127
        %s618 = smul.addr %s617, 8
        %s619 = scalar_lea.vmem %s3, %s618
        %s620 = smul.u32 64, %s31
        %s621 = smul.u32 32, %s30
        %p622 = scmp.lt.s32.totalorder %s621, 127
        %s623 = scalar_select %p622, %s621, 127
        %s624 = smul.addr %s623, 8
        %s625 = scalar_lea.vmem %s4, %s624
        %s626 = smul.u32 32, %s30
        %s627 = smul.u32 32, %s30
        %p628 = scmp.lt.s32.totalorder %s627, 127
        %s629 = scalar_select %p628, %s627, 127
        %s630 = smul.addr %s629, 8
        %s631 = scalar_lea.vmem %s5, %s630
        %s632 = smul.u32 32, %s30
        %s633 = smul.u32 32, %s30
        %p634 = scmp.eq.s32.totalorder %s31, 0
        // Predicated region
        $region84: #{tpu_custom_call.1} parent=74 // pred_check
          %p635 = pneg %p634
        $region85: #{tpu_custom_call.1} parent=74 // pred_check_branch
          %637 = sbr.rel (%p635) target = $region87
        $region86: #{tpu_custom_call.1} parent=74 // pred_region
          %vm638 = vcmask 130048
          %639 = vst.msk [vmem:[#allocation2] sm:$0xff] %vm638, 0.0
          %640 = vst.msk [vmem:[#allocation2 + $0x8] sm:$0xff] %vm638, 0.0
          %641 = vst.msk [vmem:[#allocation2 + $0x10] sm:$0xff] %vm638, 0.0
          %642 = vst.msk [vmem:[#allocation2 + $0x18] sm:$0xff] %vm638, 0.0
          %643 = vst.msk [vmem:[#allocation2 + $0x20] sm:$0xff] %vm638, 0.0
          %644 = vst.msk [vmem:[#allocation2 + $0x28] sm:$0xff] %vm638, 0.0
          %645 = vst.msk [vmem:[#allocation2 + $0x30] sm:$0xff] %vm638, 0.0
          %646 = vst.msk [vmem:[#allocation2 + $0x38] sm:$0xff] %vm638, 0.0
          %647 = vst.msk [vmem:[#allocation2 + $0x40] sm:$0xff] %vm638, 0.0
          %648 = vst.msk [vmem:[#allocation2 + $0x48] sm:$0xff] %vm638, 0.0
          %649 = vst.msk [vmem:[#allocation2 + $0x50] sm:$0xff] %vm638, 0.0
          %650 = vst.msk [vmem:[#allocation2 + $0x58] sm:$0xff] %vm638, 0.0
          %651 = vst.msk [vmem:[#allocation2 + $0x60] sm:$0xff] %vm638, 0.0
          %652 = vst.msk [vmem:[#allocation2 + $0x68] sm:$0xff] %vm638, 0.0
          %653 = vst.msk [vmem:[#allocation2 + $0x70] sm:$0xff] %vm638, 0.0
          %654 = vst.msk [vmem:[#allocation2 + $0x78] sm:$0xff] %vm638, 0.0
          %655 = vst.msk [vmem:[#allocation2 + $0x80] sm:$0xff] %vm638, 0.0
          %656 = vst.msk [vmem:[#allocation2 + $0x88] sm:$0xff] %vm638, 0.0
          %657 = vst.msk [vmem:[#allocation2 + $0x90] sm:$0xff] %vm638, 0.0
          %658 = vst.msk [vmem:[#allocation2 + $0x98] sm:$0xff] %vm638, 0.0
          %659 = vst.msk [vmem:[#allocation2 + $0xa0] sm:$0xff] %vm638, 0.0
          %660 = vst.msk [vmem:[#allocation2 + $0xa8] sm:$0xff] %vm638, 0.0
          %661 = vst.msk [vmem:[#allocation2 + $0xb0] sm:$0xff] %vm638, 0.0
          %662 = vst.msk [vmem:[#allocation2 + $0xb8] sm:$0xff] %vm638, 0.0
          %663 = vst.msk [vmem:[#allocation2 + $0xc0] sm:$0xff] %vm638, 0.0
          %664 = vst.msk [vmem:[#allocation2 + $0xc8] sm:$0xff] %vm638, 0.0
          %665 = vst.msk [vmem:[#allocation2 + $0xd0] sm:$0xff] %vm638, 0.0
          %666 = vst.msk [vmem:[#allocation2 + $0xd8] sm:$0xff] %vm638, 0.0
          %667 = vst.msk [vmem:[#allocation2 + $0xe0] sm:$0xff] %vm638, 0.0
          %668 = vst.msk [vmem:[#allocation2 + $0xe8] sm:$0xff] %vm638, 0.0
          %669 = vst.msk [vmem:[#allocation2 + $0xf0] sm:$0xff] %vm638, 0.0
          %670 = vst.msk [vmem:[#allocation2 + $0xf8] sm:$0xff] %vm638, 0.0
          %671 = vst.msk [vmem:[#allocation3] sm:$0xff] %vm638, 0.0
          %672 = vst.msk [vmem:[#allocation3 + $0x8] sm:$0xff] %vm638, 0.0
          %673 = vst.msk [vmem:[#allocation3 + $0x10] sm:$0xff] %vm638, 0.0
          %674 = vst.msk [vmem:[#allocation3 + $0x18] sm:$0xff] %vm638, 0.0
          %675 = vst.msk [vmem:[#allocation3 + $0x20] sm:$0xff] %vm638, 0.0
          %676 = vst.msk [vmem:[#allocation3 + $0x28] sm:$0xff] %vm638, 0.0
          %677 = vst.msk [vmem:[#allocation3 + $0x30] sm:$0xff] %vm638, 0.0
          %678 = vst.msk [vmem:[#allocation3 + $0x38] sm:$0xff] %vm638, 0.0
          %679 = vst.msk [vmem:[#allocation3 + $0x40] sm:$0xff] %vm638, 0.0
          %680 = vst.msk [vmem:[#allocation3 + $0x48] sm:$0xff] %vm638, 0.0
          %681 = vst.msk [vmem:[#allocation3 + $0x50] sm:$0xff] %vm638, 0.0
          %682 = vst.msk [vmem:[#allocation3 + $0x58] sm:$0xff] %vm638, 0.0
          %683 = vst.msk [vmem:[#allocation3 + $0x60] sm:$0xff] %vm638, 0.0
          %684 = vst.msk [vmem:[#allocation3 + $0x68] sm:$0xff] %vm638, 0.0
          %685 = vst.msk [vmem:[#allocation3 + $0x70] sm:$0xff] %vm638, 0.0
          %686 = vst.msk [vmem:[#allocation3 + $0x78] sm:$0xff] %vm638, 0.0
          %687 = vst.msk [vmem:[#allocation3 + $0x80] sm:$0xff] %vm638, 0.0
          %688 = vst.msk [vmem:[#allocation3 + $0x88] sm:$0xff] %vm638, 0.0
          %689 = vst.msk [vmem:[#allocation3 + $0x90] sm:$0xff] %vm638, 0.0
          %690 = vst.msk [vmem:[#allocation3 + $0x98] sm:$0xff] %vm638, 0.0
          %691 = vst.msk [vmem:[#allocation3 + $0xa0] sm:$0xff] %vm638, 0.0
          %692 = vst.msk [vmem:[#allocation3 + $0xa8] sm:$0xff] %vm638, 0.0
          %693 = vst.msk [vmem:[#allocation3 + $0xb0] sm:$0xff] %vm638, 0.0
          %694 = vst.msk [vmem:[#allocation3 + $0xb8] sm:$0xff] %vm638, 0.0
          %695 = vst.msk [vmem:[#allocation3 + $0xc0] sm:$0xff] %vm638, 0.0
          %696 = vst.msk [vmem:[#allocation3 + $0xc8] sm:$0xff] %vm638, 0.0
          %697 = vst.msk [vmem:[#allocation3 + $0xd0] sm:$0xff] %vm638, 0.0
          %698 = vst.msk [vmem:[#allocation3 + $0xd8] sm:$0xff] %vm638, 0.0
          %699 = vst.msk [vmem:[#allocation3 + $0xe0] sm:$0xff] %vm638, 0.0
          %700 = vst.msk [vmem:[#allocation3 + $0xe8] sm:$0xff] %vm638, 0.0
          %701 = vst.msk [vmem:[#allocation3 + $0xf0] sm:$0xff] %vm638, 0.0
          %702 = vst.msk [vmem:[#allocation3 + $0xf8] sm:$0xff] %vm638, 0.0
        $region87: #{tpu_custom_call.1} parent=74 // pred_fallthru
          _
        %v703 = vld [vmem:[%s537] sm:$0xff]
        %v704 = vld [vmem:[%s537 + $0x8] sm:$0xff]
        %v705 = vld [vmem:[%s537 + $0x10] sm:$0xff]
        %v706 = vld [vmem:[%s537 + $0x18] sm:$0xff]
        %v707 = vld [vmem:[%s537 + $0x20] sm:$0xff]
        %v708 = vld [vmem:[%s537 + $0x28] sm:$0xff]
        %v709 = vld [vmem:[%s537 + $0x30] sm:$0xff]
        %v710 = vld [vmem:[%s537 + $0x38] sm:$0xff]
        %v711 = vld [vmem:[%s537 + $0x40] sm:$0xff]
        %v712 = vld [vmem:[%s537 + $0x48] sm:$0xff]
        %v713 = vld [vmem:[%s537 + $0x50] sm:$0xff]
        %v714 = vld [vmem:[%s537 + $0x58] sm:$0xff]
        %v715 = vld [vmem:[%s537 + $0x60] sm:$0xff]
        %v716 = vld [vmem:[%s537 + $0x68] sm:$0xff]
        %v717 = vld [vmem:[%s537 + $0x70] sm:$0xff]
        %v718 = vld [vmem:[%s537 + $0x78] sm:$0xff]
        %v719 = vld [vmem:[%s537 + $0x80] sm:$0xff]
        %v720 = vld [vmem:[%s537 + $0x88] sm:$0xff]
        %v721 = vld [vmem:[%s537 + $0x90] sm:$0xff]
        %v722 = vld [vmem:[%s537 + $0x98] sm:$0xff]
        %v723 = vld [vmem:[%s537 + $0xa0] sm:$0xff]
        %v724 = vld [vmem:[%s537 + $0xa8] sm:$0xff]
        %v725 = vld [vmem:[%s537 + $0xb0] sm:$0xff]
        %v726 = vld [vmem:[%s537 + $0xb8] sm:$0xff]
        %v727 = vld [vmem:[%s537 + $0xc0] sm:$0xff]
        %v728 = vld [vmem:[%s537 + $0xc8] sm:$0xff]
        %v729 = vld [vmem:[%s537 + $0xd0] sm:$0xff]
        %v730 = vld [vmem:[%s537 + $0xd8] sm:$0xff]
        %v731 = vld [vmem:[%s537 + $0xe0] sm:$0xff]
        %v732 = vld [vmem:[%s537 + $0xe8] sm:$0xff]
        %v733 = vld [vmem:[%s537 + $0xf0] sm:$0xff]
        %v734 = vld [vmem:[%s537 + $0xf8] sm:$0xff]
        %v735 = vld [vmem:[%s537 + $0x100] sm:$0xff]
        %v736 = vld [vmem:[%s537 + $0x108] sm:$0xff]
        %v737 = vld [vmem:[%s537 + $0x110] sm:$0xff]
        %v738 = vld [vmem:[%s537 + $0x118] sm:$0xff]
        %v739 = vld [vmem:[%s537 + $0x120] sm:$0xff]
        %v740 = vld [vmem:[%s537 + $0x128] sm:$0xff]
        %v741 = vld [vmem:[%s537 + $0x130] sm:$0xff]
        %v742 = vld [vmem:[%s537 + $0x138] sm:$0xff]
        %v743 = vld [vmem:[%s537 + $0x140] sm:$0xff]
        %v744 = vld [vmem:[%s537 + $0x148] sm:$0xff]
        %v745 = vld [vmem:[%s537 + $0x150] sm:$0xff]
        %v746 = vld [vmem:[%s537 + $0x158] sm:$0xff]
        %v747 = vld [vmem:[%s537 + $0x160] sm:$0xff]
        %v748 = vld [vmem:[%s537 + $0x168] sm:$0xff]
        %v749 = vld [vmem:[%s537 + $0x170] sm:$0xff]
        %v750 = vld [vmem:[%s537 + $0x178] sm:$0xff]
        %v751 = vld [vmem:[%s537 + $0x180] sm:$0xff]
        %v752 = vld [vmem:[%s537 + $0x188] sm:$0xff]
        %v753 = vld [vmem:[%s537 + $0x190] sm:$0xff]
        %v754 = vld [vmem:[%s537 + $0x198] sm:$0xff]
        %v755 = vld [vmem:[%s537 + $0x1a0] sm:$0xff]
        %v756 = vld [vmem:[%s537 + $0x1a8] sm:$0xff]
        %v757 = vld [vmem:[%s537 + $0x1b0] sm:$0xff]
        %v758 = vld [vmem:[%s537 + $0x1b8] sm:$0xff]
        %v759 = vld [vmem:[%s537 + $0x1c0] sm:$0xff]
        %v760 = vld [vmem:[%s537 + $0x1c8] sm:$0xff]
        %v761 = vld [vmem:[%s537 + $0x1d0] sm:$0xff]
        %v762 = vld [vmem:[%s537 + $0x1d8] sm:$0xff]
        %v763 = vld [vmem:[%s537 + $0x1e0] sm:$0xff]
        %v764 = vld [vmem:[%s537 + $0x1e8] sm:$0xff]
        %v765 = vld [vmem:[%s537 + $0x1f0] sm:$0xff]
        %v766 = vld [vmem:[%s537 + $0x1f8] sm:$0xff]
        %v767 = vunpack.c.l.bf16 %v703
        %v768 = vunpack.c.h.bf16 %v703
        %v769 = vunpack.c.l.bf16 %v704
        %v770 = vunpack.c.h.bf16 %v704
        %v771 = vunpack.c.l.bf16 %v705
        %v772 = vunpack.c.h.bf16 %v705
        %v773 = vunpack.c.l.bf16 %v706
        %v774 = vunpack.c.h.bf16 %v706
        %v775 = vunpack.c.l.bf16 %v707
        %v776 = vunpack.c.h.bf16 %v707
        %v777 = vunpack.c.l.bf16 %v708
        %v778 = vunpack.c.h.bf16 %v708
        %v779 = vunpack.c.l.bf16 %v709
        %v780 = vunpack.c.h.bf16 %v709
        %v781 = vunpack.c.l.bf16 %v710
        %v782 = vunpack.c.h.bf16 %v710
        %v783 = vunpack.c.l.bf16 %v711
        %v784 = vunpack.c.h.bf16 %v711
        %v785 = vunpack.c.l.bf16 %v712
        %v786 = vunpack.c.h.bf16 %v712
        %v787 = vunpack.c.l.bf16 %v713
        %v788 = vunpack.c.h.bf16 %v713
        %v789 = vunpack.c.l.bf16 %v714
        %v790 = vunpack.c.h.bf16 %v714
        %v791 = vunpack.c.l.bf16 %v715
        %v792 = vunpack.c.h.bf16 %v715
        %v793 = vunpack.c.l.bf16 %v716
        %v794 = vunpack.c.h.bf16 %v716
        %v795 = vunpack.c.l.bf16 %v717
        %v796 = vunpack.c.h.bf16 %v717
        %v797 = vunpack.c.l.bf16 %v718
        %v798 = vunpack.c.h.bf16 %v718
        %v799 = vunpack.c.l.bf16 %v719
        %v800 = vunpack.c.h.bf16 %v719
        %v801 = vunpack.c.l.bf16 %v720
        %v802 = vunpack.c.h.bf16 %v720
        %v803 = vunpack.c.l.bf16 %v721
        %v804 = vunpack.c.h.bf16 %v721
        %v805 = vunpack.c.l.bf16 %v722
        %v806 = vunpack.c.h.bf16 %v722
        %v807 = vunpack.c.l.bf16 %v723
        %v808 = vunpack.c.h.bf16 %v723
        %v809 = vunpack.c.l.bf16 %v724
        %v810 = vunpack.c.h.bf16 %v724
        %v811 = vunpack.c.l.bf16 %v725
        %v812 = vunpack.c.h.bf16 %v725
        %v813 = vunpack.c.l.bf16 %v726
        %v814 = vunpack.c.h.bf16 %v726
        %v815 = vunpack.c.l.bf16 %v727
        %v816 = vunpack.c.h.bf16 %v727
        %v817 = vunpack.c.l.bf16 %v728
        %v818 = vunpack.c.h.bf16 %v728
        %v819 = vunpack.c.l.bf16 %v729
        %v820 = vunpack.c.h.bf16 %v729
        %v821 = vunpack.c.l.bf16 %v730
        %v822 = vunpack.c.h.bf16 %v730
        %v823 = vunpack.c.l.bf16 %v731
        %v824 = vunpack.c.h.bf16 %v731
        %v825 = vunpack.c.l.bf16 %v732
        %v826 = vunpack.c.h.bf16 %v732
        %v827 = vunpack.c.l.bf16 %v733
        %v828 = vunpack.c.h.bf16 %v733
        %v829 = vunpack.c.l.bf16 %v734
        %v830 = vunpack.c.h.bf16 %v734
        %v831 = vunpack.c.l.bf16 %v735
        %v832 = vunpack.c.h.bf16 %v735
        %v833 = vunpack.c.l.bf16 %v736
        %v834 = vunpack.c.h.bf16 %v736
        %v835 = vunpack.c.l.bf16 %v737
        %v836 = vunpack.c.h.bf16 %v737
        %v837 = vunpack.c.l.bf16 %v738
        %v838 = vunpack.c.h.bf16 %v738
        %v839 = vunpack.c.l.bf16 %v739
        %v840 = vunpack.c.h.bf16 %v739
        %v841 = vunpack.c.l.bf16 %v740
        %v842 = vunpack.c.h.bf16 %v740
        %v843 = vunpack.c.l.bf16 %v741
        %v844 = vunpack.c.h.bf16 %v741
        %v845 = vunpack.c.l.bf16 %v742
        %v846 = vunpack.c.h.bf16 %v742
        %v847 = vunpack.c.l.bf16 %v743
        %v848 = vunpack.c.h.bf16 %v743
        %v849 = vunpack.c.l.bf16 %v744
        %v850 = vunpack.c.h.bf16 %v744
        %v851 = vunpack.c.l.bf16 %v745
        %v852 = vunpack.c.h.bf16 %v745
        %v853 = vunpack.c.l.bf16 %v746
        %v854 = vunpack.c.h.bf16 %v746
        %v855 = vunpack.c.l.bf16 %v747
        %v856 = vunpack.c.h.bf16 %v747
        %v857 = vunpack.c.l.bf16 %v748
        %v858 = vunpack.c.h.bf16 %v748
        %v859 = vunpack.c.l.bf16 %v749
        %v860 = vunpack.c.h.bf16 %v749
        %v861 = vunpack.c.l.bf16 %v750
        %v862 = vunpack.c.h.bf16 %v750
        %v863 = vunpack.c.l.bf16 %v751
        %v864 = vunpack.c.h.bf16 %v751
        %v865 = vunpack.c.l.bf16 %v752
        %v866 = vunpack.c.h.bf16 %v752
        %v867 = vunpack.c.l.bf16 %v753
        %v868 = vunpack.c.h.bf16 %v753
        %v869 = vunpack.c.l.bf16 %v754
        %v870 = vunpack.c.h.bf16 %v754
        %v871 = vunpack.c.l.bf16 %v755
        %v872 = vunpack.c.h.bf16 %v755
        %v873 = vunpack.c.l.bf16 %v756
        %v874 = vunpack.c.h.bf16 %v756
        %v875 = vunpack.c.l.bf16 %v757
        %v876 = vunpack.c.h.bf16 %v757
        %v877 = vunpack.c.l.bf16 %v758
        %v878 = vunpack.c.h.bf16 %v758
        %v879 = vunpack.c.l.bf16 %v759
        %v880 = vunpack.c.h.bf16 %v759
        %v881 = vunpack.c.l.bf16 %v760
        %v882 = vunpack.c.h.bf16 %v760
        %v883 = vunpack.c.l.bf16 %v761
        %v884 = vunpack.c.h.bf16 %v761
        %v885 = vunpack.c.l.bf16 %v762
        %v886 = vunpack.c.h.bf16 %v762
        %v887 = vunpack.c.l.bf16 %v763
        %v888 = vunpack.c.h.bf16 %v763
        %v889 = vunpack.c.l.bf16 %v764
        %v890 = vunpack.c.h.bf16 %v764
        %v891 = vunpack.c.l.bf16 %v765
        %v892 = vunpack.c.h.bf16 %v765
        %v893 = vunpack.c.l.bf16 %v766
        %v894 = vunpack.c.h.bf16 %v766
        %v895 = vld [vmem:[%s545] sm:$0xff]
        %v896 = vld [vmem:[%s545 + $0x8] sm:$0xff]
        %v897 = vld [vmem:[%s545 + $0x10] sm:$0xff]
        %v898 = vld [vmem:[%s545 + $0x18] sm:$0xff]
        %v899 = vld [vmem:[%s545 + $0x20] sm:$0xff]
        %v900 = vld [vmem:[%s545 + $0x28] sm:$0xff]
        %v901 = vld [vmem:[%s545 + $0x30] sm:$0xff]
        %v902 = vld [vmem:[%s545 + $0x38] sm:$0xff]
        %v903 = vld [vmem:[%s545 + $0x40] sm:$0xff]
        %v904 = vld [vmem:[%s545 + $0x48] sm:$0xff]
        %v905 = vld [vmem:[%s545 + $0x50] sm:$0xff]
        %v906 = vld [vmem:[%s545 + $0x58] sm:$0xff]
        %v907 = vld [vmem:[%s545 + $0x60] sm:$0xff]
        %v908 = vld [vmem:[%s545 + $0x68] sm:$0xff]
        %v909 = vld [vmem:[%s545 + $0x70] sm:$0xff]
        %v910 = vld [vmem:[%s545 + $0x78] sm:$0xff]
        %v911 = vld [vmem:[%s545 + $0x80] sm:$0xff]
        %v912 = vld [vmem:[%s545 + $0x88] sm:$0xff]
        %v913 = vld [vmem:[%s545 + $0x90] sm:$0xff]
        %v914 = vld [vmem:[%s545 + $0x98] sm:$0xff]
        %v915 = vld [vmem:[%s545 + $0xa0] sm:$0xff]
        %v916 = vld [vmem:[%s545 + $0xa8] sm:$0xff]
        %v917 = vld [vmem:[%s545 + $0xb0] sm:$0xff]
        %v918 = vld [vmem:[%s545 + $0xb8] sm:$0xff]
        %v919 = vld [vmem:[%s545 + $0xc0] sm:$0xff]
        %v920 = vld [vmem:[%s545 + $0xc8] sm:$0xff]
        %v921 = vld [vmem:[%s545 + $0xd0] sm:$0xff]
        %v922 = vld [vmem:[%s545 + $0xd8] sm:$0xff]
        %v923 = vld [vmem:[%s545 + $0xe0] sm:$0xff]
        %v924 = vld [vmem:[%s545 + $0xe8] sm:$0xff]
        %v925 = vld [vmem:[%s545 + $0xf0] sm:$0xff]
        %v926 = vld [vmem:[%s545 + $0xf8] sm:$0xff]
        %v927 = vld [vmem:[%s545 + $0x100] sm:$0xff]
        %v928 = vld [vmem:[%s545 + $0x108] sm:$0xff]
        %v929 = vld [vmem:[%s545 + $0x110] sm:$0xff]
        %v930 = vld [vmem:[%s545 + $0x118] sm:$0xff]
        %v931 = vld [vmem:[%s545 + $0x120] sm:$0xff]
        %v932 = vld [vmem:[%s545 + $0x128] sm:$0xff]
        %v933 = vld [vmem:[%s545 + $0x130] sm:$0xff]
        %v934 = vld [vmem:[%s545 + $0x138] sm:$0xff]
        %v935 = vld [vmem:[%s545 + $0x140] sm:$0xff]
        %v936 = vld [vmem:[%s545 + $0x148] sm:$0xff]
        %v937 = vld [vmem:[%s545 + $0x150] sm:$0xff]
        %v938 = vld [vmem:[%s545 + $0x158] sm:$0xff]
        %v939 = vld [vmem:[%s545 + $0x160] sm:$0xff]
        %v940 = vld [vmem:[%s545 + $0x168] sm:$0xff]
        %v941 = vld [vmem:[%s545 + $0x170] sm:$0xff]
        %v942 = vld [vmem:[%s545 + $0x178] sm:$0xff]
        %v943 = vld [vmem:[%s545 + $0x180] sm:$0xff]
        %v944 = vld [vmem:[%s545 + $0x188] sm:$0xff]
        %v945 = vld [vmem:[%s545 + $0x190] sm:$0xff]
        %v946 = vld [vmem:[%s545 + $0x198] sm:$0xff]
        %v947 = vld [vmem:[%s545 + $0x1a0] sm:$0xff]
        %v948 = vld [vmem:[%s545 + $0x1a8] sm:$0xff]
        %v949 = vld [vmem:[%s545 + $0x1b0] sm:$0xff]
        %v950 = vld [vmem:[%s545 + $0x1b8] sm:$0xff]
        %v951 = vld [vmem:[%s545 + $0x1c0] sm:$0xff]
        %v952 = vld [vmem:[%s545 + $0x1c8] sm:$0xff]
        %v953 = vld [vmem:[%s545 + $0x1d0] sm:$0xff]
        %v954 = vld [vmem:[%s545 + $0x1d8] sm:$0xff]
        %v955 = vld [vmem:[%s545 + $0x1e0] sm:$0xff]
        %v956 = vld [vmem:[%s545 + $0x1e8] sm:$0xff]
        %v957 = vld [vmem:[%s545 + $0x1f0] sm:$0xff]
        %v958 = vld [vmem:[%s545 + $0x1f8] sm:$0xff]
        %v959 = vunpack.c.l.bf16 %v895
        %v960 = vunpack.c.h.bf16 %v895
        %v961 = vunpack.c.l.bf16 %v896
        %v962 = vunpack.c.h.bf16 %v896
        %v963 = vunpack.c.l.bf16 %v897
        %v964 = vunpack.c.h.bf16 %v897
        %v965 = vunpack.c.l.bf16 %v898
        %v966 = vunpack.c.h.bf16 %v898
        %v967 = vunpack.c.l.bf16 %v899
        %v968 = vunpack.c.h.bf16 %v899
        %v969 = vunpack.c.l.bf16 %v900
        %v970 = vunpack.c.h.bf16 %v900
        %v971 = vunpack.c.l.bf16 %v901
        %v972 = vunpack.c.h.bf16 %v901
        %v973 = vunpack.c.l.bf16 %v902
        %v974 = vunpack.c.h.bf16 %v902
        %v975 = vunpack.c.l.bf16 %v903
        %v976 = vunpack.c.h.bf16 %v903
        %v977 = vunpack.c.l.bf16 %v904
        %v978 = vunpack.c.h.bf16 %v904
        %v979 = vunpack.c.l.bf16 %v905
        %v980 = vunpack.c.h.bf16 %v905
        %v981 = vunpack.c.l.bf16 %v906
        %v982 = vunpack.c.h.bf16 %v906
        %v983 = vunpack.c.l.bf16 %v907
        %v984 = vunpack.c.h.bf16 %v907
        %v985 = vunpack.c.l.bf16 %v908
        %v986 = vunpack.c.h.bf16 %v908
        %v987 = vunpack.c.l.bf16 %v909
        %v988 = vunpack.c.h.bf16 %v909
        %v989 = vunpack.c.l.bf16 %v910
        %v990 = vunpack.c.h.bf16 %v910
        %v991 = vunpack.c.l.bf16 %v911
        %v992 = vunpack.c.h.bf16 %v911
        %v993 = vunpack.c.l.bf16 %v912
        %v994 = vunpack.c.h.bf16 %v912
        %v995 = vunpack.c.l.bf16 %v913
        %v996 = vunpack.c.h.bf16 %v913
        %v997 = vunpack.c.l.bf16 %v914
        %v998 = vunpack.c.h.bf16 %v914
        %v999 = vunpack.c.l.bf16 %v915
        %v1000 = vunpack.c.h.bf16 %v915
        %v1001 = vunpack.c.l.bf16 %v916
        %v1002 = vunpack.c.h.bf16 %v916
        %v1003 = vunpack.c.l.bf16 %v917
        %v1004 = vunpack.c.h.bf16 %v917
        %v1005 = vunpack.c.l.bf16 %v918
        %v1006 = vunpack.c.h.bf16 %v918
        %v1007 = vunpack.c.l.bf16 %v919
        %v1008 = vunpack.c.h.bf16 %v919
        %v1009 = vunpack.c.l.bf16 %v920
        %v1010 = vunpack.c.h.bf16 %v920
        %v1011 = vunpack.c.l.bf16 %v921
        %v1012 = vunpack.c.h.bf16 %v921
        %v1013 = vunpack.c.l.bf16 %v922
        %v1014 = vunpack.c.h.bf16 %v922
        %v1015 = vunpack.c.l.bf16 %v923
        %v1016 = vunpack.c.h.bf16 %v923
        %v1017 = vunpack.c.l.bf16 %v924
        %v1018 = vunpack.c.h.bf16 %v924
        %v1019 = vunpack.c.l.bf16 %v925
        %v1020 = vunpack.c.h.bf16 %v925
        %v1021 = vunpack.c.l.bf16 %v926
        %v1022 = vunpack.c.h.bf16 %v926
        %v1023 = vunpack.c.l.bf16 %v927
        %v1024 = vunpack.c.h.bf16 %v927
        %v1025 = vunpack.c.l.bf16 %v928
        %v1026 = vunpack.c.h.bf16 %v928
        %v1027 = vunpack.c.l.bf16 %v929
        %v1028 = vunpack.c.h.bf16 %v929
        %v1029 = vunpack.c.l.bf16 %v930
        %v1030 = vunpack.c.h.bf16 %v930
        %v1031 = vunpack.c.l.bf16 %v931
        %v1032 = vunpack.c.h.bf16 %v931
        %v1033 = vunpack.c.l.bf16 %v932
        %v1034 = vunpack.c.h.bf16 %v932
        %v1035 = vunpack.c.l.bf16 %v933
        %v1036 = vunpack.c.h.bf16 %v933
        %v1037 = vunpack.c.l.bf16 %v934
        %v1038 = vunpack.c.h.bf16 %v934
        %v1039 = vunpack.c.l.bf16 %v935
        %v1040 = vunpack.c.h.bf16 %v935
        %v1041 = vunpack.c.l.bf16 %v936
        %v1042 = vunpack.c.h.bf16 %v936
        %v1043 = vunpack.c.l.bf16 %v937
        %v1044 = vunpack.c.h.bf16 %v937
        %v1045 = vunpack.c.l.bf16 %v938
        %v1046 = vunpack.c.h.bf16 %v938
        %v1047 = vunpack.c.l.bf16 %v939
        %v1048 = vunpack.c.h.bf16 %v939
        %v1049 = vunpack.c.l.bf16 %v940
        %v1050 = vunpack.c.h.bf16 %v940
        %v1051 = vunpack.c.l.bf16 %v941
        %v1052 = vunpack.c.h.bf16 %v941
        %v1053 = vunpack.c.l.bf16 %v942
        %v1054 = vunpack.c.h.bf16 %v942
        %v1055 = vunpack.c.l.bf16 %v943
        %v1056 = vunpack.c.h.bf16 %v943
        %v1057 = vunpack.c.l.bf16 %v944
        %v1058 = vunpack.c.h.bf16 %v944
        %v1059 = vunpack.c.l.bf16 %v945
        %v1060 = vunpack.c.h.bf16 %v945
        %v1061 = vunpack.c.l.bf16 %v946
        %v1062 = vunpack.c.h.bf16 %v946
        %v1063 = vunpack.c.l.bf16 %v947
        %v1064 = vunpack.c.h.bf16 %v947
        %v1065 = vunpack.c.l.bf16 %v948
        %v1066 = vunpack.c.h.bf16 %v948
        %v1067 = vunpack.c.l.bf16 %v949
        %v1068 = vunpack.c.h.bf16 %v949
        %v1069 = vunpack.c.l.bf16 %v950
        %v1070 = vunpack.c.h.bf16 %v950
        %v1071 = vunpack.c.l.bf16 %v951
        %v1072 = vunpack.c.h.bf16 %v951
        %v1073 = vunpack.c.l.bf16 %v952
        %v1074 = vunpack.c.h.bf16 %v952
        %v1075 = vunpack.c.l.bf16 %v953
        %v1076 = vunpack.c.h.bf16 %v953
        %v1077 = vunpack.c.l.bf16 %v954
        %v1078 = vunpack.c.h.bf16 %v954
        %v1079 = vunpack.c.l.bf16 %v955
        %v1080 = vunpack.c.h.bf16 %v955
        %v1081 = vunpack.c.l.bf16 %v956
        %v1082 = vunpack.c.h.bf16 %v956
        %v1083 = vunpack.c.l.bf16 %v957
        %v1084 = vunpack.c.h.bf16 %v957
        %v1085 = vunpack.c.l.bf16 %v958
        %v1086 = vunpack.c.h.bf16 %v958
        %v1087 = vld [vmem:[#allocation2] sm:$0xff]
        %v1088 = vld [vmem:[#allocation2 + $0x8] sm:$0xff]
        %v1089 = vld [vmem:[#allocation2 + $0x10] sm:$0xff]
        %v1090 = vld [vmem:[#allocation2 + $0x18] sm:$0xff]
        %v1091 = vld [vmem:[#allocation2 + $0x20] sm:$0xff]
        %v1092 = vld [vmem:[#allocation2 + $0x28] sm:$0xff]
        %v1093 = vld [vmem:[#allocation2 + $0x30] sm:$0xff]
        %v1094 = vld [vmem:[#allocation2 + $0x38] sm:$0xff]
        %v1095 = vld [vmem:[#allocation2 + $0x40] sm:$0xff]
        %v1096 = vld [vmem:[#allocation2 + $0x48] sm:$0xff]
        %v1097 = vld [vmem:[#allocation2 + $0x50] sm:$0xff]
        %v1098 = vld [vmem:[#allocation2 + $0x58] sm:$0xff]
        %v1099 = vld [vmem:[#allocation2 + $0x60] sm:$0xff]
        %v1100 = vld [vmem:[#allocation2 + $0x68] sm:$0xff]
        %v1101 = vld [vmem:[#allocation2 + $0x70] sm:$0xff]
        %v1102 = vld [vmem:[#allocation2 + $0x78] sm:$0xff]
        %v1103 = vld [vmem:[#allocation2 + $0x80] sm:$0xff]
        %v1104 = vld [vmem:[#allocation2 + $0x88] sm:$0xff]
        %v1105 = vld [vmem:[#allocation2 + $0x90] sm:$0xff]
        %v1106 = vld [vmem:[#allocation2 + $0x98] sm:$0xff]
        %v1107 = vld [vmem:[#allocation2 + $0xa0] sm:$0xff]
        %v1108 = vld [vmem:[#allocation2 + $0xa8] sm:$0xff]
        %v1109 = vld [vmem:[#allocation2 + $0xb0] sm:$0xff]
        %v1110 = vld [vmem:[#allocation2 + $0xb8] sm:$0xff]
        %v1111 = vld [vmem:[#allocation2 + $0xc0] sm:$0xff]
        %v1112 = vld [vmem:[#allocation2 + $0xc8] sm:$0xff]
        %v1113 = vld [vmem:[#allocation2 + $0xd0] sm:$0xff]
        %v1114 = vld [vmem:[#allocation2 + $0xd8] sm:$0xff]
        %v1115 = vld [vmem:[#allocation2 + $0xe0] sm:$0xff]
        %v1116 = vld [vmem:[#allocation2 + $0xe8] sm:$0xff]
        %v1117 = vld [vmem:[#allocation2 + $0xf0] sm:$0xff]
        %v1118 = vld [vmem:[#allocation2 + $0xf8] sm:$0xff]
        %v1119 = vld [vmem:[%s613] sm:$0xff]
        %v1120 = vld [vmem:[%s613 + $0x8] sm:$0xff]
        %v1121 = vld [vmem:[%s613 + $0x10] sm:$0xff]
        %v1122 = vld [vmem:[%s613 + $0x18] sm:$0xff]
        %v1123 = vld [vmem:[%s613 + $0x20] sm:$0xff]
        %v1124 = vld [vmem:[%s613 + $0x28] sm:$0xff]
        %v1125 = vld [vmem:[%s613 + $0x30] sm:$0xff]
        %v1126 = vld [vmem:[%s613 + $0x38] sm:$0xff]
        %v1127 = vld [vmem:[%s613 + $0x40] sm:$0xff]
        %v1128 = vld [vmem:[%s613 + $0x48] sm:$0xff]
        %v1129 = vld [vmem:[%s613 + $0x50] sm:$0xff]
        %v1130 = vld [vmem:[%s613 + $0x58] sm:$0xff]
        %v1131 = vld [vmem:[%s613 + $0x60] sm:$0xff]
        %v1132 = vld [vmem:[%s613 + $0x68] sm:$0xff]
        %v1133 = vld [vmem:[%s613 + $0x70] sm:$0xff]
        %v1134 = vld [vmem:[%s613 + $0x78] sm:$0xff]
        %v1135 = vld [vmem:[%s613 + $0x80] sm:$0xff]
        %v1136 = vld [vmem:[%s613 + $0x88] sm:$0xff]
        %v1137 = vld [vmem:[%s613 + $0x90] sm:$0xff]
        %v1138 = vld [vmem:[%s613 + $0x98] sm:$0xff]
        %v1139 = vld [vmem:[%s613 + $0xa0] sm:$0xff]
        %v1140 = vld [vmem:[%s613 + $0xa8] sm:$0xff]
        %v1141 = vld [vmem:[%s613 + $0xb0] sm:$0xff]
        %v1142 = vld [vmem:[%s613 + $0xb8] sm:$0xff]
        %v1143 = vld [vmem:[%s613 + $0xc0] sm:$0xff]
        %v1144 = vld [vmem:[%s613 + $0xc8] sm:$0xff]
        %v1145 = vld [vmem:[%s613 + $0xd0] sm:$0xff]
        %v1146 = vld [vmem:[%s613 + $0xd8] sm:$0xff]
        %v1147 = vld [vmem:[%s613 + $0xe0] sm:$0xff]
        %v1148 = vld [vmem:[%s613 + $0xe8] sm:$0xff]
        %v1149 = vld [vmem:[%s613 + $0xf0] sm:$0xff]
        %v1150 = vld [vmem:[%s613 + $0xf8] sm:$0xff]
        %v1151 = vld [vmem:[%s613 + $0x100] sm:$0xff]
        %v1152 = vld [vmem:[%s613 + $0x108] sm:$0xff]
        %v1153 = vld [vmem:[%s613 + $0x110] sm:$0xff]
        %v1154 = vld [vmem:[%s613 + $0x118] sm:$0xff]
        %v1155 = vld [vmem:[%s613 + $0x120] sm:$0xff]
        %v1156 = vld [vmem:[%s613 + $0x128] sm:$0xff]
        %v1157 = vld [vmem:[%s613 + $0x130] sm:$0xff]
        %v1158 = vld [vmem:[%s613 + $0x138] sm:$0xff]
        %v1159 = vld [vmem:[%s613 + $0x140] sm:$0xff]
        %v1160 = vld [vmem:[%s613 + $0x148] sm:$0xff]
        %v1161 = vld [vmem:[%s613 + $0x150] sm:$0xff]
        %v1162 = vld [vmem:[%s613 + $0x158] sm:$0xff]
        %v1163 = vld [vmem:[%s613 + $0x160] sm:$0xff]
        %v1164 = vld [vmem:[%s613 + $0x168] sm:$0xff]
        %v1165 = vld [vmem:[%s613 + $0x170] sm:$0xff]
        %v1166 = vld [vmem:[%s613 + $0x178] sm:$0xff]
        %v1167 = vld [vmem:[%s613 + $0x180] sm:$0xff]
        %v1168 = vld [vmem:[%s613 + $0x188] sm:$0xff]
        %v1169 = vld [vmem:[%s613 + $0x190] sm:$0xff]
        %v1170 = vld [vmem:[%s613 + $0x198] sm:$0xff]
        %v1171 = vld [vmem:[%s613 + $0x1a0] sm:$0xff]
        %v1172 = vld [vmem:[%s613 + $0x1a8] sm:$0xff]
        %v1173 = vld [vmem:[%s613 + $0x1b0] sm:$0xff]
        %v1174 = vld [vmem:[%s613 + $0x1b8] sm:$0xff]
        %v1175 = vld [vmem:[%s613 + $0x1c0] sm:$0xff]
        %v1176 = vld [vmem:[%s613 + $0x1c8] sm:$0xff]
        %v1177 = vld [vmem:[%s613 + $0x1d0] sm:$0xff]
        %v1178 = vld [vmem:[%s613 + $0x1d8] sm:$0xff]
        %v1179 = vld [vmem:[%s613 + $0x1e0] sm:$0xff]
        %v1180 = vld [vmem:[%s613 + $0x1e8] sm:$0xff]
        %v1181 = vld [vmem:[%s613 + $0x1f0] sm:$0xff]
        %v1182 = vld [vmem:[%s613 + $0x1f8] sm:$0xff]
        %1183 = vmatpush.msra.mxu0 %v1134
        %1184 = vmatpush.msra.mxu0 %v1133
        %1185 = vmatpush.msra.mxu0 %v1132
        %1186 = vmatpush.msra.mxu0 %v1131
        %1187 = vmatpush.msra.mxu0 %v1130
        %1188 = vmatpush.msra.mxu0 %v1129
        %1189 = vmatpush.msra.mxu0 %v1128
        %1190 = vmatpush.msra.mxu0 %v1127
        %1191 = vmatpush.msra.mxu0 %v1126
        %1192 = vmatpush.msra.mxu0 %v1125
        %1193 = vmatpush.msra.mxu0 %v1124
        %1194 = vmatpush.msra.mxu0 %v1123
        %1195 = vmatpush.msra.mxu0 %v1122
        %1196 = vmatpush.msra.mxu0 %v1121
        %1197 = vmatpush.msra.mxu0 %v1120
        %1198 = vmatpush.msra.mxu0 %v1119
        %1199 = vmatmul.f32.gmra.mxu0 %v767
        %v1200 = vpop.f32.mrf.mxu0
        %v1201 = vadd.f32 0.0, %v1200
        %1202 = vmatmul.f32.gmra.mxu0 %v771
        %v1203 = vpop.f32.mrf.mxu0
        %v1204 = vadd.f32 0.0, %v1203
        %1205 = vmatmul.f32.gmra.mxu0 %v775
        %v1206 = vpop.f32.mrf.mxu0
        %v1207 = vadd.f32 0.0, %v1206
        %1208 = vmatmul.f32.gmra.mxu0 %v779
        %v1209 = vpop.f32.mrf.mxu0
        %v1210 = vadd.f32 0.0, %v1209
        %1211 = vmatmul.f32.gmra.mxu0 %v783
        %v1212 = vpop.f32.mrf.mxu0
        %v1213 = vadd.f32 0.0, %v1212
        %1214 = vmatmul.f32.gmra.mxu0 %v787
        %v1215 = vpop.f32.mrf.mxu0
        %v1216 = vadd.f32 0.0, %v1215
        %1217 = vmatmul.f32.gmra.mxu0 %v791
        %v1218 = vpop.f32.mrf.mxu0
        %v1219 = vadd.f32 0.0, %v1218
        %1220 = vmatmul.f32.gmra.mxu0 %v795
        %v1221 = vpop.f32.mrf.mxu0
        %v1222 = vadd.f32 0.0, %v1221
        %1223 = vmatmul.f32.gmra.mxu0 %v799
        %v1224 = vpop.f32.mrf.mxu0
        %v1225 = vadd.f32 0.0, %v1224
        %1226 = vmatmul.f32.gmra.mxu0 %v803
        %v1227 = vpop.f32.mrf.mxu0
        %v1228 = vadd.f32 0.0, %v1227
        %1229 = vmatmul.f32.gmra.mxu0 %v807
        %v1230 = vpop.f32.mrf.mxu0
        %v1231 = vadd.f32 0.0, %v1230
        %1232 = vmatmul.f32.gmra.mxu0 %v811
        %v1233 = vpop.f32.mrf.mxu0
        %v1234 = vadd.f32 0.0, %v1233
        %1235 = vmatmul.f32.gmra.mxu0 %v815
        %v1236 = vpop.f32.mrf.mxu0
        %v1237 = vadd.f32 0.0, %v1236
        %1238 = vmatmul.f32.gmra.mxu0 %v819
        %v1239 = vpop.f32.mrf.mxu0
        %v1240 = vadd.f32 0.0, %v1239
        %1241 = vmatmul.f32.gmra.mxu0 %v823
        %v1242 = vpop.f32.mrf.mxu0
        %v1243 = vadd.f32 0.0, %v1242
        %1244 = vmatmul.f32.gmra.mxu0 %v827
        %v1245 = vpop.f32.mrf.mxu0
        %v1246 = vadd.f32 0.0, %v1245
        %1247 = vmatmul.f32.gmra.mxu0 %v831
        %v1248 = vpop.f32.mrf.mxu0
        %v1249 = vadd.f32 0.0, %v1248
        %1250 = vmatmul.f32.gmra.mxu0 %v835
        %v1251 = vpop.f32.mrf.mxu0
        %v1252 = vadd.f32 0.0, %v1251
        %1253 = vmatmul.f32.gmra.mxu0 %v839
        %v1254 = vpop.f32.mrf.mxu0
        %v1255 = vadd.f32 0.0, %v1254
        %1256 = vmatmul.f32.gmra.mxu0 %v843
        %v1257 = vpop.f32.mrf.mxu0
        %v1258 = vadd.f32 0.0, %v1257
        %1259 = vmatmul.f32.gmra.mxu0 %v847
        %v1260 = vpop.f32.mrf.mxu0
        %v1261 = vadd.f32 0.0, %v1260
        %1262 = vmatmul.f32.gmra.mxu0 %v851
        %v1263 = vpop.f32.mrf.mxu0
        %v1264 = vadd.f32 0.0, %v1263
        %1265 = vmatmul.f32.gmra.mxu0 %v855
        %v1266 = vpop.f32.mrf.mxu0
        %v1267 = vadd.f32 0.0, %v1266
        %1268 = vmatmul.f32.gmra.mxu0 %v859
        %v1269 = vpop.f32.mrf.mxu0
        %v1270 = vadd.f32 0.0, %v1269
        %1271 = vmatmul.f32.gmra.mxu0 %v863
        %v1272 = vpop.f32.mrf.mxu0
        %v1273 = vadd.f32 0.0, %v1272
        %1274 = vmatmul.f32.gmra.mxu0 %v867
        %v1275 = vpop.f32.mrf.mxu0
        %v1276 = vadd.f32 0.0, %v1275
        %1277 = vmatmul.f32.gmra.mxu0 %v871
        %v1278 = vpop.f32.mrf.mxu0
        %v1279 = vadd.f32 0.0, %v1278
        %1280 = vmatmul.f32.gmra.mxu0 %v875
        %v1281 = vpop.f32.mrf.mxu0
        %v1282 = vadd.f32 0.0, %v1281
        %1283 = vmatmul.f32.gmra.mxu0 %v879
        %v1284 = vpop.f32.mrf.mxu0
        %v1285 = vadd.f32 0.0, %v1284
        %1286 = vmatmul.f32.gmra.mxu0 %v883
        %v1287 = vpop.f32.mrf.mxu0
        %v1288 = vadd.f32 0.0, %v1287
        %1289 = vmatmul.f32.gmra.mxu0 %v887
        %v1290 = vpop.f32.mrf.mxu0
        %v1291 = vadd.f32 0.0, %v1290
        %1292 = vmatmul.f32.gmra.mxu0 %v891
        %v1293 = vpop.f32.mrf.mxu0
        %v1294 = vadd.f32 0.0, %v1293
        %1295 = vdwg.mxu0
        %1296 = vmatpush.msra.mxu0 %v1150
        %1297 = vmatpush.msra.mxu0 %v1149
        %1298 = vmatpush.msra.mxu0 %v1148
        %1299 = vmatpush.msra.mxu0 %v1147
        %1300 = vmatpush.msra.mxu0 %v1146
        %1301 = vmatpush.msra.mxu0 %v1145
        %1302 = vmatpush.msra.mxu0 %v1144
        %1303 = vmatpush.msra.mxu0 %v1143
        %1304 = vmatpush.msra.mxu0 %v1142
        %1305 = vmatpush.msra.mxu0 %v1141
        %1306 = vmatpush.msra.mxu0 %v1140
        %1307 = vmatpush.msra.mxu0 %v1139
        %1308 = vmatpush.msra.mxu0 %v1138
        %1309 = vmatpush.msra.mxu0 %v1137
        %1310 = vmatpush.msra.mxu0 %v1136
        %1311 = vmatpush.msra.mxu0 %v1135
        %1312 = vmatmul.f32.gmra.mxu0 %v768
        %v1313 = vpop.f32.mrf.mxu0
        %v1314 = vadd.f32 %v1201, %v1313
        %1315 = vmatmul.f32.gmra.mxu0 %v772
        %v1316 = vpop.f32.mrf.mxu0
        %v1317 = vadd.f32 %v1204, %v1316
        %1318 = vmatmul.f32.gmra.mxu0 %v776
        %v1319 = vpop.f32.mrf.mxu0
        %v1320 = vadd.f32 %v1207, %v1319
        %1321 = vmatmul.f32.gmra.mxu0 %v780
        %v1322 = vpop.f32.mrf.mxu0
        %v1323 = vadd.f32 %v1210, %v1322
        %1324 = vmatmul.f32.gmra.mxu0 %v784
        %v1325 = vpop.f32.mrf.mxu0
        %v1326 = vadd.f32 %v1213, %v1325
        %1327 = vmatmul.f32.gmra.mxu0 %v788
        %v1328 = vpop.f32.mrf.mxu0
        %v1329 = vadd.f32 %v1216, %v1328
        %1330 = vmatmul.f32.gmra.mxu0 %v792
        %v1331 = vpop.f32.mrf.mxu0
        %v1332 = vadd.f32 %v1219, %v1331
        %1333 = vmatmul.f32.gmra.mxu0 %v796
        %v1334 = vpop.f32.mrf.mxu0
        %v1335 = vadd.f32 %v1222, %v1334
        %1336 = vmatmul.f32.gmra.mxu0 %v800
        %v1337 = vpop.f32.mrf.mxu0
        %v1338 = vadd.f32 %v1225, %v1337
        %1339 = vmatmul.f32.gmra.mxu0 %v804
        %v1340 = vpop.f32.mrf.mxu0
        %v1341 = vadd.f32 %v1228, %v1340
        %1342 = vmatmul.f32.gmra.mxu0 %v808
        %v1343 = vpop.f32.mrf.mxu0
        %v1344 = vadd.f32 %v1231, %v1343
        %1345 = vmatmul.f32.gmra.mxu0 %v812
        %v1346 = vpop.f32.mrf.mxu0
        %v1347 = vadd.f32 %v1234, %v1346
        %1348 = vmatmul.f32.gmra.mxu0 %v816
        %v1349 = vpop.f32.mrf.mxu0
        %v1350 = vadd.f32 %v1237, %v1349
        %1351 = vmatmul.f32.gmra.mxu0 %v820
        %v1352 = vpop.f32.mrf.mxu0
        %v1353 = vadd.f32 %v1240, %v1352
        %1354 = vmatmul.f32.gmra.mxu0 %v824
        %v1355 = vpop.f32.mrf.mxu0
        %v1356 = vadd.f32 %v1243, %v1355
        %1357 = vmatmul.f32.gmra.mxu0 %v828
        %v1358 = vpop.f32.mrf.mxu0
        %v1359 = vadd.f32 %v1246, %v1358
        %1360 = vmatmul.f32.gmra.mxu0 %v832
        %v1361 = vpop.f32.mrf.mxu0
        %v1362 = vadd.f32 %v1249, %v1361
        %1363 = vmatmul.f32.gmra.mxu0 %v836
        %v1364 = vpop.f32.mrf.mxu0
        %v1365 = vadd.f32 %v1252, %v1364
        %1366 = vmatmul.f32.gmra.mxu0 %v840
        %v1367 = vpop.f32.mrf.mxu0
        %v1368 = vadd.f32 %v1255, %v1367
        %1369 = vmatmul.f32.gmra.mxu0 %v844
        %v1370 = vpop.f32.mrf.mxu0
        %v1371 = vadd.f32 %v1258, %v1370
        %1372 = vmatmul.f32.gmra.mxu0 %v848
        %v1373 = vpop.f32.mrf.mxu0
        %v1374 = vadd.f32 %v1261, %v1373
        %1375 = vmatmul.f32.gmra.mxu0 %v852
        %v1376 = vpop.f32.mrf.mxu0
        %v1377 = vadd.f32 %v1264, %v1376
        %1378 = vmatmul.f32.gmra.mxu0 %v856
        %v1379 = vpop.f32.mrf.mxu0
        %v1380 = vadd.f32 %v1267, %v1379
        %1381 = vmatmul.f32.gmra.mxu0 %v860
        %v1382 = vpop.f32.mrf.mxu0
        %v1383 = vadd.f32 %v1270, %v1382
        %1384 = vmatmul.f32.gmra.mxu0 %v864
        %v1385 = vpop.f32.mrf.mxu0
        %v1386 = vadd.f32 %v1273, %v1385
        %1387 = vmatmul.f32.gmra.mxu0 %v868
        %v1388 = vpop.f32.mrf.mxu0
        %v1389 = vadd.f32 %v1276, %v1388
        %1390 = vmatmul.f32.gmra.mxu0 %v872
        %v1391 = vpop.f32.mrf.mxu0
        %v1392 = vadd.f32 %v1279, %v1391
        %1393 = vmatmul.f32.gmra.mxu0 %v876
        %v1394 = vpop.f32.mrf.mxu0
        %v1395 = vadd.f32 %v1282, %v1394
        %1396 = vmatmul.f32.gmra.mxu0 %v880
        %v1397 = vpop.f32.mrf.mxu0
        %v1398 = vadd.f32 %v1285, %v1397
        %1399 = vmatmul.f32.gmra.mxu0 %v884
        %v1400 = vpop.f32.mrf.mxu0
        %v1401 = vadd.f32 %v1288, %v1400
        %1402 = vmatmul.f32.gmra.mxu0 %v888
        %v1403 = vpop.f32.mrf.mxu0
        %v1404 = vadd.f32 %v1291, %v1403
        %1405 = vmatmul.f32.gmra.mxu0 %v892
        %v1406 = vpop.f32.mrf.mxu0
        %v1407 = vadd.f32 %v1294, %v1406
        %1408 = vdwg.mxu0
        %1409 = vmatpush.msra.mxu0 %v1166
        %1410 = vmatpush.msra.mxu0 %v1165
        %1411 = vmatpush.msra.mxu0 %v1164
        %1412 = vmatpush.msra.mxu0 %v1163
        %1413 = vmatpush.msra.mxu0 %v1162
        %1414 = vmatpush.msra.mxu0 %v1161
        %1415 = vmatpush.msra.mxu0 %v1160
        %1416 = vmatpush.msra.mxu0 %v1159
        %1417 = vmatpush.msra.mxu0 %v1158
        %1418 = vmatpush.msra.mxu0 %v1157
        %1419 = vmatpush.msra.mxu0 %v1156
        %1420 = vmatpush.msra.mxu0 %v1155
        %1421 = vmatpush.msra.mxu0 %v1154
        %1422 = vmatpush.msra.mxu0 %v1153
        %1423 = vmatpush.msra.mxu0 %v1152
        %1424 = vmatpush.msra.mxu0 %v1151
        %1425 = vmatmul.f32.gmra.mxu0 %v769
        %v1426 = vpop.f32.mrf.mxu0
        %v1427 = vadd.f32 %v1314, %v1426
        %1428 = vmatmul.f32.gmra.mxu0 %v773
        %v1429 = vpop.f32.mrf.mxu0
        %v1430 = vadd.f32 %v1317, %v1429
        %1431 = vmatmul.f32.gmra.mxu0 %v777
        %v1432 = vpop.f32.mrf.mxu0
        %v1433 = vadd.f32 %v1320, %v1432
        %1434 = vmatmul.f32.gmra.mxu0 %v781
        %v1435 = vpop.f32.mrf.mxu0
        %v1436 = vadd.f32 %v1323, %v1435
        %1437 = vmatmul.f32.gmra.mxu0 %v785
        %v1438 = vpop.f32.mrf.mxu0
        %v1439 = vadd.f32 %v1326, %v1438
        %1440 = vmatmul.f32.gmra.mxu0 %v789
        %v1441 = vpop.f32.mrf.mxu0
        %v1442 = vadd.f32 %v1329, %v1441
        %1443 = vmatmul.f32.gmra.mxu0 %v793
        %v1444 = vpop.f32.mrf.mxu0
        %v1445 = vadd.f32 %v1332, %v1444
        %1446 = vmatmul.f32.gmra.mxu0 %v797
        %v1447 = vpop.f32.mrf.mxu0
        %v1448 = vadd.f32 %v1335, %v1447
        %1449 = vmatmul.f32.gmra.mxu0 %v801
        %v1450 = vpop.f32.mrf.mxu0
        %v1451 = vadd.f32 %v1338, %v1450
        %1452 = vmatmul.f32.gmra.mxu0 %v805
        %v1453 = vpop.f32.mrf.mxu0
        %v1454 = vadd.f32 %v1341, %v1453
        %1455 = vmatmul.f32.gmra.mxu0 %v809
        %v1456 = vpop.f32.mrf.mxu0
        %v1457 = vadd.f32 %v1344, %v1456
        %1458 = vmatmul.f32.gmra.mxu0 %v813
        %v1459 = vpop.f32.mrf.mxu0
        %v1460 = vadd.f32 %v1347, %v1459
        %1461 = vmatmul.f32.gmra.mxu0 %v817
        %v1462 = vpop.f32.mrf.mxu0
        %v1463 = vadd.f32 %v1350, %v1462
        %1464 = vmatmul.f32.gmra.mxu0 %v821
        %v1465 = vpop.f32.mrf.mxu0
        %v1466 = vadd.f32 %v1353, %v1465
        %1467 = vmatmul.f32.gmra.mxu0 %v825
        %v1468 = vpop.f32.mrf.mxu0
        %v1469 = vadd.f32 %v1356, %v1468
        %1470 = vmatmul.f32.gmra.mxu0 %v829
        %v1471 = vpop.f32.mrf.mxu0
        %v1472 = vadd.f32 %v1359, %v1471
        %1473 = vmatmul.f32.gmra.mxu0 %v833
        %v1474 = vpop.f32.mrf.mxu0
        %v1475 = vadd.f32 %v1362, %v1474
        %1476 = vmatmul.f32.gmra.mxu0 %v837
        %v1477 = vpop.f32.mrf.mxu0
        %v1478 = vadd.f32 %v1365, %v1477
        %1479 = vmatmul.f32.gmra.mxu0 %v841
        %v1480 = vpop.f32.mrf.mxu0
        %v1481 = vadd.f32 %v1368, %v1480
        %1482 = vmatmul.f32.gmra.mxu0 %v845
        %v1483 = vpop.f32.mrf.mxu0
        %v1484 = vadd.f32 %v1371, %v1483
        %1485 = vmatmul.f32.gmra.mxu0 %v849
        %v1486 = vpop.f32.mrf.mxu0
        %v1487 = vadd.f32 %v1374, %v1486
        %1488 = vmatmul.f32.gmra.mxu0 %v853
        %v1489 = vpop.f32.mrf.mxu0
        %v1490 = vadd.f32 %v1377, %v1489
        %1491 = vmatmul.f32.gmra.mxu0 %v857
        %v1492 = vpop.f32.mrf.mxu0
        %v1493 = vadd.f32 %v1380, %v1492
        %1494 = vmatmul.f32.gmra.mxu0 %v861
        %v1495 = vpop.f32.mrf.mxu0
        %v1496 = vadd.f32 %v1383, %v1495
        %1497 = vmatmul.f32.gmra.mxu0 %v865
        %v1498 = vpop.f32.mrf.mxu0
        %v1499 = vadd.f32 %v1386, %v1498
        %1500 = vmatmul.f32.gmra.mxu0 %v869
        %v1501 = vpop.f32.mrf.mxu0
        %v1502 = vadd.f32 %v1389, %v1501
        %1503 = vmatmul.f32.gmra.mxu0 %v873
        %v1504 = vpop.f32.mrf.mxu0
        %v1505 = vadd.f32 %v1392, %v1504
        %1506 = vmatmul.f32.gmra.mxu0 %v877
        %v1507 = vpop.f32.mrf.mxu0
        %v1508 = vadd.f32 %v1395, %v1507
        %1509 = vmatmul.f32.gmra.mxu0 %v881
        %v1510 = vpop.f32.mrf.mxu0
        %v1511 = vadd.f32 %v1398, %v1510
        %1512 = vmatmul.f32.gmra.mxu0 %v885
        %v1513 = vpop.f32.mrf.mxu0
        %v1514 = vadd.f32 %v1401, %v1513
        %1515 = vmatmul.f32.gmra.mxu0 %v889
        %v1516 = vpop.f32.mrf.mxu0
        %v1517 = vadd.f32 %v1404, %v1516
        %1518 = vmatmul.f32.gmra.mxu0 %v893
        %v1519 = vpop.f32.mrf.mxu0
        %v1520 = vadd.f32 %v1407, %v1519
        %1521 = vdwg.mxu0
        %1522 = vmatpush.msra.mxu0 %v1182
        %1523 = vmatpush.msra.mxu0 %v1181
        %1524 = vmatpush.msra.mxu0 %v1180
        %1525 = vmatpush.msra.mxu0 %v1179
        %1526 = vmatpush.msra.mxu0 %v1178
        %1527 = vmatpush.msra.mxu0 %v1177
        %1528 = vmatpush.msra.mxu0 %v1176
        %1529 = vmatpush.msra.mxu0 %v1175
        %1530 = vmatpush.msra.mxu0 %v1174
        %1531 = vmatpush.msra.mxu0 %v1173
        %1532 = vmatpush.msra.mxu0 %v1172
        %1533 = vmatpush.msra.mxu0 %v1171
        %1534 = vmatpush.msra.mxu0 %v1170
        %1535 = vmatpush.msra.mxu0 %v1169
        %1536 = vmatpush.msra.mxu0 %v1168
        %1537 = vmatpush.msra.mxu0 %v1167
        %1538 = vmatmul.f32.gmra.mxu0 %v770
        %v1539 = vpop.f32.mrf.mxu0
        %v1540 = vadd.f32 %v1427, %v1539
        %1541 = vmatmul.f32.gmra.mxu0 %v774
        %v1542 = vpop.f32.mrf.mxu0
        %v1543 = vadd.f32 %v1430, %v1542
        %1544 = vmatmul.f32.gmra.mxu0 %v778
        %v1545 = vpop.f32.mrf.mxu0
        %v1546 = vadd.f32 %v1433, %v1545
        %1547 = vmatmul.f32.gmra.mxu0 %v782
        %v1548 = vpop.f32.mrf.mxu0
        %v1549 = vadd.f32 %v1436, %v1548
        %1550 = vmatmul.f32.gmra.mxu0 %v786
        %v1551 = vpop.f32.mrf.mxu0
        %v1552 = vadd.f32 %v1439, %v1551
        %1553 = vmatmul.f32.gmra.mxu0 %v790
        %v1554 = vpop.f32.mrf.mxu0
        %v1555 = vadd.f32 %v1442, %v1554
        %1556 = vmatmul.f32.gmra.mxu0 %v794
        %v1557 = vpop.f32.mrf.mxu0
        %v1558 = vadd.f32 %v1445, %v1557
        %1559 = vmatmul.f32.gmra.mxu0 %v798
        %v1560 = vpop.f32.mrf.mxu0
        %v1561 = vadd.f32 %v1448, %v1560
        %1562 = vmatmul.f32.gmra.mxu0 %v802
        %v1563 = vpop.f32.mrf.mxu0
        %v1564 = vadd.f32 %v1451, %v1563
        %1565 = vmatmul.f32.gmra.mxu0 %v806
        %v1566 = vpop.f32.mrf.mxu0
        %v1567 = vadd.f32 %v1454, %v1566
        %1568 = vmatmul.f32.gmra.mxu0 %v810
        %v1569 = vpop.f32.mrf.mxu0
        %v1570 = vadd.f32 %v1457, %v1569
        %1571 = vmatmul.f32.gmra.mxu0 %v814
        %v1572 = vpop.f32.mrf.mxu0
        %v1573 = vadd.f32 %v1460, %v1572
        %1574 = vmatmul.f32.gmra.mxu0 %v818
        %v1575 = vpop.f32.mrf.mxu0
        %v1576 = vadd.f32 %v1463, %v1575
        %1577 = vmatmul.f32.gmra.mxu0 %v822
        %v1578 = vpop.f32.mrf.mxu0
        %v1579 = vadd.f32 %v1466, %v1578
        %1580 = vmatmul.f32.gmra.mxu0 %v826
        %v1581 = vpop.f32.mrf.mxu0
        %v1582 = vadd.f32 %v1469, %v1581
        %1583 = vmatmul.f32.gmra.mxu0 %v830
        %v1584 = vpop.f32.mrf.mxu0
        %v1585 = vadd.f32 %v1472, %v1584
        %1586 = vmatmul.f32.gmra.mxu0 %v834
        %v1587 = vpop.f32.mrf.mxu0
        %v1588 = vadd.f32 %v1475, %v1587
        %1589 = vmatmul.f32.gmra.mxu0 %v838
        %v1590 = vpop.f32.mrf.mxu0
        %v1591 = vadd.f32 %v1478, %v1590
        %1592 = vmatmul.f32.gmra.mxu0 %v842
        %v1593 = vpop.f32.mrf.mxu0
        %v1594 = vadd.f32 %v1481, %v1593
        %1595 = vmatmul.f32.gmra.mxu0 %v846
        %v1596 = vpop.f32.mrf.mxu0
        %v1597 = vadd.f32 %v1484, %v1596
        %1598 = vmatmul.f32.gmra.mxu0 %v850
        %v1599 = vpop.f32.mrf.mxu0
        %v1600 = vadd.f32 %v1487, %v1599
        %1601 = vmatmul.f32.gmra.mxu0 %v854
        %v1602 = vpop.f32.mrf.mxu0
        %v1603 = vadd.f32 %v1490, %v1602
        %1604 = vmatmul.f32.gmra.mxu0 %v858
        %v1605 = vpop.f32.mrf.mxu0
        %v1606 = vadd.f32 %v1493, %v1605
        %1607 = vmatmul.f32.gmra.mxu0 %v862
        %v1608 = vpop.f32.mrf.mxu0
        %v1609 = vadd.f32 %v1496, %v1608
        %1610 = vmatmul.f32.gmra.mxu0 %v866
        %v1611 = vpop.f32.mrf.mxu0
        %v1612 = vadd.f32 %v1499, %v1611
        %1613 = vmatmul.f32.gmra.mxu0 %v870
        %v1614 = vpop.f32.mrf.mxu0
        %v1615 = vadd.f32 %v1502, %v1614
        %1616 = vmatmul.f32.gmra.mxu0 %v874
        %v1617 = vpop.f32.mrf.mxu0
        %v1618 = vadd.f32 %v1505, %v1617
        %1619 = vmatmul.f32.gmra.mxu0 %v878
        %v1620 = vpop.f32.mrf.mxu0
        %v1621 = vadd.f32 %v1508, %v1620
        %1622 = vmatmul.f32.gmra.mxu0 %v882
        %v1623 = vpop.f32.mrf.mxu0
        %v1624 = vadd.f32 %v1511, %v1623
        %1625 = vmatmul.f32.gmra.mxu0 %v886
        %v1626 = vpop.f32.mrf.mxu0
        %v1627 = vadd.f32 %v1514, %v1626
        %1628 = vmatmul.f32.gmra.mxu0 %v890
        %v1629 = vpop.f32.mrf.mxu0
        %v1630 = vadd.f32 %v1517, %v1629
        %1631 = vmatmul.f32.gmra.mxu0 %v894
        %v1632 = vpop.f32.mrf.mxu0
        %v1633 = vadd.f32 %v1520, %v1632
        %1634 = vdwg.mxu0
        %v1635 = vadd.f32 %v1087, %v1540
        %v1636 = vadd.f32 %v1088, %v1543
        %v1637 = vadd.f32 %v1089, %v1546
        %v1638 = vadd.f32 %v1090, %v1549
        %v1639 = vadd.f32 %v1091, %v1552
        %v1640 = vadd.f32 %v1092, %v1555
        %v1641 = vadd.f32 %v1093, %v1558
        %v1642 = vadd.f32 %v1094, %v1561
        %v1643 = vadd.f32 %v1095, %v1564
        %v1644 = vadd.f32 %v1096, %v1567
        %v1645 = vadd.f32 %v1097, %v1570
        %v1646 = vadd.f32 %v1098, %v1573
        %v1647 = vadd.f32 %v1099, %v1576
        %v1648 = vadd.f32 %v1100, %v1579
        %v1649 = vadd.f32 %v1101, %v1582
        %v1650 = vadd.f32 %v1102, %v1585
        %v1651 = vadd.f32 %v1103, %v1588
        %v1652 = vadd.f32 %v1104, %v1591
        %v1653 = vadd.f32 %v1105, %v1594
        %v1654 = vadd.f32 %v1106, %v1597
        %v1655 = vadd.f32 %v1107, %v1600
        %v1656 = vadd.f32 %v1108, %v1603
        %v1657 = vadd.f32 %v1109, %v1606
        %v1658 = vadd.f32 %v1110, %v1609
        %v1659 = vadd.f32 %v1111, %v1612
        %v1660 = vadd.f32 %v1112, %v1615
        %v1661 = vadd.f32 %v1113, %v1618
        %v1662 = vadd.f32 %v1114, %v1621
        %v1663 = vadd.f32 %v1115, %v1624
        %v1664 = vadd.f32 %v1116, %v1627
        %v1665 = vadd.f32 %v1117, %v1630
        %v1666 = vadd.f32 %v1118, %v1633
        %vm1667 = vcmask 130048
        %1668 = vst.msk [vmem:[#allocation2] sm:$0xff] %vm1667, %v1635
        %1669 = vst.msk [vmem:[#allocation2 + $0x8] sm:$0xff] %vm1667, %v1636
        %1670 = vst.msk [vmem:[#allocation2 + $0x10] sm:$0xff] %vm1667, %v1637
        %1671 = vst.msk [vmem:[#allocation2 + $0x18] sm:$0xff] %vm1667, %v1638
        %1672 = vst.msk [vmem:[#allocation2 + $0x20] sm:$0xff] %vm1667, %v1639
        %1673 = vst.msk [vmem:[#allocation2 + $0x28] sm:$0xff] %vm1667, %v1640
        %1674 = vst.msk [vmem:[#allocation2 + $0x30] sm:$0xff] %vm1667, %v1641
        %1675 = vst.msk [vmem:[#allocation2 + $0x38] sm:$0xff] %vm1667, %v1642
        %1676 = vst.msk [vmem:[#allocation2 + $0x40] sm:$0xff] %vm1667, %v1643
        %1677 = vst.msk [vmem:[#allocation2 + $0x48] sm:$0xff] %vm1667, %v1644
        %1678 = vst.msk [vmem:[#allocation2 + $0x50] sm:$0xff] %vm1667, %v1645
        %1679 = vst.msk [vmem:[#allocation2 + $0x58] sm:$0xff] %vm1667, %v1646
        %1680 = vst.msk [vmem:[#allocation2 + $0x60] sm:$0xff] %vm1667, %v1647
        %1681 = vst.msk [vmem:[#allocation2 + $0x68] sm:$0xff] %vm1667, %v1648
        %1682 = vst.msk [vmem:[#allocation2 + $0x70] sm:$0xff] %vm1667, %v1649
        %1683 = vst.msk [vmem:[#allocation2 + $0x78] sm:$0xff] %vm1667, %v1650
        %1684 = vst.msk [vmem:[#allocation2 + $0x80] sm:$0xff] %vm1667, %v1651
        %1685 = vst.msk [vmem:[#allocation2 + $0x88] sm:$0xff] %vm1667, %v1652
        %1686 = vst.msk [vmem:[#allocation2 + $0x90] sm:$0xff] %vm1667, %v1653
        %1687 = vst.msk [vmem:[#allocation2 + $0x98] sm:$0xff] %vm1667, %v1654
        %1688 = vst.msk [vmem:[#allocation2 + $0xa0] sm:$0xff] %vm1667, %v1655
        %1689 = vst.msk [vmem:[#allocation2 + $0xa8] sm:$0xff] %vm1667, %v1656
        %1690 = vst.msk [vmem:[#allocation2 + $0xb0] sm:$0xff] %vm1667, %v1657
        %1691 = vst.msk [vmem:[#allocation2 + $0xb8] sm:$0xff] %vm1667, %v1658
        %1692 = vst.msk [vmem:[#allocation2 + $0xc0] sm:$0xff] %vm1667, %v1659
        %1693 = vst.msk [vmem:[#allocation2 + $0xc8] sm:$0xff] %vm1667, %v1660
        %1694 = vst.msk [vmem:[#allocation2 + $0xd0] sm:$0xff] %vm1667, %v1661
        %1695 = vst.msk [vmem:[#allocation2 + $0xd8] sm:$0xff] %vm1667, %v1662
        %1696 = vst.msk [vmem:[#allocation2 + $0xe0] sm:$0xff] %vm1667, %v1663
        %1697 = vst.msk [vmem:[#allocation2 + $0xe8] sm:$0xff] %vm1667, %v1664
        %1698 = vst.msk [vmem:[#allocation2 + $0xf0] sm:$0xff] %vm1667, %v1665
        %1699 = vst.msk [vmem:[#allocation2 + $0xf8] sm:$0xff] %vm1667, %v1666
        %v1700 = vld [vmem:[#allocation3] sm:$0xff]
        %v1701 = vld [vmem:[#allocation3 + $0x8] sm:$0xff]
        %v1702 = vld [vmem:[#allocation3 + $0x10] sm:$0xff]
        %v1703 = vld [vmem:[#allocation3 + $0x18] sm:$0xff]
        %v1704 = vld [vmem:[#allocation3 + $0x20] sm:$0xff]
        %v1705 = vld [vmem:[#allocation3 + $0x28] sm:$0xff]
        %v1706 = vld [vmem:[#allocation3 + $0x30] sm:$0xff]
        %v1707 = vld [vmem:[#allocation3 + $0x38] sm:$0xff]
        %v1708 = vld [vmem:[#allocation3 + $0x40] sm:$0xff]
        %v1709 = vld [vmem:[#allocation3 + $0x48] sm:$0xff]
        %v1710 = vld [vmem:[#allocation3 + $0x50] sm:$0xff]
        %v1711 = vld [vmem:[#allocation3 + $0x58] sm:$0xff]
        %v1712 = vld [vmem:[#allocation3 + $0x60] sm:$0xff]
        %v1713 = vld [vmem:[#allocation3 + $0x68] sm:$0xff]
        %v1714 = vld [vmem:[#allocation3 + $0x70] sm:$0xff]
        %v1715 = vld [vmem:[#allocation3 + $0x78] sm:$0xff]
        %v1716 = vld [vmem:[#allocation3 + $0x80] sm:$0xff]
        %v1717 = vld [vmem:[#allocation3 + $0x88] sm:$0xff]
        %v1718 = vld [vmem:[#allocation3 + $0x90] sm:$0xff]
        %v1719 = vld [vmem:[#allocation3 + $0x98] sm:$0xff]
        %v1720 = vld [vmem:[#allocation3 + $0xa0] sm:$0xff]
        %v1721 = vld [vmem:[#allocation3 + $0xa8] sm:$0xff]
        %v1722 = vld [vmem:[#allocation3 + $0xb0] sm:$0xff]
        %v1723 = vld [vmem:[#allocation3 + $0xb8] sm:$0xff]
        %v1724 = vld [vmem:[#allocation3 + $0xc0] sm:$0xff]
        %v1725 = vld [vmem:[#allocation3 + $0xc8] sm:$0xff]
        %v1726 = vld [vmem:[#allocation3 + $0xd0] sm:$0xff]
        %v1727 = vld [vmem:[#allocation3 + $0xd8] sm:$0xff]
        %v1728 = vld [vmem:[#allocation3 + $0xe0] sm:$0xff]
        %v1729 = vld [vmem:[#allocation3 + $0xe8] sm:$0xff]
        %v1730 = vld [vmem:[#allocation3 + $0xf0] sm:$0xff]
        %v1731 = vld [vmem:[#allocation3 + $0xf8] sm:$0xff]
        %v1732 = vld [vmem:[%s619] sm:$0xff]
        %v1733 = vld [vmem:[%s619 + $0x8] sm:$0xff]
        %v1734 = vld [vmem:[%s619 + $0x10] sm:$0xff]
        %v1735 = vld [vmem:[%s619 + $0x18] sm:$0xff]
        %v1736 = vld [vmem:[%s619 + $0x20] sm:$0xff]
        %v1737 = vld [vmem:[%s619 + $0x28] sm:$0xff]
        %v1738 = vld [vmem:[%s619 + $0x30] sm:$0xff]
        %v1739 = vld [vmem:[%s619 + $0x38] sm:$0xff]
        %v1740 = vld [vmem:[%s619 + $0x40] sm:$0xff]
        %v1741 = vld [vmem:[%s619 + $0x48] sm:$0xff]
        %v1742 = vld [vmem:[%s619 + $0x50] sm:$0xff]
        %v1743 = vld [vmem:[%s619 + $0x58] sm:$0xff]
        %v1744 = vld [vmem:[%s619 + $0x60] sm:$0xff]
        %v1745 = vld [vmem:[%s619 + $0x68] sm:$0xff]
        %v1746 = vld [vmem:[%s619 + $0x70] sm:$0xff]
        %v1747 = vld [vmem:[%s619 + $0x78] sm:$0xff]
        %v1748 = vld [vmem:[%s619 + $0x80] sm:$0xff]
        %v1749 = vld [vmem:[%s619 + $0x88] sm:$0xff]
        %v1750 = vld [vmem:[%s619 + $0x90] sm:$0xff]
        %v1751 = vld [vmem:[%s619 + $0x98] sm:$0xff]
        %v1752 = vld [vmem:[%s619 + $0xa0] sm:$0xff]
        %v1753 = vld [vmem:[%s619 + $0xa8] sm:$0xff]
        %v1754 = vld [vmem:[%s619 + $0xb0] sm:$0xff]
        %v1755 = vld [vmem:[%s619 + $0xb8] sm:$0xff]
        %v1756 = vld [vmem:[%s619 + $0xc0] sm:$0xff]
        %v1757 = vld [vmem:[%s619 + $0xc8] sm:$0xff]
        %v1758 = vld [vmem:[%s619 + $0xd0] sm:$0xff]
        %v1759 = vld [vmem:[%s619 + $0xd8] sm:$0xff]
        %v1760 = vld [vmem:[%s619 + $0xe0] sm:$0xff]
        %v1761 = vld [vmem:[%s619 + $0xe8] sm:$0xff]
        %v1762 = vld [vmem:[%s619 + $0xf0] sm:$0xff]
        %v1763 = vld [vmem:[%s619 + $0xf8] sm:$0xff]
        %v1764 = vld [vmem:[%s619 + $0x100] sm:$0xff]
        %v1765 = vld [vmem:[%s619 + $0x108] sm:$0xff]
        %v1766 = vld [vmem:[%s619 + $0x110] sm:$0xff]
        %v1767 = vld [vmem:[%s619 + $0x118] sm:$0xff]
        %v1768 = vld [vmem:[%s619 + $0x120] sm:$0xff]
        %v1769 = vld [vmem:[%s619 + $0x128] sm:$0xff]
        %v1770 = vld [vmem:[%s619 + $0x130] sm:$0xff]
        %v1771 = vld [vmem:[%s619 + $0x138] sm:$0xff]
        %v1772 = vld [vmem:[%s619 + $0x140] sm:$0xff]
        %v1773 = vld [vmem:[%s619 + $0x148] sm:$0xff]
        %v1774 = vld [vmem:[%s619 + $0x150] sm:$0xff]
        %v1775 = vld [vmem:[%s619 + $0x158] sm:$0xff]
        %v1776 = vld [vmem:[%s619 + $0x160] sm:$0xff]
        %v1777 = vld [vmem:[%s619 + $0x168] sm:$0xff]
        %v1778 = vld [vmem:[%s619 + $0x170] sm:$0xff]
        %v1779 = vld [vmem:[%s619 + $0x178] sm:$0xff]
        %v1780 = vld [vmem:[%s619 + $0x180] sm:$0xff]
        %v1781 = vld [vmem:[%s619 + $0x188] sm:$0xff]
        %v1782 = vld [vmem:[%s619 + $0x190] sm:$0xff]
        %v1783 = vld [vmem:[%s619 + $0x198] sm:$0xff]
        %v1784 = vld [vmem:[%s619 + $0x1a0] sm:$0xff]
        %v1785 = vld [vmem:[%s619 + $0x1a8] sm:$0xff]
        %v1786 = vld [vmem:[%s619 + $0x1b0] sm:$0xff]
        %v1787 = vld [vmem:[%s619 + $0x1b8] sm:$0xff]
        %v1788 = vld [vmem:[%s619 + $0x1c0] sm:$0xff]
        %v1789 = vld [vmem:[%s619 + $0x1c8] sm:$0xff]
        %v1790 = vld [vmem:[%s619 + $0x1d0] sm:$0xff]
        %v1791 = vld [vmem:[%s619 + $0x1d8] sm:$0xff]
        %v1792 = vld [vmem:[%s619 + $0x1e0] sm:$0xff]
        %v1793 = vld [vmem:[%s619 + $0x1e8] sm:$0xff]
        %v1794 = vld [vmem:[%s619 + $0x1f0] sm:$0xff]
        %v1795 = vld [vmem:[%s619 + $0x1f8] sm:$0xff]
        %1796 = vmatpush.msra.mxu0 %v1747
        %1797 = vmatpush.msra.mxu0 %v1746
        %1798 = vmatpush.msra.mxu0 %v1745
        %1799 = vmatpush.msra.mxu0 %v1744
        %1800 = vmatpush.msra.mxu0 %v1743
        %1801 = vmatpush.msra.mxu0 %v1742
        %1802 = vmatpush.msra.mxu0 %v1741
        %1803 = vmatpush.msra.mxu0 %v1740
        %1804 = vmatpush.msra.mxu0 %v1739
        %1805 = vmatpush.msra.mxu0 %v1738
        %1806 = vmatpush.msra.mxu0 %v1737
        %1807 = vmatpush.msra.mxu0 %v1736
        %1808 = vmatpush.msra.mxu0 %v1735
        %1809 = vmatpush.msra.mxu0 %v1734
        %1810 = vmatpush.msra.mxu0 %v1733
        %1811 = vmatpush.msra.mxu0 %v1732
        %1812 = vmatmul.f32.gmra.mxu0 %v959
        %v1813 = vpop.f32.mrf.mxu0
        %v1814 = vadd.f32 0.0, %v1813
        %1815 = vmatmul.f32.gmra.mxu0 %v963
        %v1816 = vpop.f32.mrf.mxu0
        %v1817 = vadd.f32 0.0, %v1816
        %1818 = vmatmul.f32.gmra.mxu0 %v967
        %v1819 = vpop.f32.mrf.mxu0
        %v1820 = vadd.f32 0.0, %v1819
        %1821 = vmatmul.f32.gmra.mxu0 %v971
        %v1822 = vpop.f32.mrf.mxu0
        %v1823 = vadd.f32 0.0, %v1822
        %1824 = vmatmul.f32.gmra.mxu0 %v975
        %v1825 = vpop.f32.mrf.mxu0
        %v1826 = vadd.f32 0.0, %v1825
        %1827 = vmatmul.f32.gmra.mxu0 %v979
        %v1828 = vpop.f32.mrf.mxu0
        %v1829 = vadd.f32 0.0, %v1828
        %1830 = vmatmul.f32.gmra.mxu0 %v983
        %v1831 = vpop.f32.mrf.mxu0
        %v1832 = vadd.f32 0.0, %v1831
        %1833 = vmatmul.f32.gmra.mxu0 %v987
        %v1834 = vpop.f32.mrf.mxu0
        %v1835 = vadd.f32 0.0, %v1834
        %1836 = vmatmul.f32.gmra.mxu0 %v991
        %v1837 = vpop.f32.mrf.mxu0
        %v1838 = vadd.f32 0.0, %v1837
        %1839 = vmatmul.f32.gmra.mxu0 %v995
        %v1840 = vpop.f32.mrf.mxu0
        %v1841 = vadd.f32 0.0, %v1840
        %1842 = vmatmul.f32.gmra.mxu0 %v999
        %v1843 = vpop.f32.mrf.mxu0
        %v1844 = vadd.f32 0.0, %v1843
        %1845 = vmatmul.f32.gmra.mxu0 %v1003
        %v1846 = vpop.f32.mrf.mxu0
        %v1847 = vadd.f32 0.0, %v1846
        %1848 = vmatmul.f32.gmra.mxu0 %v1007
        %v1849 = vpop.f32.mrf.mxu0
        %v1850 = vadd.f32 0.0, %v1849
        %1851 = vmatmul.f32.gmra.mxu0 %v1011
        %v1852 = vpop.f32.mrf.mxu0
        %v1853 = vadd.f32 0.0, %v1852
        %1854 = vmatmul.f32.gmra.mxu0 %v1015
        %v1855 = vpop.f32.mrf.mxu0
        %v1856 = vadd.f32 0.0, %v1855
        %1857 = vmatmul.f32.gmra.mxu0 %v1019
        %v1858 = vpop.f32.mrf.mxu0
        %v1859 = vadd.f32 0.0, %v1858
        %1860 = vmatmul.f32.gmra.mxu0 %v1023
        %v1861 = vpop.f32.mrf.mxu0
        %v1862 = vadd.f32 0.0, %v1861
        %1863 = vmatmul.f32.gmra.mxu0 %v1027
        %v1864 = vpop.f32.mrf.mxu0
        %v1865 = vadd.f32 0.0, %v1864
        %1866 = vmatmul.f32.gmra.mxu0 %v1031
        %v1867 = vpop.f32.mrf.mxu0
        %v1868 = vadd.f32 0.0, %v1867
        %1869 = vmatmul.f32.gmra.mxu0 %v1035
        %v1870 = vpop.f32.mrf.mxu0
        %v1871 = vadd.f32 0.0, %v1870
        %1872 = vmatmul.f32.gmra.mxu0 %v1039
        %v1873 = vpop.f32.mrf.mxu0
        %v1874 = vadd.f32 0.0, %v1873
        %1875 = vmatmul.f32.gmra.mxu0 %v1043
        %v1876 = vpop.f32.mrf.mxu0
        %v1877 = vadd.f32 0.0, %v1876
        %1878 = vmatmul.f32.gmra.mxu0 %v1047
        %v1879 = vpop.f32.mrf.mxu0
        %v1880 = vadd.f32 0.0, %v1879
        %1881 = vmatmul.f32.gmra.mxu0 %v1051
        %v1882 = vpop.f32.mrf.mxu0
        %v1883 = vadd.f32 0.0, %v1882
        %1884 = vmatmul.f32.gmra.mxu0 %v1055
        %v1885 = vpop.f32.mrf.mxu0
        %v1886 = vadd.f32 0.0, %v1885
        %1887 = vmatmul.f32.gmra.mxu0 %v1059
        %v1888 = vpop.f32.mrf.mxu0
        %v1889 = vadd.f32 0.0, %v1888
        %1890 = vmatmul.f32.gmra.mxu0 %v1063
        %v1891 = vpop.f32.mrf.mxu0
        %v1892 = vadd.f32 0.0, %v1891
        %1893 = vmatmul.f32.gmra.mxu0 %v1067
        %v1894 = vpop.f32.mrf.mxu0
        %v1895 = vadd.f32 0.0, %v1894
        %1896 = vmatmul.f32.gmra.mxu0 %v1071
        %v1897 = vpop.f32.mrf.mxu0
        %v1898 = vadd.f32 0.0, %v1897
        %1899 = vmatmul.f32.gmra.mxu0 %v1075
        %v1900 = vpop.f32.mrf.mxu0
        %v1901 = vadd.f32 0.0, %v1900
        %1902 = vmatmul.f32.gmra.mxu0 %v1079
        %v1903 = vpop.f32.mrf.mxu0
        %v1904 = vadd.f32 0.0, %v1903
        %1905 = vmatmul.f32.gmra.mxu0 %v1083
        %v1906 = vpop.f32.mrf.mxu0
        %v1907 = vadd.f32 0.0, %v1906
        %1908 = vdwg.mxu0
        %1909 = vmatpush.msra.mxu0 %v1763
        %1910 = vmatpush.msra.mxu0 %v1762
        %1911 = vmatpush.msra.mxu0 %v1761
        %1912 = vmatpush.msra.mxu0 %v1760
        %1913 = vmatpush.msra.mxu0 %v1759
        %1914 = vmatpush.msra.mxu0 %v1758
        %1915 = vmatpush.msra.mxu0 %v1757
        %1916 = vmatpush.msra.mxu0 %v1756
        %1917 = vmatpush.msra.mxu0 %v1755
        %1918 = vmatpush.msra.mxu0 %v1754
        %1919 = vmatpush.msra.mxu0 %v1753
        %1920 = vmatpush.msra.mxu0 %v1752
        %1921 = vmatpush.msra.mxu0 %v1751
        %1922 = vmatpush.msra.mxu0 %v1750
        %1923 = vmatpush.msra.mxu0 %v1749
        %1924 = vmatpush.msra.mxu0 %v1748
        %1925 = vmatmul.f32.gmra.mxu0 %v960
        %v1926 = vpop.f32.mrf.mxu0
        %v1927 = vadd.f32 %v1814, %v1926
        %1928 = vmatmul.f32.gmra.mxu0 %v964
        %v1929 = vpop.f32.mrf.mxu0
        %v1930 = vadd.f32 %v1817, %v1929
        %1931 = vmatmul.f32.gmra.mxu0 %v968
        %v1932 = vpop.f32.mrf.mxu0
        %v1933 = vadd.f32 %v1820, %v1932
        %1934 = vmatmul.f32.gmra.mxu0 %v972
        %v1935 = vpop.f32.mrf.mxu0
        %v1936 = vadd.f32 %v1823, %v1935
        %1937 = vmatmul.f32.gmra.mxu0 %v976
        %v1938 = vpop.f32.mrf.mxu0
        %v1939 = vadd.f32 %v1826, %v1938
        %1940 = vmatmul.f32.gmra.mxu0 %v980
        %v1941 = vpop.f32.mrf.mxu0
        %v1942 = vadd.f32 %v1829, %v1941
        %1943 = vmatmul.f32.gmra.mxu0 %v984
        %v1944 = vpop.f32.mrf.mxu0
        %v1945 = vadd.f32 %v1832, %v1944
        %1946 = vmatmul.f32.gmra.mxu0 %v988
        %v1947 = vpop.f32.mrf.mxu0
        %v1948 = vadd.f32 %v1835, %v1947
        %1949 = vmatmul.f32.gmra.mxu0 %v992
        %v1950 = vpop.f32.mrf.mxu0
        %v1951 = vadd.f32 %v1838, %v1950
        %1952 = vmatmul.f32.gmra.mxu0 %v996
        %v1953 = vpop.f32.mrf.mxu0
        %v1954 = vadd.f32 %v1841, %v1953
        %1955 = vmatmul.f32.gmra.mxu0 %v1000
        %v1956 = vpop.f32.mrf.mxu0
        %v1957 = vadd.f32 %v1844, %v1956
        %1958 = vmatmul.f32.gmra.mxu0 %v1004
        %v1959 = vpop.f32.mrf.mxu0
        %v1960 = vadd.f32 %v1847, %v1959
        %1961 = vmatmul.f32.gmra.mxu0 %v1008
        %v1962 = vpop.f32.mrf.mxu0
        %v1963 = vadd.f32 %v1850, %v1962
        %1964 = vmatmul.f32.gmra.mxu0 %v1012
        %v1965 = vpop.f32.mrf.mxu0
        %v1966 = vadd.f32 %v1853, %v1965
        %1967 = vmatmul.f32.gmra.mxu0 %v1016
        %v1968 = vpop.f32.mrf.mxu0
        %v1969 = vadd.f32 %v1856, %v1968
        %1970 = vmatmul.f32.gmra.mxu0 %v1020
        %v1971 = vpop.f32.mrf.mxu0
        %v1972 = vadd.f32 %v1859, %v1971
        %1973 = vmatmul.f32.gmra.mxu0 %v1024
        %v1974 = vpop.f32.mrf.mxu0
        %v1975 = vadd.f32 %v1862, %v1974
        %1976 = vmatmul.f32.gmra.mxu0 %v1028
        %v1977 = vpop.f32.mrf.mxu0
        %v1978 = vadd.f32 %v1865, %v1977
        %1979 = vmatmul.f32.gmra.mxu0 %v1032
        %v1980 = vpop.f32.mrf.mxu0
        %v1981 = vadd.f32 %v1868, %v1980
        %1982 = vmatmul.f32.gmra.mxu0 %v1036
        %v1983 = vpop.f32.mrf.mxu0
        %v1984 = vadd.f32 %v1871, %v1983
        %1985 = vmatmul.f32.gmra.mxu0 %v1040
        %v1986 = vpop.f32.mrf.mxu0
        %v1987 = vadd.f32 %v1874, %v1986
        %1988 = vmatmul.f32.gmra.mxu0 %v1044
        %v1989 = vpop.f32.mrf.mxu0
        %v1990 = vadd.f32 %v1877, %v1989
        %1991 = vmatmul.f32.gmra.mxu0 %v1048
        %v1992 = vpop.f32.mrf.mxu0
        %v1993 = vadd.f32 %v1880, %v1992
        %1994 = vmatmul.f32.gmra.mxu0 %v1052
        %v1995 = vpop.f32.mrf.mxu0
        %v1996 = vadd.f32 %v1883, %v1995
        %1997 = vmatmul.f32.gmra.mxu0 %v1056
        %v1998 = vpop.f32.mrf.mxu0
        %v1999 = vadd.f32 %v1886, %v1998
        %2000 = vmatmul.f32.gmra.mxu0 %v1060
        %v2001 = vpop.f32.mrf.mxu0
        %v2002 = vadd.f32 %v1889, %v2001
        %2003 = vmatmul.f32.gmra.mxu0 %v1064
        %v2004 = vpop.f32.mrf.mxu0
        %v2005 = vadd.f32 %v1892, %v2004
        %2006 = vmatmul.f32.gmra.mxu0 %v1068
        %v2007 = vpop.f32.mrf.mxu0
        %v2008 = vadd.f32 %v1895, %v2007
        %2009 = vmatmul.f32.gmra.mxu0 %v1072
        %v2010 = vpop.f32.mrf.mxu0
        %v2011 = vadd.f32 %v1898, %v2010
        %2012 = vmatmul.f32.gmra.mxu0 %v1076
        %v2013 = vpop.f32.mrf.mxu0
        %v2014 = vadd.f32 %v1901, %v2013
        %2015 = vmatmul.f32.gmra.mxu0 %v1080
        %v2016 = vpop.f32.mrf.mxu0
        %v2017 = vadd.f32 %v1904, %v2016
        %2018 = vmatmul.f32.gmra.mxu0 %v1084
        %v2019 = vpop.f32.mrf.mxu0
        %v2020 = vadd.f32 %v1907, %v2019
        %2021 = vdwg.mxu0
        %2022 = vmatpush.msra.mxu0 %v1779
        %2023 = vmatpush.msra.mxu0 %v1778
        %2024 = vmatpush.msra.mxu0 %v1777
        %2025 = vmatpush.msra.mxu0 %v1776
        %2026 = vmatpush.msra.mxu0 %v1775
        %2027 = vmatpush.msra.mxu0 %v1774
        %2028 = vmatpush.msra.mxu0 %v1773
        %2029 = vmatpush.msra.mxu0 %v1772
        %2030 = vmatpush.msra.mxu0 %v1771
        %2031 = vmatpush.msra.mxu0 %v1770
        %2032 = vmatpush.msra.mxu0 %v1769
        %2033 = vmatpush.msra.mxu0 %v1768
        %2034 = vmatpush.msra.mxu0 %v1767
        %2035 = vmatpush.msra.mxu0 %v1766
        %2036 = vmatpush.msra.mxu0 %v1765
        %2037 = vmatpush.msra.mxu0 %v1764
        %2038 = vmatmul.f32.gmra.mxu0 %v961
        %v2039 = vpop.f32.mrf.mxu0
        %v2040 = vadd.f32 %v1927, %v2039
        %2041 = vmatmul.f32.gmra.mxu0 %v965
        %v2042 = vpop.f32.mrf.mxu0
        %v2043 = vadd.f32 %v1930, %v2042
        %2044 = vmatmul.f32.gmra.mxu0 %v969
        %v2045 = vpop.f32.mrf.mxu0
        %v2046 = vadd.f32 %v1933, %v2045
        %2047 = vmatmul.f32.gmra.mxu0 %v973
        %v2048 = vpop.f32.mrf.mxu0
        %v2049 = vadd.f32 %v1936, %v2048
        %2050 = vmatmul.f32.gmra.mxu0 %v977
        %v2051 = vpop.f32.mrf.mxu0
        %v2052 = vadd.f32 %v1939, %v2051
        %2053 = vmatmul.f32.gmra.mxu0 %v981
        %v2054 = vpop.f32.mrf.mxu0
        %v2055 = vadd.f32 %v1942, %v2054
        %2056 = vmatmul.f32.gmra.mxu0 %v985
        %v2057 = vpop.f32.mrf.mxu0
        %v2058 = vadd.f32 %v1945, %v2057
        %2059 = vmatmul.f32.gmra.mxu0 %v989
        %v2060 = vpop.f32.mrf.mxu0
        %v2061 = vadd.f32 %v1948, %v2060
        %2062 = vmatmul.f32.gmra.mxu0 %v993
        %v2063 = vpop.f32.mrf.mxu0
        %v2064 = vadd.f32 %v1951, %v2063
        %2065 = vmatmul.f32.gmra.mxu0 %v997
        %v2066 = vpop.f32.mrf.mxu0
        %v2067 = vadd.f32 %v1954, %v2066
        %2068 = vmatmul.f32.gmra.mxu0 %v1001
        %v2069 = vpop.f32.mrf.mxu0
        %v2070 = vadd.f32 %v1957, %v2069
        %2071 = vmatmul.f32.gmra.mxu0 %v1005
        %v2072 = vpop.f32.mrf.mxu0
        %v2073 = vadd.f32 %v1960, %v2072
        %2074 = vmatmul.f32.gmra.mxu0 %v1009
        %v2075 = vpop.f32.mrf.mxu0
        %v2076 = vadd.f32 %v1963, %v2075
        %2077 = vmatmul.f32.gmra.mxu0 %v1013
        %v2078 = vpop.f32.mrf.mxu0
        %v2079 = vadd.f32 %v1966, %v2078
        %2080 = vmatmul.f32.gmra.mxu0 %v1017
        %v2081 = vpop.f32.mrf.mxu0
        %v2082 = vadd.f32 %v1969, %v2081
        %2083 = vmatmul.f32.gmra.mxu0 %v1021
        %v2084 = vpop.f32.mrf.mxu0
        %v2085 = vadd.f32 %v1972, %v2084
        %2086 = vmatmul.f32.gmra.mxu0 %v1025
        %v2087 = vpop.f32.mrf.mxu0
        %v2088 = vadd.f32 %v1975, %v2087
        %2089 = vmatmul.f32.gmra.mxu0 %v1029
        %v2090 = vpop.f32.mrf.mxu0
        %v2091 = vadd.f32 %v1978, %v2090
        %2092 = vmatmul.f32.gmra.mxu0 %v1033
        %v2093 = vpop.f32.mrf.mxu0
        %v2094 = vadd.f32 %v1981, %v2093
        %2095 = vmatmul.f32.gmra.mxu0 %v1037
        %v2096 = vpop.f32.mrf.mxu0
        %v2097 = vadd.f32 %v1984, %v2096
        %2098 = vmatmul.f32.gmra.mxu0 %v1041
        %v2099 = vpop.f32.mrf.mxu0
        %v2100 = vadd.f32 %v1987, %v2099
        %2101 = vmatmul.f32.gmra.mxu0 %v1045
        %v2102 = vpop.f32.mrf.mxu0
        %v2103 = vadd.f32 %v1990, %v2102
        %2104 = vmatmul.f32.gmra.mxu0 %v1049
        %v2105 = vpop.f32.mrf.mxu0
        %v2106 = vadd.f32 %v1993, %v2105
        %2107 = vmatmul.f32.gmra.mxu0 %v1053
        %v2108 = vpop.f32.mrf.mxu0
        %v2109 = vadd.f32 %v1996, %v2108
        %2110 = vmatmul.f32.gmra.mxu0 %v1057
        %v2111 = vpop.f32.mrf.mxu0
        %v2112 = vadd.f32 %v1999, %v2111
        %2113 = vmatmul.f32.gmra.mxu0 %v1061
        %v2114 = vpop.f32.mrf.mxu0
        %v2115 = vadd.f32 %v2002, %v2114
        %2116 = vmatmul.f32.gmra.mxu0 %v1065
        %v2117 = vpop.f32.mrf.mxu0
        %v2118 = vadd.f32 %v2005, %v2117
        %2119 = vmatmul.f32.gmra.mxu0 %v1069
        %v2120 = vpop.f32.mrf.mxu0
        %v2121 = vadd.f32 %v2008, %v2120
        %2122 = vmatmul.f32.gmra.mxu0 %v1073
        %v2123 = vpop.f32.mrf.mxu0
        %v2124 = vadd.f32 %v2011, %v2123
        %2125 = vmatmul.f32.gmra.mxu0 %v1077
        %v2126 = vpop.f32.mrf.mxu0
        %v2127 = vadd.f32 %v2014, %v2126
        %2128 = vmatmul.f32.gmra.mxu0 %v1081
        %v2129 = vpop.f32.mrf.mxu0
        %v2130 = vadd.f32 %v2017, %v2129
        %2131 = vmatmul.f32.gmra.mxu0 %v1085
        %v2132 = vpop.f32.mrf.mxu0
        %v2133 = vadd.f32 %v2020, %v2132
        %2134 = vdwg.mxu0
        %2135 = vmatpush.msra.mxu0 %v1795
        %2136 = vmatpush.msra.mxu0 %v1794
        %2137 = vmatpush.msra.mxu0 %v1793
        %2138 = vmatpush.msra.mxu0 %v1792
        %2139 = vmatpush.msra.mxu0 %v1791
        %2140 = vmatpush.msra.mxu0 %v1790
        %2141 = vmatpush.msra.mxu0 %v1789
        %2142 = vmatpush.msra.mxu0 %v1788
        %2143 = vmatpush.msra.mxu0 %v1787
        %2144 = vmatpush.msra.mxu0 %v1786
        %2145 = vmatpush.msra.mxu0 %v1785
        %2146 = vmatpush.msra.mxu0 %v1784
        %2147 = vmatpush.msra.mxu0 %v1783
        %2148 = vmatpush.msra.mxu0 %v1782
        %2149 = vmatpush.msra.mxu0 %v1781
        %2150 = vmatpush.msra.mxu0 %v1780
        %2151 = vmatmul.f32.gmra.mxu0 %v962
        %v2152 = vpop.f32.mrf.mxu0
        %v2153 = vadd.f32 %v2040, %v2152
        %2154 = vmatmul.f32.gmra.mxu0 %v966
        %v2155 = vpop.f32.mrf.mxu0
        %v2156 = vadd.f32 %v2043, %v2155
        %2157 = vmatmul.f32.gmra.mxu0 %v970
        %v2158 = vpop.f32.mrf.mxu0
        %v2159 = vadd.f32 %v2046, %v2158
        %2160 = vmatmul.f32.gmra.mxu0 %v974
        %v2161 = vpop.f32.mrf.mxu0
        %v2162 = vadd.f32 %v2049, %v2161
        %2163 = vmatmul.f32.gmra.mxu0 %v978
        %v2164 = vpop.f32.mrf.mxu0
        %v2165 = vadd.f32 %v2052, %v2164
        %2166 = vmatmul.f32.gmra.mxu0 %v982
        %v2167 = vpop.f32.mrf.mxu0
        %v2168 = vadd.f32 %v2055, %v2167
        %2169 = vmatmul.f32.gmra.mxu0 %v986
        %v2170 = vpop.f32.mrf.mxu0
        %v2171 = vadd.f32 %v2058, %v2170
        %2172 = vmatmul.f32.gmra.mxu0 %v990
        %v2173 = vpop.f32.mrf.mxu0
        %v2174 = vadd.f32 %v2061, %v2173
        %2175 = vmatmul.f32.gmra.mxu0 %v994
        %v2176 = vpop.f32.mrf.mxu0
        %v2177 = vadd.f32 %v2064, %v2176
        %2178 = vmatmul.f32.gmra.mxu0 %v998
        %v2179 = vpop.f32.mrf.mxu0
        %v2180 = vadd.f32 %v2067, %v2179
        %2181 = vmatmul.f32.gmra.mxu0 %v1002
        %v2182 = vpop.f32.mrf.mxu0
        %v2183 = vadd.f32 %v2070, %v2182
        %2184 = vmatmul.f32.gmra.mxu0 %v1006
        %v2185 = vpop.f32.mrf.mxu0
        %v2186 = vadd.f32 %v2073, %v2185
        %2187 = vmatmul.f32.gmra.mxu0 %v1010
        %v2188 = vpop.f32.mrf.mxu0
        %v2189 = vadd.f32 %v2076, %v2188
        %2190 = vmatmul.f32.gmra.mxu0 %v1014
        %v2191 = vpop.f32.mrf.mxu0
        %v2192 = vadd.f32 %v2079, %v2191
        %2193 = vmatmul.f32.gmra.mxu0 %v1018
        %v2194 = vpop.f32.mrf.mxu0
        %v2195 = vadd.f32 %v2082, %v2194
        %2196 = vmatmul.f32.gmra.mxu0 %v1022
        %v2197 = vpop.f32.mrf.mxu0
        %v2198 = vadd.f32 %v2085, %v2197
        %2199 = vmatmul.f32.gmra.mxu0 %v1026
        %v2200 = vpop.f32.mrf.mxu0
        %v2201 = vadd.f32 %v2088, %v2200
        %2202 = vmatmul.f32.gmra.mxu0 %v1030
        %v2203 = vpop.f32.mrf.mxu0
        %v2204 = vadd.f32 %v2091, %v2203
        %2205 = vmatmul.f32.gmra.mxu0 %v1034
        %v2206 = vpop.f32.mrf.mxu0
        %v2207 = vadd.f32 %v2094, %v2206
        %2208 = vmatmul.f32.gmra.mxu0 %v1038
        %v2209 = vpop.f32.mrf.mxu0
        %v2210 = vadd.f32 %v2097, %v2209
        %2211 = vmatmul.f32.gmra.mxu0 %v1042
        %v2212 = vpop.f32.mrf.mxu0
        %v2213 = vadd.f32 %v2100, %v2212
        %2214 = vmatmul.f32.gmra.mxu0 %v1046
        %v2215 = vpop.f32.mrf.mxu0
        %v2216 = vadd.f32 %v2103, %v2215
        %2217 = vmatmul.f32.gmra.mxu0 %v1050
        %v2218 = vpop.f32.mrf.mxu0
        %v2219 = vadd.f32 %v2106, %v2218
        %2220 = vmatmul.f32.gmra.mxu0 %v1054
        %v2221 = vpop.f32.mrf.mxu0
        %v2222 = vadd.f32 %v2109, %v2221
        %2223 = vmatmul.f32.gmra.mxu0 %v1058
        %v2224 = vpop.f32.mrf.mxu0
        %v2225 = vadd.f32 %v2112, %v2224
        %2226 = vmatmul.f32.gmra.mxu0 %v1062
        %v2227 = vpop.f32.mrf.mxu0
        %v2228 = vadd.f32 %v2115, %v2227
        %2229 = vmatmul.f32.gmra.mxu0 %v1066
        %v2230 = vpop.f32.mrf.mxu0
        %v2231 = vadd.f32 %v2118, %v2230
        %2232 = vmatmul.f32.gmra.mxu0 %v1070
        %v2233 = vpop.f32.mrf.mxu0
        %v2234 = vadd.f32 %v2121, %v2233
        %2235 = vmatmul.f32.gmra.mxu0 %v1074
        %v2236 = vpop.f32.mrf.mxu0
        %v2237 = vadd.f32 %v2124, %v2236
        %2238 = vmatmul.f32.gmra.mxu0 %v1078
        %v2239 = vpop.f32.mrf.mxu0
        %v2240 = vadd.f32 %v2127, %v2239
        %2241 = vmatmul.f32.gmra.mxu0 %v1082
        %v2242 = vpop.f32.mrf.mxu0
        %v2243 = vadd.f32 %v2130, %v2242
        %2244 = vmatmul.f32.gmra.mxu0 %v1086
        %v2245 = vpop.f32.mrf.mxu0
        %v2246 = vadd.f32 %v2133, %v2245
        %2247 = vdwg.mxu0
        %v2248 = vadd.f32 %v1700, %v2153
        %v2249 = vadd.f32 %v1701, %v2156
        %v2250 = vadd.f32 %v1702, %v2159
        %v2251 = vadd.f32 %v1703, %v2162
        %v2252 = vadd.f32 %v1704, %v2165
        %v2253 = vadd.f32 %v1705, %v2168
        %v2254 = vadd.f32 %v1706, %v2171
        %v2255 = vadd.f32 %v1707, %v2174
        %v2256 = vadd.f32 %v1708, %v2177
        %v2257 = vadd.f32 %v1709, %v2180
        %v2258 = vadd.f32 %v1710, %v2183
        %v2259 = vadd.f32 %v1711, %v2186
        %v2260 = vadd.f32 %v1712, %v2189
        %v2261 = vadd.f32 %v1713, %v2192
        %v2262 = vadd.f32 %v1714, %v2195
        %v2263 = vadd.f32 %v1715, %v2198
        %v2264 = vadd.f32 %v1716, %v2201
        %v2265 = vadd.f32 %v1717, %v2204
        %v2266 = vadd.f32 %v1718, %v2207
        %v2267 = vadd.f32 %v1719, %v2210
        %v2268 = vadd.f32 %v1720, %v2213
        %v2269 = vadd.f32 %v1721, %v2216
        %v2270 = vadd.f32 %v1722, %v2219
        %v2271 = vadd.f32 %v1723, %v2222
        %v2272 = vadd.f32 %v1724, %v2225
        %v2273 = vadd.f32 %v1725, %v2228
        %v2274 = vadd.f32 %v1726, %v2231
        %v2275 = vadd.f32 %v1727, %v2234
        %v2276 = vadd.f32 %v1728, %v2237
        %v2277 = vadd.f32 %v1729, %v2240
        %v2278 = vadd.f32 %v1730, %v2243
        %v2279 = vadd.f32 %v1731, %v2246
        %2280 = vst.msk [vmem:[#allocation3] sm:$0xff] %vm1667, %v2248
        %2281 = vst.msk [vmem:[#allocation3 + $0x8] sm:$0xff] %vm1667, %v2249
        %2282 = vst.msk [vmem:[#allocation3 + $0x10] sm:$0xff] %vm1667, %v2250
        %2283 = vst.msk [vmem:[#allocation3 + $0x18] sm:$0xff] %vm1667, %v2251
        %2284 = vst.msk [vmem:[#allocation3 + $0x20] sm:$0xff] %vm1667, %v2252
        %2285 = vst.msk [vmem:[#allocation3 + $0x28] sm:$0xff] %vm1667, %v2253
        %2286 = vst.msk [vmem:[#allocation3 + $0x30] sm:$0xff] %vm1667, %v2254
        %2287 = vst.msk [vmem:[#allocation3 + $0x38] sm:$0xff] %vm1667, %v2255
        %2288 = vst.msk [vmem:[#allocation3 + $0x40] sm:$0xff] %vm1667, %v2256
        %2289 = vst.msk [vmem:[#allocation3 + $0x48] sm:$0xff] %vm1667, %v2257
        %2290 = vst.msk [vmem:[#allocation3 + $0x50] sm:$0xff] %vm1667, %v2258
        %2291 = vst.msk [vmem:[#allocation3 + $0x58] sm:$0xff] %vm1667, %v2259
        %2292 = vst.msk [vmem:[#allocation3 + $0x60] sm:$0xff] %vm1667, %v2260
        %2293 = vst.msk [vmem:[#allocation3 + $0x68] sm:$0xff] %vm1667, %v2261
        %2294 = vst.msk [vmem:[#allocation3 + $0x70] sm:$0xff] %vm1667, %v2262
        %2295 = vst.msk [vmem:[#allocation3 + $0x78] sm:$0xff] %vm1667, %v2263
        %2296 = vst.msk [vmem:[#allocation3 + $0x80] sm:$0xff] %vm1667, %v2264
        %2297 = vst.msk [vmem:[#allocation3 + $0x88] sm:$0xff] %vm1667, %v2265
        %2298 = vst.msk [vmem:[#allocation3 + $0x90] sm:$0xff] %vm1667, %v2266
        %2299 = vst.msk [vmem:[#allocation3 + $0x98] sm:$0xff] %vm1667, %v2267
        %2300 = vst.msk [vmem:[#allocation3 + $0xa0] sm:$0xff] %vm1667, %v2268
        %2301 = vst.msk [vmem:[#allocation3 + $0xa8] sm:$0xff] %vm1667, %v2269
        %2302 = vst.msk [vmem:[#allocation3 + $0xb0] sm:$0xff] %vm1667, %v2270
        %2303 = vst.msk [vmem:[#allocation3 + $0xb8] sm:$0xff] %vm1667, %v2271
        %2304 = vst.msk [vmem:[#allocation3 + $0xc0] sm:$0xff] %vm1667, %v2272
        %2305 = vst.msk [vmem:[#allocation3 + $0xc8] sm:$0xff] %vm1667, %v2273
        %2306 = vst.msk [vmem:[#allocation3 + $0xd0] sm:$0xff] %vm1667, %v2274
        %2307 = vst.msk [vmem:[#allocation3 + $0xd8] sm:$0xff] %vm1667, %v2275
        %2308 = vst.msk [vmem:[#allocation3 + $0xe0] sm:$0xff] %vm1667, %v2276
        %2309 = vst.msk [vmem:[#allocation3 + $0xe8] sm:$0xff] %vm1667, %v2277
        %2310 = vst.msk [vmem:[#allocation3 + $0xf0] sm:$0xff] %vm1667, %v2278
        %2311 = vst.msk [vmem:[#allocation3 + $0xf8] sm:$0xff] %vm1667, %v2279
        %p2312 = scmp.eq.s32.totalorder %s31, 1
        // Predicated region
        $region88: #{tpu_custom_call.1} parent=74 // pred_check
          %p2313 = pneg %p2312
        $region89: #{tpu_custom_call.1} parent=74 // pred_check_branch
          %2315 = sbr.rel (%p2313) target = $region91
        $region90: #{tpu_custom_call.1} parent=74 // pred_region
          %v2316 = vld [vmem:[%s625] sm:$0xff]
          %v2317 = vld [vmem:[%s625 + $0x8] sm:$0xff]
          %v2318 = vld [vmem:[%s625 + $0x10] sm:$0xff]
          %v2319 = vld [vmem:[%s625 + $0x18] sm:$0xff]
          %v2320 = vld [vmem:[%s625 + $0x20] sm:$0xff]
          %v2321 = vld [vmem:[%s625 + $0x28] sm:$0xff]
          %v2322 = vld [vmem:[%s625 + $0x30] sm:$0xff]
          %v2323 = vld [vmem:[%s625 + $0x38] sm:$0xff]
          %v2324 = vld [vmem:[%s625 + $0x40] sm:$0xff]
          %v2325 = vld [vmem:[%s625 + $0x48] sm:$0xff]
          %v2326 = vld [vmem:[%s625 + $0x50] sm:$0xff]
          %v2327 = vld [vmem:[%s625 + $0x58] sm:$0xff]
          %v2328 = vld [vmem:[%s625 + $0x60] sm:$0xff]
          %v2329 = vld [vmem:[%s625 + $0x68] sm:$0xff]
          %v2330 = vld [vmem:[%s625 + $0x70] sm:$0xff]
          %v2331 = vld [vmem:[%s625 + $0x78] sm:$0xff]
          %v2332 = vld [vmem:[%s625 + $0x80] sm:$0xff]
          %v2333 = vld [vmem:[%s625 + $0x88] sm:$0xff]
          %v2334 = vld [vmem:[%s625 + $0x90] sm:$0xff]
          %v2335 = vld [vmem:[%s625 + $0x98] sm:$0xff]
          %v2336 = vld [vmem:[%s625 + $0xa0] sm:$0xff]
          %v2337 = vld [vmem:[%s625 + $0xa8] sm:$0xff]
          %v2338 = vld [vmem:[%s625 + $0xb0] sm:$0xff]
          %v2339 = vld [vmem:[%s625 + $0xb8] sm:$0xff]
          %v2340 = vld [vmem:[%s625 + $0xc0] sm:$0xff]
          %v2341 = vld [vmem:[%s625 + $0xc8] sm:$0xff]
          %v2342 = vld [vmem:[%s625 + $0xd0] sm:$0xff]
          %v2343 = vld [vmem:[%s625 + $0xd8] sm:$0xff]
          %v2344 = vld [vmem:[%s625 + $0xe0] sm:$0xff]
          %v2345 = vld [vmem:[%s625 + $0xe8] sm:$0xff]
          %v2346 = vld [vmem:[%s625 + $0xf0] sm:$0xff]
          %v2347 = vld [vmem:[%s625 + $0xf8] sm:$0xff]
          %v2348 = vld [vmem:[#allocation2] sm:$0xff]
          %v2349 = vld [vmem:[#allocation2 + $0x8] sm:$0xff]
          %v2350 = vld [vmem:[#allocation2 + $0x10] sm:$0xff]
          %v2351 = vld [vmem:[#allocation2 + $0x18] sm:$0xff]
          %v2352 = vld [vmem:[#allocation2 + $0x20] sm:$0xff]
          %v2353 = vld [vmem:[#allocation2 + $0x28] sm:$0xff]
          %v2354 = vld [vmem:[#allocation2 + $0x30] sm:$0xff]
          %v2355 = vld [vmem:[#allocation2 + $0x38] sm:$0xff]
          %v2356 = vld [vmem:[#allocation2 + $0x40] sm:$0xff]
          %v2357 = vld [vmem:[#allocation2 + $0x48] sm:$0xff]
          %v2358 = vld [vmem:[#allocation2 + $0x50] sm:$0xff]
          %v2359 = vld [vmem:[#allocation2 + $0x58] sm:$0xff]
          %v2360 = vld [vmem:[#allocation2 + $0x60] sm:$0xff]
          %v2361 = vld [vmem:[#allocation2 + $0x68] sm:$0xff]
          %v2362 = vld [vmem:[#allocation2 + $0x70] sm:$0xff]
          %v2363 = vld [vmem:[#allocation2 + $0x78] sm:$0xff]
          %v2364 = vld [vmem:[#allocation2 + $0x80] sm:$0xff]
          %v2365 = vld [vmem:[#allocation2 + $0x88] sm:$0xff]
          %v2366 = vld [vmem:[#allocation2 + $0x90] sm:$0xff]
          %v2367 = vld [vmem:[#allocation2 + $0x98] sm:$0xff]
          %v2368 = vld [vmem:[#allocation2 + $0xa0] sm:$0xff]
          %v2369 = vld [vmem:[#allocation2 + $0xa8] sm:$0xff]
          %v2370 = vld [vmem:[#allocation2 + $0xb0] sm:$0xff]
          %v2371 = vld [vmem:[#allocation2 + $0xb8] sm:$0xff]
          %v2372 = vld [vmem:[#allocation2 + $0xc0] sm:$0xff]
          %v2373 = vld [vmem:[#allocation2 + $0xc8] sm:$0xff]
          %v2374 = vld [vmem:[#allocation2 + $0xd0] sm:$0xff]
          %v2375 = vld [vmem:[#allocation2 + $0xd8] sm:$0xff]
          %v2376 = vld [vmem:[#allocation2 + $0xe0] sm:$0xff]
          %v2377 = vld [vmem:[#allocation2 + $0xe8] sm:$0xff]
          %v2378 = vld [vmem:[#allocation2 + $0xf0] sm:$0xff]
          %v2379 = vld [vmem:[#allocation2 + $0xf8] sm:$0xff]
          %2381 = vset.pattern.permute.xlu0 0
          %2382 = vperm.xlu0 %2381, %v2316
          %v2383 = vpop.permute.xlu0 %2382
          %2386 = vset.pattern.permute.xlu0 0
          %2387 = vperm.xlu0 %2386, %v2317
          %v2388 = vpop.permute.xlu0 %2387
          %2391 = vset.pattern.permute.xlu0 0
          %2392 = vperm.xlu0 %2391, %v2318
          %v2393 = vpop.permute.xlu0 %2392
          %2396 = vset.pattern.permute.xlu0 0
          %2397 = vperm.xlu0 %2396, %v2319
          %v2398 = vpop.permute.xlu0 %2397
          %2401 = vset.pattern.permute.xlu0 0
          %2402 = vperm.xlu0 %2401, %v2320
          %v2403 = vpop.permute.xlu0 %2402
          %2406 = vset.pattern.permute.xlu0 0
          %2407 = vperm.xlu0 %2406, %v2321
          %v2408 = vpop.permute.xlu0 %2407
          %2411 = vset.pattern.permute.xlu0 0
          %2412 = vperm.xlu0 %2411, %v2322
          %v2413 = vpop.permute.xlu0 %2412
          %2416 = vset.pattern.permute.xlu0 0
          %2417 = vperm.xlu0 %2416, %v2323
          %v2418 = vpop.permute.xlu0 %2417
          %2421 = vset.pattern.permute.xlu0 0
          %2422 = vperm.xlu0 %2421, %v2324
          %v2423 = vpop.permute.xlu0 %2422
          %2426 = vset.pattern.permute.xlu0 0
          %2427 = vperm.xlu0 %2426, %v2325
          %v2428 = vpop.permute.xlu0 %2427
          %2431 = vset.pattern.permute.xlu0 0
          %2432 = vperm.xlu0 %2431, %v2326
          %v2433 = vpop.permute.xlu0 %2432
          %2436 = vset.pattern.permute.xlu0 0
          %2437 = vperm.xlu0 %2436, %v2327
          %v2438 = vpop.permute.xlu0 %2437
          %2441 = vset.pattern.permute.xlu0 0
          %2442 = vperm.xlu0 %2441, %v2328
          %v2443 = vpop.permute.xlu0 %2442
          %2446 = vset.pattern.permute.xlu0 0
          %2447 = vperm.xlu0 %2446, %v2329
          %v2448 = vpop.permute.xlu0 %2447
          %2451 = vset.pattern.permute.xlu0 0
          %2452 = vperm.xlu0 %2451, %v2330
          %v2453 = vpop.permute.xlu0 %2452
          %2456 = vset.pattern.permute.xlu0 0
          %2457 = vperm.xlu0 %2456, %v2331
          %v2458 = vpop.permute.xlu0 %2457
          %2461 = vset.pattern.permute.xlu0 0
          %2462 = vperm.xlu0 %2461, %v2332
          %v2463 = vpop.permute.xlu0 %2462
          %2466 = vset.pattern.permute.xlu0 0
          %2467 = vperm.xlu0 %2466, %v2333
          %v2468 = vpop.permute.xlu0 %2467
          %2471 = vset.pattern.permute.xlu0 0
          %2472 = vperm.xlu0 %2471, %v2334
          %v2473 = vpop.permute.xlu0 %2472
          %2476 = vset.pattern.permute.xlu0 0
          %2477 = vperm.xlu0 %2476, %v2335
          %v2478 = vpop.permute.xlu0 %2477
          %2481 = vset.pattern.permute.xlu0 0
          %2482 = vperm.xlu0 %2481, %v2336
          %v2483 = vpop.permute.xlu0 %2482
          %2486 = vset.pattern.permute.xlu0 0
          %2487 = vperm.xlu0 %2486, %v2337
          %v2488 = vpop.permute.xlu0 %2487
          %2491 = vset.pattern.permute.xlu0 0
          %2492 = vperm.xlu0 %2491, %v2338
          %v2493 = vpop.permute.xlu0 %2492
          %2496 = vset.pattern.permute.xlu0 0
          %2497 = vperm.xlu0 %2496, %v2339
          %v2498 = vpop.permute.xlu0 %2497
          %2501 = vset.pattern.permute.xlu0 0
          %2502 = vperm.xlu0 %2501, %v2340
          %v2503 = vpop.permute.xlu0 %2502
          %2506 = vset.pattern.permute.xlu0 0
          %2507 = vperm.xlu0 %2506, %v2341
          %v2508 = vpop.permute.xlu0 %2507
          %2511 = vset.pattern.permute.xlu0 0
          %2512 = vperm.xlu0 %2511, %v2342
          %v2513 = vpop.permute.xlu0 %2512
          %2516 = vset.pattern.permute.xlu0 0
          %2517 = vperm.xlu0 %2516, %v2343
          %v2518 = vpop.permute.xlu0 %2517
          %2521 = vset.pattern.permute.xlu0 0
          %2522 = vperm.xlu0 %2521, %v2344
          %v2523 = vpop.permute.xlu0 %2522
          %2526 = vset.pattern.permute.xlu0 0
          %2527 = vperm.xlu0 %2526, %v2345
          %v2528 = vpop.permute.xlu0 %2527
          %2531 = vset.pattern.permute.xlu0 0
          %2532 = vperm.xlu0 %2531, %v2346
          %v2533 = vpop.permute.xlu0 %2532
          %2536 = vset.pattern.permute.xlu0 0
          %2537 = vperm.xlu0 %2536, %v2347
          %v2538 = vpop.permute.xlu0 %2537
          %v2540 = vmul.f32 %v2383, %v2348
          %v2541 = vmul.f32 %v2388, %v2349
          %v2542 = vmul.f32 %v2393, %v2350
          %v2543 = vmul.f32 %v2398, %v2351
          %v2544 = vmul.f32 %v2403, %v2352
          %v2545 = vmul.f32 %v2408, %v2353
          %v2546 = vmul.f32 %v2413, %v2354
          %v2547 = vmul.f32 %v2418, %v2355
          %v2548 = vmul.f32 %v2423, %v2356
          %v2549 = vmul.f32 %v2428, %v2357
          %v2550 = vmul.f32 %v2433, %v2358
          %v2551 = vmul.f32 %v2438, %v2359
          %v2552 = vmul.f32 %v2443, %v2360
          %v2553 = vmul.f32 %v2448, %v2361
          %v2554 = vmul.f32 %v2453, %v2362
          %v2555 = vmul.f32 %v2458, %v2363
          %v2556 = vmul.f32 %v2463, %v2364
          %v2557 = vmul.f32 %v2468, %v2365
          %v2558 = vmul.f32 %v2473, %v2366
          %v2559 = vmul.f32 %v2478, %v2367
          %v2560 = vmul.f32 %v2483, %v2368
          %v2561 = vmul.f32 %v2488, %v2369
          %v2562 = vmul.f32 %v2493, %v2370
          %v2563 = vmul.f32 %v2498, %v2371
          %v2564 = vmul.f32 %v2503, %v2372
          %v2565 = vmul.f32 %v2508, %v2373
          %v2566 = vmul.f32 %v2513, %v2374
          %v2567 = vmul.f32 %v2518, %v2375
          %v2568 = vmul.f32 %v2523, %v2376
          %v2569 = vmul.f32 %v2528, %v2377
          %v2570 = vmul.f32 %v2533, %v2378
          %v2571 = vmul.f32 %v2538, %v2379
          %v2572 = vld [vmem:[%s631] sm:$0xff]
          %v2573 = vld [vmem:[%s631 + $0x8] sm:$0xff]
          %v2574 = vld [vmem:[%s631 + $0x10] sm:$0xff]
          %v2575 = vld [vmem:[%s631 + $0x18] sm:$0xff]
          %v2576 = vld [vmem:[%s631 + $0x20] sm:$0xff]
          %v2577 = vld [vmem:[%s631 + $0x28] sm:$0xff]
          %v2578 = vld [vmem:[%s631 + $0x30] sm:$0xff]
          %v2579 = vld [vmem:[%s631 + $0x38] sm:$0xff]
          %v2580 = vld [vmem:[%s631 + $0x40] sm:$0xff]
          %v2581 = vld [vmem:[%s631 + $0x48] sm:$0xff]
          %v2582 = vld [vmem:[%s631 + $0x50] sm:$0xff]
          %v2583 = vld [vmem:[%s631 + $0x58] sm:$0xff]
          %v2584 = vld [vmem:[%s631 + $0x60] sm:$0xff]
          %v2585 = vld [vmem:[%s631 + $0x68] sm:$0xff]
          %v2586 = vld [vmem:[%s631 + $0x70] sm:$0xff]
          %v2587 = vld [vmem:[%s631 + $0x78] sm:$0xff]
          %v2588 = vld [vmem:[%s631 + $0x80] sm:$0xff]
          %v2589 = vld [vmem:[%s631 + $0x88] sm:$0xff]
          %v2590 = vld [vmem:[%s631 + $0x90] sm:$0xff]
          %v2591 = vld [vmem:[%s631 + $0x98] sm:$0xff]
          %v2592 = vld [vmem:[%s631 + $0xa0] sm:$0xff]
          %v2593 = vld [vmem:[%s631 + $0xa8] sm:$0xff]
          %v2594 = vld [vmem:[%s631 + $0xb0] sm:$0xff]
          %v2595 = vld [vmem:[%s631 + $0xb8] sm:$0xff]
          %v2596 = vld [vmem:[%s631 + $0xc0] sm:$0xff]
          %v2597 = vld [vmem:[%s631 + $0xc8] sm:$0xff]
          %v2598 = vld [vmem:[%s631 + $0xd0] sm:$0xff]
          %v2599 = vld [vmem:[%s631 + $0xd8] sm:$0xff]
          %v2600 = vld [vmem:[%s631 + $0xe0] sm:$0xff]
          %v2601 = vld [vmem:[%s631 + $0xe8] sm:$0xff]
          %v2602 = vld [vmem:[%s631 + $0xf0] sm:$0xff]
          %v2603 = vld [vmem:[%s631 + $0xf8] sm:$0xff]
          %v2604 = vld [vmem:[#allocation3] sm:$0xff]
          %v2605 = vld [vmem:[#allocation3 + $0x8] sm:$0xff]
          %v2606 = vld [vmem:[#allocation3 + $0x10] sm:$0xff]
          %v2607 = vld [vmem:[#allocation3 + $0x18] sm:$0xff]
          %v2608 = vld [vmem:[#allocation3 + $0x20] sm:$0xff]
          %v2609 = vld [vmem:[#allocation3 + $0x28] sm:$0xff]
          %v2610 = vld [vmem:[#allocation3 + $0x30] sm:$0xff]
          %v2611 = vld [vmem:[#allocation3 + $0x38] sm:$0xff]
          %v2612 = vld [vmem:[#allocation3 + $0x40] sm:$0xff]
          %v2613 = vld [vmem:[#allocation3 + $0x48] sm:$0xff]
          %v2614 = vld [vmem:[#allocation3 + $0x50] sm:$0xff]
          %v2615 = vld [vmem:[#allocation3 + $0x58] sm:$0xff]
          %v2616 = vld [vmem:[#allocation3 + $0x60] sm:$0xff]
          %v2617 = vld [vmem:[#allocation3 + $0x68] sm:$0xff]
          %v2618 = vld [vmem:[#allocation3 + $0x70] sm:$0xff]
          %v2619 = vld [vmem:[#allocation3 + $0x78] sm:$0xff]
          %v2620 = vld [vmem:[#allocation3 + $0x80] sm:$0xff]
          %v2621 = vld [vmem:[#allocation3 + $0x88] sm:$0xff]
          %v2622 = vld [vmem:[#allocation3 + $0x90] sm:$0xff]
          %v2623 = vld [vmem:[#allocation3 + $0x98] sm:$0xff]
          %v2624 = vld [vmem:[#allocation3 + $0xa0] sm:$0xff]
          %v2625 = vld [vmem:[#allocation3 + $0xa8] sm:$0xff]
          %v2626 = vld [vmem:[#allocation3 + $0xb0] sm:$0xff]
          %v2627 = vld [vmem:[#allocation3 + $0xb8] sm:$0xff]
          %v2628 = vld [vmem:[#allocation3 + $0xc0] sm:$0xff]
          %v2629 = vld [vmem:[#allocation3 + $0xc8] sm:$0xff]
          %v2630 = vld [vmem:[#allocation3 + $0xd0] sm:$0xff]
          %v2631 = vld [vmem:[#allocation3 + $0xd8] sm:$0xff]
          %v2632 = vld [vmem:[#allocation3 + $0xe0] sm:$0xff]
          %v2633 = vld [vmem:[#allocation3 + $0xe8] sm:$0xff]
          %v2634 = vld [vmem:[#allocation3 + $0xf0] sm:$0xff]
          %v2635 = vld [vmem:[#allocation3 + $0xf8] sm:$0xff]
          %2637 = vset.pattern.permute.xlu0 0
          %2638 = vperm.xlu0 %2637, %v2572
          %v2639 = vpop.permute.xlu0 %2638
          %2642 = vset.pattern.permute.xlu0 0
          %2643 = vperm.xlu0 %2642, %v2573
          %v2644 = vpop.permute.xlu0 %2643
          %2647 = vset.pattern.permute.xlu0 0
          %2648 = vperm.xlu0 %2647, %v2574
          %v2649 = vpop.permute.xlu0 %2648
          %2652 = vset.pattern.permute.xlu0 0
          %2653 = vperm.xlu0 %2652, %v2575
          %v2654 = vpop.permute.xlu0 %2653
          %2657 = vset.pattern.permute.xlu0 0
          %2658 = vperm.xlu0 %2657, %v2576
          %v2659 = vpop.permute.xlu0 %2658
          %2662 = vset.pattern.permute.xlu0 0
          %2663 = vperm.xlu0 %2662, %v2577
          %v2664 = vpop.permute.xlu0 %2663
          %2667 = vset.pattern.permute.xlu0 0
          %2668 = vperm.xlu0 %2667, %v2578
          %v2669 = vpop.permute.xlu0 %2668
          %2672 = vset.pattern.permute.xlu0 0
          %2673 = vperm.xlu0 %2672, %v2579
          %v2674 = vpop.permute.xlu0 %2673
          %2677 = vset.pattern.permute.xlu0 0
          %2678 = vperm.xlu0 %2677, %v2580
          %v2679 = vpop.permute.xlu0 %2678
          %2682 = vset.pattern.permute.xlu0 0
          %2683 = vperm.xlu0 %2682, %v2581
          %v2684 = vpop.permute.xlu0 %2683
          %2687 = vset.pattern.permute.xlu0 0
          %2688 = vperm.xlu0 %2687, %v2582
          %v2689 = vpop.permute.xlu0 %2688
          %2692 = vset.pattern.permute.xlu0 0
          %2693 = vperm.xlu0 %2692, %v2583
          %v2694 = vpop.permute.xlu0 %2693
          %2697 = vset.pattern.permute.xlu0 0
          %2698 = vperm.xlu0 %2697, %v2584
          %v2699 = vpop.permute.xlu0 %2698
          %2702 = vset.pattern.permute.xlu0 0
          %2703 = vperm.xlu0 %2702, %v2585
          %v2704 = vpop.permute.xlu0 %2703
          %2707 = vset.pattern.permute.xlu0 0
          %2708 = vperm.xlu0 %2707, %v2586
          %v2709 = vpop.permute.xlu0 %2708
          %2712 = vset.pattern.permute.xlu0 0
          %2713 = vperm.xlu0 %2712, %v2587
          %v2714 = vpop.permute.xlu0 %2713
          %2717 = vset.pattern.permute.xlu0 0
          %2718 = vperm.xlu0 %2717, %v2588
          %v2719 = vpop.permute.xlu0 %2718
          %2722 = vset.pattern.permute.xlu0 0
          %2723 = vperm.xlu0 %2722, %v2589
          %v2724 = vpop.permute.xlu0 %2723
          %2727 = vset.pattern.permute.xlu0 0
          %2728 = vperm.xlu0 %2727, %v2590
          %v2729 = vpop.permute.xlu0 %2728
          %2732 = vset.pattern.permute.xlu0 0
          %2733 = vperm.xlu0 %2732, %v2591
          %v2734 = vpop.permute.xlu0 %2733
          %2737 = vset.pattern.permute.xlu0 0
          %2738 = vperm.xlu0 %2737, %v2592
          %v2739 = vpop.permute.xlu0 %2738
          %2742 = vset.pattern.permute.xlu0 0
          %2743 = vperm.xlu0 %2742, %v2593
          %v2744 = vpop.permute.xlu0 %2743
          %2747 = vset.pattern.permute.xlu0 0
          %2748 = vperm.xlu0 %2747, %v2594
          %v2749 = vpop.permute.xlu0 %2748
          %2752 = vset.pattern.permute.xlu0 0
          %2753 = vperm.xlu0 %2752, %v2595
          %v2754 = vpop.permute.xlu0 %2753
          %2757 = vset.pattern.permute.xlu0 0
          %2758 = vperm.xlu0 %2757, %v2596
          %v2759 = vpop.permute.xlu0 %2758
          %2762 = vset.pattern.permute.xlu0 0
          %2763 = vperm.xlu0 %2762, %v2597
          %v2764 = vpop.permute.xlu0 %2763
          %2767 = vset.pattern.permute.xlu0 0
          %2768 = vperm.xlu0 %2767, %v2598
          %v2769 = vpop.permute.xlu0 %2768
          %2772 = vset.pattern.permute.xlu0 0
          %2773 = vperm.xlu0 %2772, %v2599
          %v2774 = vpop.permute.xlu0 %2773
          %2777 = vset.pattern.permute.xlu0 0
          %2778 = vperm.xlu0 %2777, %v2600
          %v2779 = vpop.permute.xlu0 %2778
          %2782 = vset.pattern.permute.xlu0 0
          %2783 = vperm.xlu0 %2782, %v2601
          %v2784 = vpop.permute.xlu0 %2783
          %2787 = vset.pattern.permute.xlu0 0
          %2788 = vperm.xlu0 %2787, %v2602
          %v2789 = vpop.permute.xlu0 %2788
          %2792 = vset.pattern.permute.xlu0 0
          %2793 = vperm.xlu0 %2792, %v2603
          %v2794 = vpop.permute.xlu0 %2793
          %v2796 = vmul.f32 %v2639, %v2604
          %v2797 = vmul.f32 %v2644, %v2605
          %v2798 = vmul.f32 %v2649, %v2606
          %v2799 = vmul.f32 %v2654, %v2607
          %v2800 = vmul.f32 %v2659, %v2608
          %v2801 = vmul.f32 %v2664, %v2609
          %v2802 = vmul.f32 %v2669, %v2610
          %v2803 = vmul.f32 %v2674, %v2611
          %v2804 = vmul.f32 %v2679, %v2612
          %v2805 = vmul.f32 %v2684, %v2613
          %v2806 = vmul.f32 %v2689, %v2614
          %v2807 = vmul.f32 %v2694, %v2615
          %v2808 = vmul.f32 %v2699, %v2616
          %v2809 = vmul.f32 %v2704, %v2617
          %v2810 = vmul.f32 %v2709, %v2618
          %v2811 = vmul.f32 %v2714, %v2619
          %v2812 = vmul.f32 %v2719, %v2620
          %v2813 = vmul.f32 %v2724, %v2621
          %v2814 = vmul.f32 %v2729, %v2622
          %v2815 = vmul.f32 %v2734, %v2623
          %v2816 = vmul.f32 %v2739, %v2624
          %v2817 = vmul.f32 %v2744, %v2625
          %v2818 = vmul.f32 %v2749, %v2626
          %v2819 = vmul.f32 %v2754, %v2627
          %v2820 = vmul.f32 %v2759, %v2628
          %v2821 = vmul.f32 %v2764, %v2629
          %v2822 = vmul.f32 %v2769, %v2630
          %v2823 = vmul.f32 %v2774, %v2631
          %v2824 = vmul.f32 %v2779, %v2632
          %v2825 = vmul.f32 %v2784, %v2633
          %v2826 = vmul.f32 %v2789, %v2634
          %v2827 = vmul.f32 %v2794, %v2635
          %v2828 = vld [vmem:[%s6] sm:$0xff]
          %v2829 = vld [vmem:[%s6 + $0x8] sm:$0xff]
          %v2830 = vld [vmem:[%s7] sm:$0xff]
          %v2831 = vld [vmem:[%s7 + $0x8] sm:$0xff]
          %v2833 = vsel %vm1667, %v2796, 0
          %v2836 = vsel %vm1667, %v2797, 0
          %v2839 = vsel %vm1667, %v2798, 0
          %v2842 = vsel %vm1667, %v2799, 0
          %v2845 = vsel %vm1667, %v2800, 0
          %v2848 = vsel %vm1667, %v2801, 0
          %v2851 = vsel %vm1667, %v2802, 0
          %v2854 = vsel %vm1667, %v2803, 0
          %v2857 = vsel %vm1667, %v2804, 0
          %v2860 = vsel %vm1667, %v2805, 0
          %v2863 = vsel %vm1667, %v2806, 0
          %v2866 = vsel %vm1667, %v2807, 0
          %v2869 = vsel %vm1667, %v2808, 0
          %v2872 = vsel %vm1667, %v2809, 0
          %v2875 = vsel %vm1667, %v2810, 0
          %v2878 = vsel %vm1667, %v2811, 0
          %v2881 = vsel %vm1667, %v2812, 0
          %v2884 = vsel %vm1667, %v2813, 0
          %v2887 = vsel %vm1667, %v2814, 0
          %v2890 = vsel %vm1667, %v2815, 0
          %v2893 = vsel %vm1667, %v2816, 0
          %v2896 = vsel %vm1667, %v2817, 0
          %v2899 = vsel %vm1667, %v2818, 0
          %v2902 = vsel %vm1667, %v2819, 0
          %v2905 = vsel %vm1667, %v2820, 0
          %v2908 = vsel %vm1667, %v2821, 0
          %v2911 = vsel %vm1667, %v2822, 0
          %v2914 = vsel %vm1667, %v2823, 0
          %v2917 = vsel %vm1667, %v2824, 0
          %v2920 = vsel %vm1667, %v2825, 0
          %v2923 = vsel %vm1667, %v2826, 0
          %v2926 = vsel %vm1667, %v2827, 0
          %2928 = vmatpush.msra.mxu0 0.0
          %2929 = vmatpush.msra.mxu0 0.0
          %2930 = vmatpush.msra.mxu0 0.0
          %2931 = vmatpush.msra.mxu0 0.0
          %2932 = vmatpush.msra.mxu0 0.0
          %2933 = vmatpush.msra.mxu0 0.0
          %2934 = vmatpush.msra.mxu0 0.0
          %2935 = vmatpush.msra.mxu0 0.0
          %2936 = vmatpush.msra.mxu0 0.0
          %2937 = vmatpush.msra.mxu0 0.0
          %2938 = vmatpush.msra.mxu0 0.0
          %2939 = vmatpush.msra.mxu0 0.0
          %2940 = vmatpush.msra.mxu0 0.0
          %2941 = vmatpush.msra.mxu0 0.0
          %2942 = vmatpush.msra.mxu0 %v2831
          %2943 = vmatpush.msra.mxu0 %v2830
          %2944 = vmatmul.f32.gmra.mxu0 %v2833
          %v2945 = vpop.f32.mrf.mxu0
          %v2946 = vadd.f32 0.0, %v2945
          %2947 = vmatmul.f32.gmra.mxu0 %v2836
          %v2948 = vpop.f32.mrf.mxu0
          %v2949 = vadd.f32 0.0, %v2948
          %2950 = vmatmul.f32.gmra.mxu0 %v2839
          %v2951 = vpop.f32.mrf.mxu0
          %v2952 = vadd.f32 0.0, %v2951
          %2953 = vmatmul.f32.gmra.mxu0 %v2842
          %v2954 = vpop.f32.mrf.mxu0
          %v2955 = vadd.f32 0.0, %v2954
          %2956 = vmatmul.f32.gmra.mxu0 %v2845
          %v2957 = vpop.f32.mrf.mxu0
          %v2958 = vadd.f32 0.0, %v2957
          %2959 = vmatmul.f32.gmra.mxu0 %v2848
          %v2960 = vpop.f32.mrf.mxu0
          %v2961 = vadd.f32 0.0, %v2960
          %2962 = vmatmul.f32.gmra.mxu0 %v2851
          %v2963 = vpop.f32.mrf.mxu0
          %v2964 = vadd.f32 0.0, %v2963
          %2965 = vmatmul.f32.gmra.mxu0 %v2854
          %v2966 = vpop.f32.mrf.mxu0
          %v2967 = vadd.f32 0.0, %v2966
          %2968 = vmatmul.f32.gmra.mxu0 %v2857
          %v2969 = vpop.f32.mrf.mxu0
          %v2970 = vadd.f32 0.0, %v2969
          %2971 = vmatmul.f32.gmra.mxu0 %v2860
          %v2972 = vpop.f32.mrf.mxu0
          %v2973 = vadd.f32 0.0, %v2972
          %2974 = vmatmul.f32.gmra.mxu0 %v2863
          %v2975 = vpop.f32.mrf.mxu0
          %v2976 = vadd.f32 0.0, %v2975
          %2977 = vmatmul.f32.gmra.mxu0 %v2866
          %v2978 = vpop.f32.mrf.mxu0
          %v2979 = vadd.f32 0.0, %v2978
          %2980 = vmatmul.f32.gmra.mxu0 %v2869
          %v2981 = vpop.f32.mrf.mxu0
          %v2982 = vadd.f32 0.0, %v2981
          %2983 = vmatmul.f32.gmra.mxu0 %v2872
          %v2984 = vpop.f32.mrf.mxu0
          %v2985 = vadd.f32 0.0, %v2984
          %2986 = vmatmul.f32.gmra.mxu0 %v2875
          %v2987 = vpop.f32.mrf.mxu0
          %v2988 = vadd.f32 0.0, %v2987
          %2989 = vmatmul.f32.gmra.mxu0 %v2878
          %v2990 = vpop.f32.mrf.mxu0
          %v2991 = vadd.f32 0.0, %v2990
          %2992 = vmatmul.f32.gmra.mxu0 %v2881
          %v2993 = vpop.f32.mrf.mxu0
          %v2994 = vadd.f32 0.0, %v2993
          %2995 = vmatmul.f32.gmra.mxu0 %v2884
          %v2996 = vpop.f32.mrf.mxu0
          %v2997 = vadd.f32 0.0, %v2996
          %2998 = vmatmul.f32.gmra.mxu0 %v2887
          %v2999 = vpop.f32.mrf.mxu0
          %v3000 = vadd.f32 0.0, %v2999
          %3001 = vmatmul.f32.gmra.mxu0 %v2890
          %v3002 = vpop.f32.mrf.mxu0
          %v3003 = vadd.f32 0.0, %v3002
          %3004 = vmatmul.f32.gmra.mxu0 %v2893
          %v3005 = vpop.f32.mrf.mxu0
          %v3006 = vadd.f32 0.0, %v3005
          %3007 = vmatmul.f32.gmra.mxu0 %v2896
          %v3008 = vpop.f32.mrf.mxu0
          %v3009 = vadd.f32 0.0, %v3008
          %3010 = vmatmul.f32.gmra.mxu0 %v2899
          %v3011 = vpop.f32.mrf.mxu0
          %v3012 = vadd.f32 0.0, %v3011
          %3013 = vmatmul.f32.gmra.mxu0 %v2902
          %v3014 = vpop.f32.mrf.mxu0
          %v3015 = vadd.f32 0.0, %v3014
          %3016 = vmatmul.f32.gmra.mxu0 %v2905
          %v3017 = vpop.f32.mrf.mxu0
          %v3018 = vadd.f32 0.0, %v3017
          %3019 = vmatmul.f32.gmra.mxu0 %v2908
          %v3020 = vpop.f32.mrf.mxu0
          %v3021 = vadd.f32 0.0, %v3020
          %3022 = vmatmul.f32.gmra.mxu0 %v2911
          %v3023 = vpop.f32.mrf.mxu0
          %v3024 = vadd.f32 0.0, %v3023
          %3025 = vmatmul.f32.gmra.mxu0 %v2914
          %v3026 = vpop.f32.mrf.mxu0
          %v3027 = vadd.f32 0.0, %v3026
          %3028 = vmatmul.f32.gmra.mxu0 %v2917
          %v3029 = vpop.f32.mrf.mxu0
          %v3030 = vadd.f32 0.0, %v3029
          %3031 = vmatmul.f32.gmra.mxu0 %v2920
          %v3032 = vpop.f32.mrf.mxu0
          %v3033 = vadd.f32 0.0, %v3032
          %3034 = vmatmul.f32.gmra.mxu0 %v2923
          %v3035 = vpop.f32.mrf.mxu0
          %v3036 = vadd.f32 0.0, %v3035
          %3037 = vmatmul.f32.gmra.mxu0 %v2926
          %v3038 = vpop.f32.mrf.mxu0
          %v3039 = vadd.f32 0.0, %v3038
          %3040 = vdwg.mxu0
          %v3042 = vsel %vm1667, %v2540, 0
          %v3045 = vsel %vm1667, %v2541, 0
          %v3048 = vsel %vm1667, %v2542, 0
          %v3051 = vsel %vm1667, %v2543, 0
          %v3054 = vsel %vm1667, %v2544, 0
          %v3057 = vsel %vm1667, %v2545, 0
          %v3060 = vsel %vm1667, %v2546, 0
          %v3063 = vsel %vm1667, %v2547, 0
          %v3066 = vsel %vm1667, %v2548, 0
          %v3069 = vsel %vm1667, %v2549, 0
          %v3072 = vsel %vm1667, %v2550, 0
          %v3075 = vsel %vm1667, %v2551, 0
          %v3078 = vsel %vm1667, %v2552, 0
          %v3081 = vsel %vm1667, %v2553, 0
          %v3084 = vsel %vm1667, %v2554, 0
          %v3087 = vsel %vm1667, %v2555, 0
          %v3090 = vsel %vm1667, %v2556, 0
          %v3093 = vsel %vm1667, %v2557, 0
          %v3096 = vsel %vm1667, %v2558, 0
          %v3099 = vsel %vm1667, %v2559, 0
          %v3102 = vsel %vm1667, %v2560, 0
          %v3105 = vsel %vm1667, %v2561, 0
          %v3108 = vsel %vm1667, %v2562, 0
          %v3111 = vsel %vm1667, %v2563, 0
          %v3114 = vsel %vm1667, %v2564, 0
          %v3117 = vsel %vm1667, %v2565, 0
          %v3120 = vsel %vm1667, %v2566, 0
          %v3123 = vsel %vm1667, %v2567, 0
          %v3126 = vsel %vm1667, %v2568, 0
          %v3129 = vsel %vm1667, %v2569, 0
          %v3132 = vsel %vm1667, %v2570, 0
          %v3135 = vsel %vm1667, %v2571, 0
          %3137 = vmatpush.msra.mxu0 0.0
          %3138 = vmatpush.msra.mxu0 0.0
          %3139 = vmatpush.msra.mxu0 0.0
          %3140 = vmatpush.msra.mxu0 0.0
          %3141 = vmatpush.msra.mxu0 0.0
          %3142 = vmatpush.msra.mxu0 0.0
          %3143 = vmatpush.msra.mxu0 0.0
          %3144 = vmatpush.msra.mxu0 0.0
          %3145 = vmatpush.msra.mxu0 0.0
          %3146 = vmatpush.msra.mxu0 0.0
          %3147 = vmatpush.msra.mxu0 0.0
          %3148 = vmatpush.msra.mxu0 0.0
          %3149 = vmatpush.msra.mxu0 0.0
          %3150 = vmatpush.msra.mxu0 0.0
          %3151 = vmatpush.msra.mxu0 %v2829
          %3152 = vmatpush.msra.mxu0 %v2828
          %3153 = vmatmul.f32.gmra.mxu0 %v3042
          %v3154 = vpop.f32.mrf.mxu0
          %v3155 = vadd.f32 %v2946, %v3154
          %3156 = vmatmul.f32.gmra.mxu0 %v3045
          %v3157 = vpop.f32.mrf.mxu0
          %v3158 = vadd.f32 %v2949, %v3157
          %3159 = vmatmul.f32.gmra.mxu0 %v3048
          %v3160 = vpop.f32.mrf.mxu0
          %v3161 = vadd.f32 %v2952, %v3160
          %3162 = vmatmul.f32.gmra.mxu0 %v3051
          %v3163 = vpop.f32.mrf.mxu0
          %v3164 = vadd.f32 %v2955, %v3163
          %3165 = vmatmul.f32.gmra.mxu0 %v3054
          %v3166 = vpop.f32.mrf.mxu0
          %v3167 = vadd.f32 %v2958, %v3166
          %3168 = vmatmul.f32.gmra.mxu0 %v3057
          %v3169 = vpop.f32.mrf.mxu0
          %v3170 = vadd.f32 %v2961, %v3169
          %3171 = vmatmul.f32.gmra.mxu0 %v3060
          %v3172 = vpop.f32.mrf.mxu0
          %v3173 = vadd.f32 %v2964, %v3172
          %3174 = vmatmul.f32.gmra.mxu0 %v3063
          %v3175 = vpop.f32.mrf.mxu0
          %v3176 = vadd.f32 %v2967, %v3175
          %3177 = vmatmul.f32.gmra.mxu0 %v3066
          %v3178 = vpop.f32.mrf.mxu0
          %v3179 = vadd.f32 %v2970, %v3178
          %3180 = vmatmul.f32.gmra.mxu0 %v3069
          %v3181 = vpop.f32.mrf.mxu0
          %v3182 = vadd.f32 %v2973, %v3181
          %3183 = vmatmul.f32.gmra.mxu0 %v3072
          %v3184 = vpop.f32.mrf.mxu0
          %v3185 = vadd.f32 %v2976, %v3184
          %3186 = vmatmul.f32.gmra.mxu0 %v3075
          %v3187 = vpop.f32.mrf.mxu0
          %v3188 = vadd.f32 %v2979, %v3187
          %3189 = vmatmul.f32.gmra.mxu0 %v3078
          %v3190 = vpop.f32.mrf.mxu0
          %v3191 = vadd.f32 %v2982, %v3190
          %3192 = vmatmul.f32.gmra.mxu0 %v3081
          %v3193 = vpop.f32.mrf.mxu0
          %v3194 = vadd.f32 %v2985, %v3193
          %3195 = vmatmul.f32.gmra.mxu0 %v3084
          %v3196 = vpop.f32.mrf.mxu0
          %v3197 = vadd.f32 %v2988, %v3196
          %3198 = vmatmul.f32.gmra.mxu0 %v3087
          %v3199 = vpop.f32.mrf.mxu0
          %v3200 = vadd.f32 %v2991, %v3199
          %3201 = vmatmul.f32.gmra.mxu0 %v3090
          %v3202 = vpop.f32.mrf.mxu0
          %v3203 = vadd.f32 %v2994, %v3202
          %3204 = vmatmul.f32.gmra.mxu0 %v3093
          %v3205 = vpop.f32.mrf.mxu0
          %v3206 = vadd.f32 %v2997, %v3205
          %3207 = vmatmul.f32.gmra.mxu0 %v3096
          %v3208 = vpop.f32.mrf.mxu0
          %v3209 = vadd.f32 %v3000, %v3208
          %3210 = vmatmul.f32.gmra.mxu0 %v3099
          %v3211 = vpop.f32.mrf.mxu0
          %v3212 = vadd.f32 %v3003, %v3211
          %3213 = vmatmul.f32.gmra.mxu0 %v3102
          %v3214 = vpop.f32.mrf.mxu0
          %v3215 = vadd.f32 %v3006, %v3214
          %3216 = vmatmul.f32.gmra.mxu0 %v3105
          %v3217 = vpop.f32.mrf.mxu0
          %v3218 = vadd.f32 %v3009, %v3217
          %3219 = vmatmul.f32.gmra.mxu0 %v3108
          %v3220 = vpop.f32.mrf.mxu0
          %v3221 = vadd.f32 %v3012, %v3220
          %3222 = vmatmul.f32.gmra.mxu0 %v3111
          %v3223 = vpop.f32.mrf.mxu0
          %v3224 = vadd.f32 %v3015, %v3223
          %3225 = vmatmul.f32.gmra.mxu0 %v3114
          %v3226 = vpop.f32.mrf.mxu0
          %v3227 = vadd.f32 %v3018, %v3226
          %3228 = vmatmul.f32.gmra.mxu0 %v3117
          %v3229 = vpop.f32.mrf.mxu0
          %v3230 = vadd.f32 %v3021, %v3229
          %3231 = vmatmul.f32.gmra.mxu0 %v3120
          %v3232 = vpop.f32.mrf.mxu0
          %v3233 = vadd.f32 %v3024, %v3232
          %3234 = vmatmul.f32.gmra.mxu0 %v3123
          %v3235 = vpop.f32.mrf.mxu0
          %v3236 = vadd.f32 %v3027, %v3235
          %3237 = vmatmul.f32.gmra.mxu0 %v3126
          %v3238 = vpop.f32.mrf.mxu0
          %v3239 = vadd.f32 %v3030, %v3238
          %3240 = vmatmul.f32.gmra.mxu0 %v3129
          %v3241 = vpop.f32.mrf.mxu0
          %v3242 = vadd.f32 %v3033, %v3241
          %3243 = vmatmul.f32.gmra.mxu0 %v3132
          %v3244 = vpop.f32.mrf.mxu0
          %v3245 = vadd.f32 %v3036, %v3244
          %3246 = vmatmul.f32.gmra.mxu0 %v3135
          %v3247 = vpop.f32.mrf.mxu0
          %v3248 = vadd.f32 %v3039, %v3247
          %3249 = vdwg.mxu0
          %v3250 = vld [vmem:[%s8] sm:$0x1]
          %v3252 = vperm.slane %v3250, 0
          %v3254 = vadd.f32 %v3155, %v3252
          %v3255 = vadd.f32 %v3158, %v3252
          %v3256 = vadd.f32 %v3161, %v3252
          %v3257 = vadd.f32 %v3164, %v3252
          %v3258 = vadd.f32 %v3167, %v3252
          %v3259 = vadd.f32 %v3170, %v3252
          %v3260 = vadd.f32 %v3173, %v3252
          %v3261 = vadd.f32 %v3176, %v3252
          %v3262 = vadd.f32 %v3179, %v3252
          %v3263 = vadd.f32 %v3182, %v3252
          %v3264 = vadd.f32 %v3185, %v3252
          %v3265 = vadd.f32 %v3188, %v3252
          %v3266 = vadd.f32 %v3191, %v3252
          %v3267 = vadd.f32 %v3194, %v3252
          %v3268 = vadd.f32 %v3197, %v3252
          %v3269 = vadd.f32 %v3200, %v3252
          %v3270 = vadd.f32 %v3203, %v3252
          %v3271 = vadd.f32 %v3206, %v3252
          %v3272 = vadd.f32 %v3209, %v3252
          %v3273 = vadd.f32 %v3212, %v3252
          %v3274 = vadd.f32 %v3215, %v3252
          %v3275 = vadd.f32 %v3218, %v3252
          %v3276 = vadd.f32 %v3221, %v3252
          %v3277 = vadd.f32 %v3224, %v3252
          %v3278 = vadd.f32 %v3227, %v3252
          %v3279 = vadd.f32 %v3230, %v3252
          %v3280 = vadd.f32 %v3233, %v3252
          %v3281 = vadd.f32 %v3236, %v3252
          %v3282 = vadd.f32 %v3239, %v3252
          %v3283 = vadd.f32 %v3242, %v3252
          %v3284 = vadd.f32 %v3245, %v3252
          %v3285 = vadd.f32 %v3248, %v3252
          %3286 = vst [vmem:[%s604] sm:$0xff] %v3254
          %3287 = vst [vmem:[%s604 + $0x8] sm:$0xff] %v3255
          %3288 = vst [vmem:[%s604 + $0x10] sm:$0xff] %v3256
          %3289 = vst [vmem:[%s604 + $0x18] sm:$0xff] %v3257
          %3290 = vst [vmem:[%s604 + $0x20] sm:$0xff] %v3258
          %3291 = vst [vmem:[%s604 + $0x28] sm:$0xff] %v3259
          %3292 = vst [vmem:[%s604 + $0x30] sm:$0xff] %v3260
          %3293 = vst [vmem:[%s604 + $0x38] sm:$0xff] %v3261
          %3294 = vst [vmem:[%s604 + $0x40] sm:$0xff] %v3262
          %3295 = vst [vmem:[%s604 + $0x48] sm:$0xff] %v3263
          %3296 = vst [vmem:[%s604 + $0x50] sm:$0xff] %v3264
          %3297 = vst [vmem:[%s604 + $0x58] sm:$0xff] %v3265
          %3298 = vst [vmem:[%s604 + $0x60] sm:$0xff] %v3266
          %3299 = vst [vmem:[%s604 + $0x68] sm:$0xff] %v3267
          %3300 = vst [vmem:[%s604 + $0x70] sm:$0xff] %v3268
          %3301 = vst [vmem:[%s604 + $0x78] sm:$0xff] %v3269
          %3302 = vst [vmem:[%s604 + $0x80] sm:$0xff] %v3270
          %3303 = vst [vmem:[%s604 + $0x88] sm:$0xff] %v3271
          %3304 = vst [vmem:[%s604 + $0x90] sm:$0xff] %v3272
          %3305 = vst [vmem:[%s604 + $0x98] sm:$0xff] %v3273
          %3306 = vst [vmem:[%s604 + $0xa0] sm:$0xff] %v3274
          %3307 = vst [vmem:[%s604 + $0xa8] sm:$0xff] %v3275
          %3308 = vst [vmem:[%s604 + $0xb0] sm:$0xff] %v3276
          %3309 = vst [vmem:[%s604 + $0xb8] sm:$0xff] %v3277
          %3310 = vst [vmem:[%s604 + $0xc0] sm:$0xff] %v3278
          %3311 = vst [vmem:[%s604 + $0xc8] sm:$0xff] %v3279
          %3312 = vst [vmem:[%s604 + $0xd0] sm:$0xff] %v3280
          %3313 = vst [vmem:[%s604 + $0xd8] sm:$0xff] %v3281
          %3314 = vst [vmem:[%s604 + $0xe0] sm:$0xff] %v3282
          %3315 = vst [vmem:[%s604 + $0xe8] sm:$0xff] %v3283
          %3316 = vst [vmem:[%s604 + $0xf0] sm:$0xff] %v3284
          %3317 = vst [vmem:[%s604 + $0xf8] sm:$0xff] %v3285
        $region91: #{tpu_custom_call.1} parent=74 // pred_fallthru
          _
        %s3318 = sand.u32 %s269, 1
        %s3319 = scalar_lea.sflag [#allocation7], %s3318
        %s3320 = sand.u32 %s269, 1
        %s3321 = smul.addr %s3320, 256
        %s3322 = scalar_lea.vmem [#allocation8], %s3321
        // Predicated region
        $region92: #{tpu_custom_call.1} parent=74 // pred_check
          %p3323 = pneg %p279
        $region93: #{tpu_custom_call.1} parent=74 // pred_check_branch
          %3325 = sbr.rel (%p3323) target = $region95
        $region94: #{tpu_custom_call.1} parent=74 // pred_region
          %s3326 = smul.u32 32, %s30
          %3328 = vsyncadd %s3319, 0
          %s3329 = smul.addr %s3326, 8
          %s3330 = scalar_lea.hbm %s9, %s3329
          %s3331 = sshll.u32 %s3322, 4
          %s3332 = int_to_ptr.vmem [resolvable:$true] %s3331
          %s3333 = sshll.u32 %s3330, 4
          %s3334 = int_to_ptr.hbm [resolvable:$true] %s3333
          %3339 = dma.vmem_to_hbm [thread:$0]  %s3332, 4096, %s3334, %s3319, 128, 128, 8
        $region95: #{tpu_custom_call.1} parent=74 // pred_fallthru
          _
      $region75: #{tpu_custom_call.1} parent=5 // pred_fallthru
        _
      %p3340 = scmp.le.s32.totalorder 2, %s21
      // Predicated region
      $region96: #{tpu_custom_call.1} parent=5 // pred_check
        %p3341 = pneg %p3340
      $region97: #{tpu_custom_call.1} parent=5 // pred_check_branch
        %3343 = sbr.rel (%p3341) target = $region99
      $region98: #{tpu_custom_call.1} parent=5 // pred_region
        %s3344 = ssub.s32 %s21, 2
        // Predicated region
        $region100: #{tpu_custom_call.1} parent=98 // pred_check
          %p3345 = pneg %p285
        $region101: #{tpu_custom_call.1} parent=98 // pred_check_branch
          %3347 = sbr.rel (%p3345) target = $region103
        $region102: #{tpu_custom_call.1} parent=98 // pred_region
          %s3348 = sand.u32 %s270, 1
          %s3349 = scalar_lea.sflag [#allocation7], %s3348
          %s3350 = sand.u32 %s270, 1
          %s3351 = smul.addr %s3350, 256
          %s3352 = scalar_lea.vmem [#allocation8], %s3351
          %3354 = dma.done %s3349, 4096
        $region103: #{tpu_custom_call.1} parent=98 // pred_fallthru
          _
      $region99: #{tpu_custom_call.1} parent=5 // pred_fallthru
        _
    $region6: #{tpu_custom_call.1} parent=1 // loop_footer
      %s25 = sadd.s32 1, %s21
    $region7: #{tpu_custom_call.1} parent=1 // loop_footer_branch
      %20 = sbr.rel target = $region3
    $region8: #{tpu_custom_call.1} parent=1 // loop_exit
      _
    %3355 = vsyncpa [#allocation6], 1
    %s3356 = scalar_lea.sflag [#allocation6], 1
    %3357 = vsyncpa %s3356, 1
    %3358 = vsyncpa [#allocation7], 1
    %s3359 = scalar_lea.sflag [#allocation7], 1
    %3360 = vsyncpa %s3359, 1

</llo_original>
